<compile_context>
chip_gen: v5e
topology: v5e:2x2
jax: 0.10.0
libtpu: 0.0.40
codegen_flags: <defaults>
</compile_context>

<pallas_src>
import numpy as np
import jax
import jax.numpy as jnp
from jax.experimental import pallas as pl
from jax.experimental.pallas import tpu as pltpu


# ----------------------------------------------------------------------------
# Fused Pallas kernel: whole ResNet2D forward for one sample per grid step
# ----------------------------------------------------------------------------
def _make_resnet2d_kernel(npix, n_res_blocks, residual):
    H = W = npix
    HW = H * W

    # Static lane shifts for the 9 taps of a 3x3 'same' conv on the flattened
    # (row-major) spatial axis.  tap = kh*3 + kw, dh = kh-1, dw = kw-1.
    shifts = [(-((kh - 1) * W + (kw - 1))) % HW
              for kh in range(3) for kw in range(3)]

    def kernel(x_ref, mask_ref, w_in_ref, b_in_ref, w_blk_ref, b_blk_ref,
               g_ref, bt_ref, w_out_ref, b_out_ref, o_ref, col_ref):

        def conv3x3(act, w_flat, b):
            """3x3 'same' conv as one im2col MXU matmul.

            act:    (Cin, HW)     f32
            w_flat: (Cout, 9*Cin) bf16, column index = (kh*3+kw)*Cin + ci
            b:      (Cout, 1)     f32
            """
            cin = act.shape[0]
            for tap in range(9):
                if shifts[tap] == 0:          # centre tap: no shift, full mask
                    piece = act
                else:
                    piece = pltpu.roll(act, shifts[tap], axis=1) * mask_ref[tap]
                col_ref[tap * cin:(tap + 1) * cin, :] = piece
            colmat = col_ref[0:9 * cin, :].astype(jnp.bfloat16)
            y = jnp.dot(w_flat, colmat, preferred_element_type=jnp.float32)
            return y + b

        def layernorm(x, g, b):
            # LayerNorm over the whole (C, H, W) volume of one sample,
            # single fused sum / sum-of-squares pass, eps = 1e-5.
            n = float(x.shape[0] * x.shape[1])
            s = jnp.sum(x)
            ss = jnp.sum(x * x)
            mean = s / n
            var = ss / n - mean * mean
            inv = jax.lax.rsqrt(var + 1e-5)
            return (x - mean) * inv * g + b

        # Stem: Conv -> LayerNorm -> ReLU
        act = conv3x3(x_ref[0], w_in_ref[...], b_in_ref[...])
        act = jnp.maximum(layernorm(act, g_ref[0], bt_ref[0]), 0.0)

        # Residual blocks: conv -> LN -> ReLU -> conv -> LN -> (+res) -> ReLU
        for r in range(n_res_blocks):
            res = act
            h = conv3x3(act, w_blk_ref[2 * r], b_blk_ref[2 * r])
            h = jnp.maximum(layernorm(h, g_ref[1 + 2 * r], bt_ref[1 + 2 * r]), 0.0)
            h = conv3x3(h, w_blk_ref[2 * r + 1], b_blk_ref[2 * r + 1])
            h = layernorm(h, g_ref[2 + 2 * r], bt_ref[2 + 2 * r])
            act = jnp.maximum(h + res, 0.0)

        # Head conv; activation='Linear' -> no nonlinearity.
        y = conv3x3(act, w_out_ref[...], b_out_ref[...])
        if residual:                          # ResNet2D.forward(residual=True)
            y = y + x_ref[0]
        o_ref[...] = y[None]                  # (1, nch_out, HW), lane dense

    return kernel


def _tap_masks(npix):
    """(9, 1, npix*npix) f32 0/1 masks implementing zero 'same' padding."""
    H = W = npix
    m = np.zeros((9, 1, H * W), np.float32)
    for kh in range(3):
        for kw in range(3):
            dh, dw = kh - 1, kw - 1
            v = np.zeros((H, W), np.float32)
            v[max(0, -dh):H - max(0, dh), max(0, -dw):W - max(0, dw)] = 1.0
            m[kh * 3 + kw, 0, :] = v.reshape(-1)
    return jnp.asarray(m)


# ----------------------------------------------------------------------------
# Wrapper (pallas_call plumbing, layout glue only)
# ----------------------------------------------------------------------------
def resnet2d_forward(x, params, residual=False):
    """Matches ResNet2D.forward.  x: (N, nch_in, npix, npix) float32 (NCHW)."""
    N, nch_in, H, W = x.shape
    assert H == W, "ResNet2D assumes square inputs (npix x npix)"
    HW = H * W
    nfilts = params["w_in"].shape[0]
    nch_out = params["w_out"].shape[0]
    n_res_blocks = len(params["w_blk"]) // 2
    n_ln = 1 + 2 * n_res_blocks

    def flat_w(w):
        # PyTorch (Cout, Cin, 3, 3) -> (Cout, 9*Cin), col = (kh*3+kw)*Cin + ci.
        co, ci = w.shape[0], w.shape[1]
        return jnp.transpose(w, (0, 2, 3, 1)).reshape(co, 9 * ci).astype(jnp.bfloat16)

    w_in = flat_w(params["w_in"])
    b_in = params["b_in"].reshape(nfilts, 1)
    w_blk = jnp.stack([flat_w(w) for w in params["w_blk"]])
    b_blk = jnp.stack([b.reshape(nfilts, 1) for b in params["b_blk"]])
    ln_g = jnp.stack([g.reshape(nfilts, HW) for g in params["ln_g"]])
    ln_b = jnp.stack([b.reshape(nfilts, HW) for b in params["ln_b"]])
    w_out = flat_w(params["w_out"])
    b_out = params["b_out"].reshape(nch_out, 1)
    masks = _tap_masks(H)
    x2 = x.reshape(N, nch_in, HW)

    kernel = _make_resnet2d_kernel(H, n_res_blocks, residual)
    out = pl.pallas_call(
        kernel,
        out_shape=jax.ShapeDtypeStruct((N, nch_out, HW), jnp.float32),
        grid=(N,),
        in_specs=[
            pl.BlockSpec((1, nch_in, HW), lambda n: (n, 0, 0)),            # x
            pl.BlockSpec((9, 1, HW), lambda n: (0, 0, 0)),                 # tap masks
            pl.BlockSpec((nfilts, 9 * nch_in), lambda n: (0, 0)),          # w_in
            pl.BlockSpec((nfilts, 1), lambda n: (0, 0)),                   # b_in
            pl.BlockSpec((2 * n_res_blocks, nfilts, 9 * nfilts),
                         lambda n: (0, 0, 0)),                             # w_blk
            pl.BlockSpec((2 * n_res_blocks, nfilts, 1),
                         lambda n: (0, 0, 0)),                             # b_blk
            pl.BlockSpec((n_ln, nfilts, HW), lambda n: (0, 0, 0)),         # ln gamma
            pl.BlockSpec((n_ln, nfilts, HW), lambda n: (0, 0, 0)),         # ln beta
            pl.BlockSpec((nch_out, 9 * nfilts), lambda n: (0, 0)),         # w_out
            pl.BlockSpec((nch_out, 1), lambda n: (0, 0)),                  # b_out
        ],
        out_specs=pl.BlockSpec((1, nch_out, HW), lambda n: (n, 0, 0)),
        scratch_shapes=[pltpu.VMEM((9 * max(nfilts, nch_in), HW), jnp.float32)],
        compiler_params=pltpu.CompilerParams(
            dimension_semantics=("parallel",),      # v7x: 2 TCs split the batch
            vmem_limit_bytes=32 * 1024 * 1024),
    )(x2, masks, w_in, b_in, w_blk, b_blk, ln_g, ln_b, w_out, b_out)
    return out.reshape(N, nch_out, H, W)


# ----------------------------------------------------------------------------
# Parameters + pure-JAX reference (for correctness check)
# ----------------------------------------------------------------------------
def init_params(key, npix, nch_in=1, nch_out=1, nfilts=32, n_res_blocks=2):
    """Synthetic params matching PyTorch defaults: Conv2d uniform
    (+/- 1/sqrt(fan_in)) init, LayerNorm([C, npix, npix]) gamma=1 / beta=0."""
    def conv_init(k, cin, cout):
        kw, kb = jax.random.split(k)
        bound = (cin * 9) ** -0.5
        w = jax.random.uniform(kw, (cout, cin, 3, 3), jnp.float32, -bound, bound)
        b = jax.random.uniform(kb, (cout,), jnp.float32, -bound, bound)
        return w, b

    keys = jax.random.split(key, 2 + 2 * n_res_blocks)
    w_in, b_in = conv_init(keys[0], nch_in, nfilts)
    w_blk, b_blk = [], []
    for i in range(2 * n_res_blocks):
        w, b = conv_init(keys[1 + i], nfilts, nfilts)
        w_blk.append(w)
        b_blk.append(b)
    w_out, b_out = conv_init(keys[1 + 2 * n_res_blocks], nfilts, nch_out)

    n_ln = 1 + 2 * n_res_blocks
    ln_g = [jnp.ones((nfilts, npix, npix), jnp.float32) for _ in range(n_ln)]
    ln_b = [jnp.zeros((nfilts, npix, npix), jnp.float32) for _ in range(n_ln)]
    return {"w_in": w_in, "b_in": b_in, "w_blk": w_blk, "b_blk": b_blk,
            "w_out": w_out, "b_out": b_out, "ln_g": ln_g, "ln_b": ln_b}


def ref_forward(x, params, residual=False):
    """Pure-JAX reference with the same bf16-operand / f32-accum matmuls."""
    def conv(h, w, b):
        y = jax.lax.conv_general_dilated(
            h.astype(jnp.bfloat16), w.astype(jnp.bfloat16),
            window_strides=(1, 1), padding="SAME",
            dimension_numbers=("NCHW", "OIHW", "NCHW"),
            preferred_element_type=jnp.float32)
        return y + b[None, :, None, None]

    def layernorm(h, g, b):
        mean = jnp.mean(h, axis=(1, 2, 3), keepdims=True)
        var = jnp.mean((h - mean) ** 2, axis=(1, 2, 3), keepdims=True)
        return (h - mean) * jax.lax.rsqrt(var + 1e-5) * g[None] + b[None]

    h = conv(x, params["w_in"], params["b_in"])
    h = jnp.maximum(layernorm(h, params["ln_g"][0], params["ln_b"][0]), 0.0)
    for r in range(len(params["w_blk"]) // 2):
        res = h
        h = conv(h, params["w_blk"][2 * r], params["b_blk"][2 * r])
        h = jnp.maximum(layernorm(h, params["ln_g"][1 + 2 * r],
                                  params["ln_b"][1 + 2 * r]), 0.0)
        h = conv(h, params["w_blk"][2 * r + 1], params["b_blk"][2 * r + 1])
        h = layernorm(h, params["ln_g"][2 + 2 * r], params["ln_b"][2 + 2 * r])
        h = jnp.maximum(h + res, 0.0)
    out = conv(h, params["w_out"], params["b_out"])
    if residual:
        out = out + x
    return out


# ----------------------------------------------------------------------------
if __name__ == "__main__":
    npix = 16
    batch, nch_in, nch_out = 2, 1, 1
    nfilts, n_res_blocks = 32, 2

    key = jax.random.PRNGKey(0)
    key, kx = jax.random.split(key)
    x = jax.random.normal(kx, (batch, nch_in, npix, npix), jnp.float32)
    params = init_params(key, npix, nch_in, nch_out, nfilts, n_res_blocks)

    out = jax.block_until_ready(resnet2d_forward(x, params, residual=False))
    assert out.shape == (batch, nch_out, npix, npix), out.shape

    ref = jax.block_until_ready(ref_forward(x, params, residual=False))
    max_err = float(jnp.max(jnp.abs(out - ref)))
    # Both paths use bf16 MXU operands with f32 accumulation; the residual
    # difference comes from accumulation order and occasional one-ulp bf16
    # rounding flips of intermediate activations, so use a 1e-2 tolerance.
    assert max_err < 1e-2, f"max abs error vs reference: {max_err}"

    print("KERNEL_OK")
</pallas_src>

<mosaic_0001>
module attributes {stable_mosaic.version = 11 : i64} {
  func.func @kernel(%arg0: i32, %arg1: memref<1x1x256xf32, #tpu.memory_space<vmem>>, %arg2: memref<9x1x256xf32, #tpu.memory_space<vmem>>, %arg3: memref<32x9xbf16, #tpu.memory_space<vmem>>, %arg4: memref<32x1xf32, #tpu.memory_space<vmem>>, %arg5: memref<4x32x288xbf16, #tpu.memory_space<vmem>>, %arg6: memref<4x32x1xf32, #tpu.memory_space<vmem>>, %arg7: memref<5x32x256xf32, #tpu.memory_space<vmem>>, %arg8: memref<5x32x256xf32, #tpu.memory_space<vmem>>, %arg9: memref<1x288xbf16, #tpu.memory_space<vmem>>, %arg10: memref<1x1xf32, #tpu.memory_space<vmem>>, %arg11: memref<1x1x256xf32, #tpu.memory_space<vmem>>, %arg12: memref<288x256xf32, #tpu.memory_space<vmem>>) attributes {dimension_semantics = [#tpu.dimension_semantics<parallel>], iteration_bounds = array<i64: 2>, scalar_prefetch = 0 : i64, scratch_operands = 1 : i64, tpu.core_type = #tpu.core_type<tc>, window_params = [{transform_indices = @transform_0, window_bounds = array<i64: 1, 1, 256>}, {pipeline_mode = #tpu.pipeline_mode<synchronous>, transform_indices = @transform_1, window_bounds = array<i64: 9, 1, 256>}, {pipeline_mode = #tpu.pipeline_mode<synchronous>, transform_indices = @transform_2, window_bounds = array<i64: 32, 9>}, {pipeline_mode = #tpu.pipeline_mode<synchronous>, transform_indices = @transform_3, window_bounds = array<i64: 32, 1>}, {pipeline_mode = #tpu.pipeline_mode<synchronous>, transform_indices = @transform_4, window_bounds = array<i64: 4, 32, 288>}, {pipeline_mode = #tpu.pipeline_mode<synchronous>, transform_indices = @transform_5, window_bounds = array<i64: 4, 32, 1>}, {pipeline_mode = #tpu.pipeline_mode<synchronous>, transform_indices = @transform_6, window_bounds = array<i64: 5, 32, 256>}, {pipeline_mode = #tpu.pipeline_mode<synchronous>, transform_indices = @transform_7, window_bounds = array<i64: 5, 32, 256>}, {pipeline_mode = #tpu.pipeline_mode<synchronous>, transform_indices = @transform_8, window_bounds = array<i64: 1, 288>}, {pipeline_mode = #tpu.pipeline_mode<synchronous>, transform_indices = @transform_9, window_bounds = array<i64: 1, 1>}, {transform_indices = @transform_10, window_bounds = array<i64: 1, 1, 256>}]} {
    %c0 = arith.constant 0 : index
    %c0_0 = arith.constant 0 : index
    %c0_1 = arith.constant 0 : index
    %0 = vector.load %arg1[%c0, %c0_0, %c0_1] : memref<1x1x256xf32, #tpu.memory_space<vmem>>, vector<1x1x256xf32>
    %1 = vector.shape_cast %0 : vector<1x1x256xf32> to vector<1x256xf32>
    %c0_2 = arith.constant 0 : index
    %c0_3 = arith.constant 0 : index
    %2 = vector.load %arg3[%c0_2, %c0_3] : memref<32x9xbf16, #tpu.memory_space<vmem>>, vector<32x9xbf16>
    %c0_4 = arith.constant 0 : index
    %c0_5 = arith.constant 0 : index
    %3 = vector.load %arg4[%c0_4, %c0_5] : memref<32x1xf32, #tpu.memory_space<vmem>>, vector<32x1xf32>
    %c17_i32 = arith.constant 17 : i32
    %4 = tpu.dynamic_rotate %1 by %c17_i32 dim 1 : vector<1x256xf32>, i32 -> vector<1x256xf32>
    %c0_6 = arith.constant 0 : index
    %c0_7 = arith.constant 0 : index
    %c0_8 = arith.constant 0 : index
    %5 = vector.load %arg2[%c0_6, %c0_7, %c0_8] : memref<9x1x256xf32, #tpu.memory_space<vmem>>, vector<1x1x256xf32>
    %6 = vector.shape_cast %5 : vector<1x1x256xf32> to vector<1x256xf32>
    %7 = arith.mulf %4, %6 : vector<1x256xf32>
    %c0_9 = arith.constant 0 : index
    %c0_10 = arith.constant 0 : index
    %8 = vector.load %arg12[%c0_9, %c0_10] : memref<288x256xf32, #tpu.memory_space<vmem>>, vector<1x256xf32>
    tpu.vector_store %arg12[%c0_9, %c0_10], %7 {strides = array<i32>} : memref<288x256xf32, #tpu.memory_space<vmem>>, vector<1x256xf32>,
    %c16_i32 = arith.constant 16 : i32
    %9 = tpu.dynamic_rotate %1 by %c16_i32 dim 1 : vector<1x256xf32>, i32 -> vector<1x256xf32>
    %c1 = arith.constant 1 : index
    %c0_11 = arith.constant 0 : index
    %c0_12 = arith.constant 0 : index
    %10 = vector.load %arg2[%c1, %c0_11, %c0_12] : memref<9x1x256xf32, #tpu.memory_space<vmem>>, vector<1x1x256xf32>
    %11 = vector.shape_cast %10 : vector<1x1x256xf32> to vector<1x256xf32>
    %12 = arith.mulf %9, %11 : vector<1x256xf32>
    %c1_13 = arith.constant 1 : index
    %c0_14 = arith.constant 0 : index
    %13 = vector.load %arg12[%c1_13, %c0_14] : memref<288x256xf32, #tpu.memory_space<vmem>>, vector<1x256xf32>
    tpu.vector_store %arg12[%c1_13, %c0_14], %12 {strides = array<i32>} : memref<288x256xf32, #tpu.memory_space<vmem>>, vector<1x256xf32>,
    %c15_i32 = arith.constant 15 : i32
    %14 = tpu.dynamic_rotate %1 by %c15_i32 dim 1 : vector<1x256xf32>, i32 -> vector<1x256xf32>
    %c2 = arith.constant 2 : index
    %c0_15 = arith.constant 0 : index
    %c0_16 = arith.constant 0 : index
    %15 = vector.load %arg2[%c2, %c0_15, %c0_16] : memref<9x1x256xf32, #tpu.memory_space<vmem>>, vector<1x1x256xf32>
    %16 = vector.shape_cast %15 : vector<1x1x256xf32> to vector<1x256xf32>
    %17 = arith.mulf %14, %16 : vector<1x256xf32>
    %c2_17 = arith.constant 2 : index
    %c0_18 = arith.constant 0 : index
    %18 = vector.load %arg12[%c2_17, %c0_18] : memref<288x256xf32, #tpu.memory_space<vmem>>, vector<1x256xf32>
    tpu.vector_store %arg12[%c2_17, %c0_18], %17 {strides = array<i32>} : memref<288x256xf32, #tpu.memory_space<vmem>>, vector<1x256xf32>,
    %c1_i32 = arith.constant 1 : i32
    %19 = tpu.dynamic_rotate %1 by %c1_i32 dim 1 : vector<1x256xf32>, i32 -> vector<1x256xf32>
    %c3 = arith.constant 3 : index
    %c0_19 = arith.constant 0 : index
    %c0_20 = arith.constant 0 : index
    %20 = vector.load %arg2[%c3, %c0_19, %c0_20] : memref<9x1x256xf32, #tpu.memory_space<vmem>>, vector<1x1x256xf32>
    %21 = vector.shape_cast %20 : vector<1x1x256xf32> to vector<1x256xf32>
    %22 = arith.mulf %19, %21 : vector<1x256xf32>
    %c3_21 = arith.constant 3 : index
    %c0_22 = arith.constant 0 : index
    %23 = vector.load %arg12[%c3_21, %c0_22] : memref<288x256xf32, #tpu.memory_space<vmem>>, vector<1x256xf32>
    tpu.vector_store %arg12[%c3_21, %c0_22], %22 {strides = array<i32>} : memref<288x256xf32, #tpu.memory_space<vmem>>, vector<1x256xf32>,
    %c4 = arith.constant 4 : index
    %c0_23 = arith.constant 0 : index
    %24 = vector.load %arg12[%c4, %c0_23] : memref<288x256xf32, #tpu.memory_space<vmem>>, vector<1x256xf32>
    tpu.vector_store %arg12[%c4, %c0_23], %1 {strides = array<i32>} : memref<288x256xf32, #tpu.memory_space<vmem>>, vector<1x256xf32>,
    %c255_i32 = arith.constant 255 : i32
    %25 = tpu.dynamic_rotate %1 by %c255_i32 dim 1 : vector<1x256xf32>, i32 -> vector<1x256xf32>
    %c5 = arith.constant 5 : index
    %c0_24 = arith.constant 0 : index
    %c0_25 = arith.constant 0 : index
    %26 = vector.load %arg2[%c5, %c0_24, %c0_25] : memref<9x1x256xf32, #tpu.memory_space<vmem>>, vector<1x1x256xf32>
    %27 = vector.shape_cast %26 : vector<1x1x256xf32> to vector<1x256xf32>
    %28 = arith.mulf %25, %27 : vector<1x256xf32>
    %c5_26 = arith.constant 5 : index
    %c0_27 = arith.constant 0 : index
    %29 = vector.load %arg12[%c5_26, %c0_27] : memref<288x256xf32, #tpu.memory_space<vmem>>, vector<1x256xf32>
    tpu.vector_store %arg12[%c5_26, %c0_27], %28 {strides = array<i32>} : memref<288x256xf32, #tpu.memory_space<vmem>>, vector<1x256xf32>,
    %c241_i32 = arith.constant 241 : i32
    %30 = tpu.dynamic_rotate %1 by %c241_i32 dim 1 : vector<1x256xf32>, i32 -> vector<1x256xf32>
    %c6 = arith.constant 6 : index
    %c0_28 = arith.constant 0 : index
    %c0_29 = arith.constant 0 : index
    %31 = vector.load %arg2[%c6, %c0_28, %c0_29] : memref<9x1x256xf32, #tpu.memory_space<vmem>>, vector<1x1x256xf32>
    %32 = vector.shape_cast %31 : vector<1x1x256xf32> to vector<1x256xf32>
    %33 = arith.mulf %30, %32 : vector<1x256xf32>
    %c6_30 = arith.constant 6 : index
    %c0_31 = arith.constant 0 : index
    %34 = vector.load %arg12[%c6_30, %c0_31] : memref<288x256xf32, #tpu.memory_space<vmem>>, vector<1x256xf32>
    tpu.vector_store %arg12[%c6_30, %c0_31], %33 {strides = array<i32>} : memref<288x256xf32, #tpu.memory_space<vmem>>, vector<1x256xf32>,
    %c240_i32 = arith.constant 240 : i32
    %35 = tpu.dynamic_rotate %1 by %c240_i32 dim 1 : vector<1x256xf32>, i32 -> vector<1x256xf32>
    %c7 = arith.constant 7 : index
    %c0_32 = arith.constant 0 : index
    %c0_33 = arith.constant 0 : index
    %36 = vector.load %arg2[%c7, %c0_32, %c0_33] : memref<9x1x256xf32, #tpu.memory_space<vmem>>, vector<1x1x256xf32>
    %37 = vector.shape_cast %36 : vector<1x1x256xf32> to vector<1x256xf32>
    %38 = arith.mulf %35, %37 : vector<1x256xf32>
    %c7_34 = arith.constant 7 : index
    %c0_35 = arith.constant 0 : index
    %39 = vector.load %arg12[%c7_34, %c0_35] : memref<288x256xf32, #tpu.memory_space<vmem>>, vector<1x256xf32>
    tpu.vector_store %arg12[%c7_34, %c0_35], %38 {strides = array<i32>} : memref<288x256xf32, #tpu.memory_space<vmem>>, vector<1x256xf32>,
    %c239_i32 = arith.constant 239 : i32
    %40 = tpu.dynamic_rotate %1 by %c239_i32 dim 1 : vector<1x256xf32>, i32 -> vector<1x256xf32>
    %c8 = arith.constant 8 : index
    %c0_36 = arith.constant 0 : index
    %c0_37 = arith.constant 0 : index
    %41 = vector.load %arg2[%c8, %c0_36, %c0_37] : memref<9x1x256xf32, #tpu.memory_space<vmem>>, vector<1x1x256xf32>
    %42 = vector.shape_cast %41 : vector<1x1x256xf32> to vector<1x256xf32>
    %43 = arith.mulf %40, %42 : vector<1x256xf32>
    %c8_38 = arith.constant 8 : index
    %c0_39 = arith.constant 0 : index
    %44 = vector.load %arg12[%c8_38, %c0_39] : memref<288x256xf32, #tpu.memory_space<vmem>>, vector<1x256xf32>
    tpu.vector_store %arg12[%c8_38, %c0_39], %43 {strides = array<i32>} : memref<288x256xf32, #tpu.memory_space<vmem>>, vector<1x256xf32>,
    %c0_40 = arith.constant 0 : index
    %c0_41 = arith.constant 0 : index
    %45 = vector.load %arg12[%c0_40, %c0_41] : memref<288x256xf32, #tpu.memory_space<vmem>>, vector<9x256xf32>
    %46 = arith.truncf %45 : vector<9x256xf32> to vector<9x256xbf16>
    %cst = arith.constant dense<0.000000e+00> : vector<32x256xf32>
    %47 = tpu.matmul %2, %46, %cst {dimension_numbers = #tpu.dot_dimension_numbers<[1], [0], [0], [1], [0, 0, 1, 1], [], []>} : vector<32x9xbf16>, vector<9x256xbf16>, vector<32x256xf32> -> vector<32x256xf32>
    %48 = vector.broadcast %3 : vector<32x1xf32> to vector<32x256xf32>
    %49 = arith.addf %47, %48 : vector<32x256xf32>
    %c0_42 = arith.constant 0 : index
    %c0_43 = arith.constant 0 : index
    %c0_44 = arith.constant 0 : index
    %50 = vector.load %arg7[%c0_42, %c0_43, %c0_44] : memref<5x32x256xf32, #tpu.memory_space<vmem>>, vector<1x32x256xf32>
    %51 = vector.shape_cast %50 : vector<1x32x256xf32> to vector<32x256xf32>
    %c0_45 = arith.constant 0 : index
    %c0_46 = arith.constant 0 : index
    %c0_47 = arith.constant 0 : index
    %52 = vector.load %arg8[%c0_45, %c0_46, %c0_47] : memref<5x32x256xf32, #tpu.memory_space<vmem>>, vector<1x32x256xf32>
    %53 = vector.shape_cast %52 : vector<1x32x256xf32> to vector<32x256xf32>
    %54 = vector.shape_cast %49 : vector<32x256xf32> to vector<1x32x256xf32>
    %cst_48 = arith.constant dense<0.000000e+00> : vector<1xf32>
    %55 = vector.multi_reduction <add>, %54, %cst_48 [1, 2] : vector<1x32x256xf32> to vector<1xf32>
    %56 = vector.shape_cast %55 : vector<1xf32> to vector<1x1x1xf32>
    %57 = vector.extract %56[0, 0, 0] : f32 from vector<1x1x1xf32>
    %58 = arith.mulf %49, %49 : vector<32x256xf32>
    %59 = vector.shape_cast %58 : vector<32x256xf32> to vector<1x32x256xf32>
    %cst_49 = arith.constant dense<0.000000e+00> : vector<1xf32>
    %60 = vector.multi_reduction <add>, %59, %cst_49 [1, 2] : vector<1x32x256xf32> to vector<1xf32>
    %61 = vector.shape_cast %60 : vector<1xf32> to vector<1x1x1xf32>
    %62 = vector.extract %61[0, 0, 0] : f32 from vector<1x1x1xf32>
    %cst_50 = arith.constant 8.192000e+03 : f32
    %63 = arith.divf %57, %cst_50 : f32
    %cst_51 = arith.constant 8.192000e+03 : f32
    %64 = arith.divf %62, %cst_51 : f32
    %65 = arith.mulf %63, %63 : f32
    %66 = arith.subf %64, %65 : f32
    %cst_52 = arith.constant 9.99999974E-6 : f32
    %67 = arith.addf %66, %cst_52 : f32
    %68 = math.rsqrt %67 : f32
    %69 = vector.broadcast %63 : f32 to vector<32x256xf32>
    %70 = arith.subf %49, %69 : vector<32x256xf32>
    %71 = vector.broadcast %68 : f32 to vector<32x256xf32>
    %72 = arith.mulf %70, %71 : vector<32x256xf32>
    %73 = arith.mulf %72, %51 : vector<32x256xf32>
    %74 = arith.addf %73, %53 : vector<32x256xf32>
    %cst_53 = arith.constant 0.000000e+00 : f32
    %75 = vector.broadcast %cst_53 : f32 to vector<32x256xf32>
    %76 = arith.maximumf %74, %75 : vector<32x256xf32>
    %c0_54 = arith.constant 0 : index
    %c0_55 = arith.constant 0 : index
    %c0_56 = arith.constant 0 : index
    %77 = vector.load %arg5[%c0_54, %c0_55, %c0_56] : memref<4x32x288xbf16, #tpu.memory_space<vmem>>, vector<1x32x288xbf16>
    %78 = vector.shape_cast %77 : vector<1x32x288xbf16> to vector<32x288xbf16>
    %c0_57 = arith.constant 0 : index
    %c0_58 = arith.constant 0 : index
    %c0_59 = arith.constant 0 : index
    %79 = vector.load %arg6[%c0_57, %c0_58, %c0_59] : memref<4x32x1xf32, #tpu.memory_space<vmem>>, vector<1x32x1xf32>
    %80 = vector.shape_cast %79 : vector<1x32x1xf32> to vector<32x1xf32>
    %c17_i32_60 = arith.constant 17 : i32
    %81 = tpu.dynamic_rotate %76 by %c17_i32_60 dim 1 : vector<32x256xf32>, i32 -> vector<32x256xf32>
    %c0_61 = arith.constant 0 : index
    %c0_62 = arith.constant 0 : index
    %c0_63 = arith.constant 0 : index
    %82 = vector.load %arg2[%c0_61, %c0_62, %c0_63] : memref<9x1x256xf32, #tpu.memory_space<vmem>>, vector<1x1x256xf32>
    %83 = vector.shape_cast %82 : vector<1x1x256xf32> to vector<1x256xf32>
    %84 = vector.broadcast %83 : vector<1x256xf32> to vector<32x256xf32>
    %85 = arith.mulf %81, %84 : vector<32x256xf32>
    %c0_64 = arith.constant 0 : index
    %c0_65 = arith.constant 0 : index
    %86 = vector.load %arg12[%c0_64, %c0_65] : memref<288x256xf32, #tpu.memory_space<vmem>>, vector<32x256xf32>
    tpu.vector_store %arg12[%c0_64, %c0_65], %85 {strides = array<i32>} : memref<288x256xf32, #tpu.memory_space<vmem>>, vector<32x256xf32>,
    %c16_i32_66 = arith.constant 16 : i32
    %87 = tpu.dynamic_rotate %76 by %c16_i32_66 dim 1 : vector<32x256xf32>, i32 -> vector<32x256xf32>
    %c1_67 = arith.constant 1 : index
    %c0_68 = arith.constant 0 : index
    %c0_69 = arith.constant 0 : index
    %88 = vector.load %arg2[%c1_67, %c0_68, %c0_69] : memref<9x1x256xf32, #tpu.memory_space<vmem>>, vector<1x1x256xf32>
    %89 = vector.shape_cast %88 : vector<1x1x256xf32> to vector<1x256xf32>
    %90 = vector.broadcast %89 : vector<1x256xf32> to vector<32x256xf32>
    %91 = arith.mulf %87, %90 : vector<32x256xf32>
    %c32 = arith.constant 32 : index
    %c0_70 = arith.constant 0 : index
    %92 = vector.load %arg12[%c32, %c0_70] : memref<288x256xf32, #tpu.memory_space<vmem>>, vector<32x256xf32>
    tpu.vector_store %arg12[%c32, %c0_70], %91 {strides = array<i32>} : memref<288x256xf32, #tpu.memory_space<vmem>>, vector<32x256xf32>,
    %c15_i32_71 = arith.constant 15 : i32
    %93 = tpu.dynamic_rotate %76 by %c15_i32_71 dim 1 : vector<32x256xf32>, i32 -> vector<32x256xf32>
    %c2_72 = arith.constant 2 : index
    %c0_73 = arith.constant 0 : index
    %c0_74 = arith.constant 0 : index
    %94 = vector.load %arg2[%c2_72, %c0_73, %c0_74] : memref<9x1x256xf32, #tpu.memory_space<vmem>>, vector<1x1x256xf32>
    %95 = vector.shape_cast %94 : vector<1x1x256xf32> to vector<1x256xf32>
    %96 = vector.broadcast %95 : vector<1x256xf32> to vector<32x256xf32>
    %97 = arith.mulf %93, %96 : vector<32x256xf32>
    %c64 = arith.constant 64 : index
    %c0_75 = arith.constant 0 : index
    %98 = vector.load %arg12[%c64, %c0_75] : memref<288x256xf32, #tpu.memory_space<vmem>>, vector<32x256xf32>
    tpu.vector_store %arg12[%c64, %c0_75], %97 {strides = array<i32>} : memref<288x256xf32, #tpu.memory_space<vmem>>, vector<32x256xf32>,
    %c1_i32_76 = arith.constant 1 : i32
    %99 = tpu.dynamic_rotate %76 by %c1_i32_76 dim 1 : vector<32x256xf32>, i32 -> vector<32x256xf32>
    %c3_77 = arith.constant 3 : index
    %c0_78 = arith.constant 0 : index
    %c0_79 = arith.constant 0 : index
    %100 = vector.load %arg2[%c3_77, %c0_78, %c0_79] : memref<9x1x256xf32, #tpu.memory_space<vmem>>, vector<1x1x256xf32>
    %101 = vector.shape_cast %100 : vector<1x1x256xf32> to vector<1x256xf32>
    %102 = vector.broadcast %101 : vector<1x256xf32> to vector<32x256xf32>
    %103 = arith.mulf %99, %102 : vector<32x256xf32>
    %c96 = arith.constant 96 : index
    %c0_80 = arith.constant 0 : index
    %104 = vector.load %arg12[%c96, %c0_80] : memref<288x256xf32, #tpu.memory_space<vmem>>, vector<32x256xf32>
    tpu.vector_store %arg12[%c96, %c0_80], %103 {strides = array<i32>} : memref<288x256xf32, #tpu.memory_space<vmem>>, vector<32x256xf32>,
    %c128 = arith.constant 128 : index
    %c0_81 = arith.constant 0 : index
    %105 = vector.load %arg12[%c128, %c0_81] : memref<288x256xf32, #tpu.memory_space<vmem>>, vector<32x256xf32>
    tpu.vector_store %arg12[%c128, %c0_81], %76 {strides = array<i32>} : memref<288x256xf32, #tpu.memory_space<vmem>>, vector<32x256xf32>,
    %c255_i32_82 = arith.constant 255 : i32
    %106 = tpu.dynamic_rotate %76 by %c255_i32_82 dim 1 : vector<32x256xf32>, i32 -> vector<32x256xf32>
    %c5_83 = arith.constant 5 : index
    %c0_84 = arith.constant 0 : index
    %c0_85 = arith.constant 0 : index
    %107 = vector.load %arg2[%c5_83, %c0_84, %c0_85] : memref<9x1x256xf32, #tpu.memory_space<vmem>>, vector<1x1x256xf32>
    %108 = vector.shape_cast %107 : vector<1x1x256xf32> to vector<1x256xf32>
    %109 = vector.broadcast %108 : vector<1x256xf32> to vector<32x256xf32>
    %110 = arith.mulf %106, %109 : vector<32x256xf32>
    %c160 = arith.constant 160 : index
    %c0_86 = arith.constant 0 : index
    %111 = vector.load %arg12[%c160, %c0_86] : memref<288x256xf32, #tpu.memory_space<vmem>>, vector<32x256xf32>
    tpu.vector_store %arg12[%c160, %c0_86], %110 {strides = array<i32>} : memref<288x256xf32, #tpu.memory_space<vmem>>, vector<32x256xf32>,
    %c241_i32_87 = arith.constant 241 : i32
    %112 = tpu.dynamic_rotate %76 by %c241_i32_87 dim 1 : vector<32x256xf32>, i32 -> vector<32x256xf32>
    %c6_88 = arith.constant 6 : index
    %c0_89 = arith.constant 0 : index
    %c0_90 = arith.constant 0 : index
    %113 = vector.load %arg2[%c6_88, %c0_89, %c0_90] : memref<9x1x256xf32, #tpu.memory_space<vmem>>, vector<1x1x256xf32>
    %114 = vector.shape_cast %113 : vector<1x1x256xf32> to vector<1x256xf32>
    %115 = vector.broadcast %114 : vector<1x256xf32> to vector<32x256xf32>
    %116 = arith.mulf %112, %115 : vector<32x256xf32>
    %c192 = arith.constant 192 : index
    %c0_91 = arith.constant 0 : index
    %117 = vector.load %arg12[%c192, %c0_91] : memref<288x256xf32, #tpu.memory_space<vmem>>, vector<32x256xf32>
    tpu.vector_store %arg12[%c192, %c0_91], %116 {strides = array<i32>} : memref<288x256xf32, #tpu.memory_space<vmem>>, vector<32x256xf32>,
    %c240_i32_92 = arith.constant 240 : i32
    %118 = tpu.dynamic_rotate %76 by %c240_i32_92 dim 1 : vector<32x256xf32>, i32 -> vector<32x256xf32>
    %c7_93 = arith.constant 7 : index
    %c0_94 = arith.constant 0 : index
    %c0_95 = arith.constant 0 : index
    %119 = vector.load %arg2[%c7_93, %c0_94, %c0_95] : memref<9x1x256xf32, #tpu.memory_space<vmem>>, vector<1x1x256xf32>
    %120 = vector.shape_cast %119 : vector<1x1x256xf32> to vector<1x256xf32>
    %121 = vector.broadcast %120 : vector<1x256xf32> to vector<32x256xf32>
    %122 = arith.mulf %118, %121 : vector<32x256xf32>
    %c224 = arith.constant 224 : index
    %c0_96 = arith.constant 0 : index
    %123 = vector.load %arg12[%c224, %c0_96] : memref<288x256xf32, #tpu.memory_space<vmem>>, vector<32x256xf32>
    tpu.vector_store %arg12[%c224, %c0_96], %122 {strides = array<i32>} : memref<288x256xf32, #tpu.memory_space<vmem>>, vector<32x256xf32>,
    %c239_i32_97 = arith.constant 239 : i32
    %124 = tpu.dynamic_rotate %76 by %c239_i32_97 dim 1 : vector<32x256xf32>, i32 -> vector<32x256xf32>
    %c8_98 = arith.constant 8 : index
    %c0_99 = arith.constant 0 : index
    %c0_100 = arith.constant 0 : index
    %125 = vector.load %arg2[%c8_98, %c0_99, %c0_100] : memref<9x1x256xf32, #tpu.memory_space<vmem>>, vector<1x1x256xf32>
    %126 = vector.shape_cast %125 : vector<1x1x256xf32> to vector<1x256xf32>
    %127 = vector.broadcast %126 : vector<1x256xf32> to vector<32x256xf32>
    %128 = arith.mulf %124, %127 : vector<32x256xf32>
    %c256 = arith.constant 256 : index
    %c0_101 = arith.constant 0 : index
    %129 = vector.load %arg12[%c256, %c0_101] : memref<288x256xf32, #tpu.memory_space<vmem>>, vector<32x256xf32>
    tpu.vector_store %arg12[%c256, %c0_101], %128 {strides = array<i32>} : memref<288x256xf32, #tpu.memory_space<vmem>>, vector<32x256xf32>,
    %c0_102 = arith.constant 0 : index
    %c0_103 = arith.constant 0 : index
    %130 = vector.load %arg12[%c0_102, %c0_103] : memref<288x256xf32, #tpu.memory_space<vmem>>, vector<288x256xf32>
    %131 = arith.truncf %130 : vector<288x256xf32> to vector<288x256xbf16>
    %cst_104 = arith.constant dense<0.000000e+00> : vector<32x256xf32>
    %132 = tpu.matmul %78, %131, %cst_104 {dimension_numbers = #tpu.dot_dimension_numbers<[1], [0], [0], [1], [0, 0, 1, 1], [], []>} : vector<32x288xbf16>, vector<288x256xbf16>, vector<32x256xf32> -> vector<32x256xf32>
    %133 = vector.broadcast %80 : vector<32x1xf32> to vector<32x256xf32>
    %134 = arith.addf %132, %133 : vector<32x256xf32>
    %c1_105 = arith.constant 1 : index
    %c0_106 = arith.constant 0 : index
    %c0_107 = arith.constant 0 : index
    %135 = vector.load %arg7[%c1_105, %c0_106, %c0_107] : memref<5x32x256xf32, #tpu.memory_space<vmem>>, vector<1x32x256xf32>
    %136 = vector.shape_cast %135 : vector<1x32x256xf32> to vector<32x256xf32>
    %c1_108 = arith.constant 1 : index
    %c0_109 = arith.constant 0 : index
    %c0_110 = arith.constant 0 : index
    %137 = vector.load %arg8[%c1_108, %c0_109, %c0_110] : memref<5x32x256xf32, #tpu.memory_space<vmem>>, vector<1x32x256xf32>
    %138 = vector.shape_cast %137 : vector<1x32x256xf32> to vector<32x256xf32>
    %139 = vector.shape_cast %134 : vector<32x256xf32> to vector<1x32x256xf32>
    %cst_111 = arith.constant dense<0.000000e+00> : vector<1xf32>
    %140 = vector.multi_reduction <add>, %139, %cst_111 [1, 2] : vector<1x32x256xf32> to vector<1xf32>
    %141 = vector.shape_cast %140 : vector<1xf32> to vector<1x1x1xf32>
    %142 = vector.extract %141[0, 0, 0] : f32 from vector<1x1x1xf32>
    %143 = arith.mulf %134, %134 : vector<32x256xf32>
    %144 = vector.shape_cast %143 : vector<32x256xf32> to vector<1x32x256xf32>
    %cst_112 = arith.constant dense<0.000000e+00> : vector<1xf32>
    %145 = vector.multi_reduction <add>, %144, %cst_112 [1, 2] : vector<1x32x256xf32> to vector<1xf32>
    %146 = vector.shape_cast %145 : vector<1xf32> to vector<1x1x1xf32>
    %147 = vector.extract %146[0, 0, 0] : f32 from vector<1x1x1xf32>
    %cst_113 = arith.constant 8.192000e+03 : f32
    %148 = arith.divf %142, %cst_113 : f32
    %cst_114 = arith.constant 8.192000e+03 : f32
    %149 = arith.divf %147, %cst_114 : f32
    %150 = arith.mulf %148, %148 : f32
    %151 = arith.subf %149, %150 : f32
    %cst_115 = arith.constant 9.99999974E-6 : f32
    %152 = arith.addf %151, %cst_115 : f32
    %153 = math.rsqrt %152 : f32
    %154 = vector.broadcast %148 : f32 to vector<32x256xf32>
    %155 = arith.subf %134, %154 : vector<32x256xf32>
    %156 = vector.broadcast %153 : f32 to vector<32x256xf32>
    %157 = arith.mulf %155, %156 : vector<32x256xf32>
    %158 = arith.mulf %157, %136 : vector<32x256xf32>
    %159 = arith.addf %158, %138 : vector<32x256xf32>
    %cst_116 = arith.constant 0.000000e+00 : f32
    %160 = vector.broadcast %cst_116 : f32 to vector<32x256xf32>
    %161 = arith.maximumf %159, %160 : vector<32x256xf32>
    %c1_117 = arith.constant 1 : index
    %c0_118 = arith.constant 0 : index
    %c0_119 = arith.constant 0 : index
    %162 = vector.load %arg5[%c1_117, %c0_118, %c0_119] : memref<4x32x288xbf16, #tpu.memory_space<vmem>>, vector<1x32x288xbf16>
    %163 = vector.shape_cast %162 : vector<1x32x288xbf16> to vector<32x288xbf16>
    %c1_120 = arith.constant 1 : index
    %c0_121 = arith.constant 0 : index
    %c0_122 = arith.constant 0 : index
    %164 = vector.load %arg6[%c1_120, %c0_121, %c0_122] : memref<4x32x1xf32, #tpu.memory_space<vmem>>, vector<1x32x1xf32>
    %165 = vector.shape_cast %164 : vector<1x32x1xf32> to vector<32x1xf32>
    %c17_i32_123 = arith.constant 17 : i32
    %166 = tpu.dynamic_rotate %161 by %c17_i32_123 dim 1 : vector<32x256xf32>, i32 -> vector<32x256xf32>
    %c0_124 = arith.constant 0 : index
    %c0_125 = arith.constant 0 : index
    %c0_126 = arith.constant 0 : index
    %167 = vector.load %arg2[%c0_124, %c0_125, %c0_126] : memref<9x1x256xf32, #tpu.memory_space<vmem>>, vector<1x1x256xf32>
    %168 = vector.shape_cast %167 : vector<1x1x256xf32> to vector<1x256xf32>
    %169 = vector.broadcast %168 : vector<1x256xf32> to vector<32x256xf32>
    %170 = arith.mulf %166, %169 : vector<32x256xf32>
    %c0_127 = arith.constant 0 : index
    %c0_128 = arith.constant 0 : index
    %171 = vector.load %arg12[%c0_127, %c0_128] : memref<288x256xf32, #tpu.memory_space<vmem>>, vector<32x256xf32>
    tpu.vector_store %arg12[%c0_127, %c0_128], %170 {strides = array<i32>} : memref<288x256xf32, #tpu.memory_space<vmem>>, vector<32x256xf32>,
    %c16_i32_129 = arith.constant 16 : i32
    %172 = tpu.dynamic_rotate %161 by %c16_i32_129 dim 1 : vector<32x256xf32>, i32 -> vector<32x256xf32>
    %c1_130 = arith.constant 1 : index
    %c0_131 = arith.constant 0 : index
    %c0_132 = arith.constant 0 : index
    %173 = vector.load %arg2[%c1_130, %c0_131, %c0_132] : memref<9x1x256xf32, #tpu.memory_space<vmem>>, vector<1x1x256xf32>
    %174 = vector.shape_cast %173 : vector<1x1x256xf32> to vector<1x256xf32>
    %175 = vector.broadcast %174 : vector<1x256xf32> to vector<32x256xf32>
    %176 = arith.mulf %172, %175 : vector<32x256xf32>
    %c32_133 = arith.constant 32 : index
    %c0_134 = arith.constant 0 : index
    %177 = vector.load %arg12[%c32_133, %c0_134] : memref<288x256xf32, #tpu.memory_space<vmem>>, vector<32x256xf32>
    tpu.vector_store %arg12[%c32_133, %c0_134], %176 {strides = array<i32>} : memref<288x256xf32, #tpu.memory_space<vmem>>, vector<32x256xf32>,
    %c15_i32_135 = arith.constant 15 : i32
    %178 = tpu.dynamic_rotate %161 by %c15_i32_135 dim 1 : vector<32x256xf32>, i32 -> vector<32x256xf32>
    %c2_136 = arith.constant 2 : index
    %c0_137 = arith.constant 0 : index
    %c0_138 = arith.constant 0 : index
    %179 = vector.load %arg2[%c2_136, %c0_137, %c0_138] : memref<9x1x256xf32, #tpu.memory_space<vmem>>, vector<1x1x256xf32>
    %180 = vector.shape_cast %179 : vector<1x1x256xf32> to vector<1x256xf32>
    %181 = vector.broadcast %180 : vector<1x256xf32> to vector<32x256xf32>
    %182 = arith.mulf %178, %181 : vector<32x256xf32>
    %c64_139 = arith.constant 64 : index
    %c0_140 = arith.constant 0 : index
    %183 = vector.load %arg12[%c64_139, %c0_140] : memref<288x256xf32, #tpu.memory_space<vmem>>, vector<32x256xf32>
    tpu.vector_store %arg12[%c64_139, %c0_140], %182 {strides = array<i32>} : memref<288x256xf32, #tpu.memory_space<vmem>>, vector<32x256xf32>,
    %c1_i32_141 = arith.constant 1 : i32
    %184 = tpu.dynamic_rotate %161 by %c1_i32_141 dim 1 : vector<32x256xf32>, i32 -> vector<32x256xf32>
    %c3_142 = arith.constant 3 : index
    %c0_143 = arith.constant 0 : index
    %c0_144 = arith.constant 0 : index
    %185 = vector.load %arg2[%c3_142, %c0_143, %c0_144] : memref<9x1x256xf32, #tpu.memory_space<vmem>>, vector<1x1x256xf32>
    %186 = vector.shape_cast %185 : vector<1x1x256xf32> to vector<1x256xf32>
    %187 = vector.broadcast %186 : vector<1x256xf32> to vector<32x256xf32>
    %188 = arith.mulf %184, %187 : vector<32x256xf32>
    %c96_145 = arith.constant 96 : index
    %c0_146 = arith.constant 0 : index
    %189 = vector.load %arg12[%c96_145, %c0_146] : memref<288x256xf32, #tpu.memory_space<vmem>>, vector<32x256xf32>
    tpu.vector_store %arg12[%c96_145, %c0_146], %188 {strides = array<i32>} : memref<288x256xf32, #tpu.memory_space<vmem>>, vector<32x256xf32>,
    %c128_147 = arith.constant 128 : index
    %c0_148 = arith.constant 0 : index
    %190 = vector.load %arg12[%c128_147, %c0_148] : memref<288x256xf32, #tpu.memory_space<vmem>>, vector<32x256xf32>
    tpu.vector_store %arg12[%c128_147, %c0_148], %161 {strides = array<i32>} : memref<288x256xf32, #tpu.memory_space<vmem>>, vector<32x256xf32>,
    %c255_i32_149 = arith.constant 255 : i32
    %191 = tpu.dynamic_rotate %161 by %c255_i32_149 dim 1 : vector<32x256xf32>, i32 -> vector<32x256xf32>
    %c5_150 = arith.constant 5 : index
    %c0_151 = arith.constant 0 : index
    %c0_152 = arith.constant 0 : index
    %192 = vector.load %arg2[%c5_150, %c0_151, %c0_152] : memref<9x1x256xf32, #tpu.memory_space<vmem>>, vector<1x1x256xf32>
    %193 = vector.shape_cast %192 : vector<1x1x256xf32> to vector<1x256xf32>
    %194 = vector.broadcast %193 : vector<1x256xf32> to vector<32x256xf32>
    %195 = arith.mulf %191, %194 : vector<32x256xf32>
    %c160_153 = arith.constant 160 : index
    %c0_154 = arith.constant 0 : index
    %196 = vector.load %arg12[%c160_153, %c0_154] : memref<288x256xf32, #tpu.memory_space<vmem>>, vector<32x256xf32>
    tpu.vector_store %arg12[%c160_153, %c0_154], %195 {strides = array<i32>} : memref<288x256xf32, #tpu.memory_space<vmem>>, vector<32x256xf32>,
    %c241_i32_155 = arith.constant 241 : i32
    %197 = tpu.dynamic_rotate %161 by %c241_i32_155 dim 1 : vector<32x256xf32>, i32 -> vector<32x256xf32>
    %c6_156 = arith.constant 6 : index
    %c0_157 = arith.constant 0 : index
    %c0_158 = arith.constant 0 : index
    %198 = vector.load %arg2[%c6_156, %c0_157, %c0_158] : memref<9x1x256xf32, #tpu.memory_space<vmem>>, vector<1x1x256xf32>
    %199 = vector.shape_cast %198 : vector<1x1x256xf32> to vector<1x256xf32>
    %200 = vector.broadcast %199 : vector<1x256xf32> to vector<32x256xf32>
    %201 = arith.mulf %197, %200 : vector<32x256xf32>
    %c192_159 = arith.constant 192 : index
    %c0_160 = arith.constant 0 : index
    %202 = vector.load %arg12[%c192_159, %c0_160] : memref<288x256xf32, #tpu.memory_space<vmem>>, vector<32x256xf32>
    tpu.vector_store %arg12[%c192_159, %c0_160], %201 {strides = array<i32>} : memref<288x256xf32, #tpu.memory_space<vmem>>, vector<32x256xf32>,
    %c240_i32_161 = arith.constant 240 : i32
    %203 = tpu.dynamic_rotate %161 by %c240_i32_161 dim 1 : vector<32x256xf32>, i32 -> vector<32x256xf32>
    %c7_162 = arith.constant 7 : index
    %c0_163 = arith.constant 0 : index
    %c0_164 = arith.constant 0 : index
    %204 = vector.load %arg2[%c7_162, %c0_163, %c0_164] : memref<9x1x256xf32, #tpu.memory_space<vmem>>, vector<1x1x256xf32>
    %205 = vector.shape_cast %204 : vector<1x1x256xf32> to vector<1x256xf32>
    %206 = vector.broadcast %205 : vector<1x256xf32> to vector<32x256xf32>
    %207 = arith.mulf %203, %206 : vector<32x256xf32>
    %c224_165 = arith.constant 224 : index
    %c0_166 = arith.constant 0 : index
    %208 = vector.load %arg12[%c224_165, %c0_166] : memref<288x256xf32, #tpu.memory_space<vmem>>, vector<32x256xf32>
    tpu.vector_store %arg12[%c224_165, %c0_166], %207 {strides = array<i32>} : memref<288x256xf32, #tpu.memory_space<vmem>>, vector<32x256xf32>,
    %c239_i32_167 = arith.constant 239 : i32
    %209 = tpu.dynamic_rotate %161 by %c239_i32_167 dim 1 : vector<32x256xf32>, i32 -> vector<32x256xf32>
    %c8_168 = arith.constant 8 : index
    %c0_169 = arith.constant 0 : index
    %c0_170 = arith.constant 0 : index
    %210 = vector.load %arg2[%c8_168, %c0_169, %c0_170] : memref<9x1x256xf32, #tpu.memory_space<vmem>>, vector<1x1x256xf32>
    %211 = vector.shape_cast %210 : vector<1x1x256xf32> to vector<1x256xf32>
    %212 = vector.broadcast %211 : vector<1x256xf32> to vector<32x256xf32>
    %213 = arith.mulf %209, %212 : vector<32x256xf32>
    %c256_171 = arith.constant 256 : index
    %c0_172 = arith.constant 0 : index
    %214 = vector.load %arg12[%c256_171, %c0_172] : memref<288x256xf32, #tpu.memory_space<vmem>>, vector<32x256xf32>
    tpu.vector_store %arg12[%c256_171, %c0_172], %213 {strides = array<i32>} : memref<288x256xf32, #tpu.memory_space<vmem>>, vector<32x256xf32>,
    %c0_173 = arith.constant 0 : index
    %c0_174 = arith.constant 0 : index
    %215 = vector.load %arg12[%c0_173, %c0_174] : memref<288x256xf32, #tpu.memory_space<vmem>>, vector<288x256xf32>
    %216 = arith.truncf %215 : vector<288x256xf32> to vector<288x256xbf16>
    %cst_175 = arith.constant dense<0.000000e+00> : vector<32x256xf32>
    %217 = tpu.matmul %163, %216, %cst_175 {dimension_numbers = #tpu.dot_dimension_numbers<[1], [0], [0], [1], [0, 0, 1, 1], [], []>} : vector<32x288xbf16>, vector<288x256xbf16>, vector<32x256xf32> -> vector<32x256xf32>
    %218 = vector.broadcast %165 : vector<32x1xf32> to vector<32x256xf32>
    %219 = arith.addf %217, %218 : vector<32x256xf32>
    %c2_176 = arith.constant 2 : index
    %c0_177 = arith.constant 0 : index
    %c0_178 = arith.constant 0 : index
    %220 = vector.load %arg7[%c2_176, %c0_177, %c0_178] : memref<5x32x256xf32, #tpu.memory_space<vmem>>, vector<1x32x256xf32>
    %221 = vector.shape_cast %220 : vector<1x32x256xf32> to vector<32x256xf32>
    %c2_179 = arith.constant 2 : index
    %c0_180 = arith.constant 0 : index
    %c0_181 = arith.constant 0 : index
    %222 = vector.load %arg8[%c2_179, %c0_180, %c0_181] : memref<5x32x256xf32, #tpu.memory_space<vmem>>, vector<1x32x256xf32>
    %223 = vector.shape_cast %222 : vector<1x32x256xf32> to vector<32x256xf32>
    %224 = vector.shape_cast %219 : vector<32x256xf32> to vector<1x32x256xf32>
    %cst_182 = arith.constant dense<0.000000e+00> : vector<1xf32>
    %225 = vector.multi_reduction <add>, %224, %cst_182 [1, 2] : vector<1x32x256xf32> to vector<1xf32>
    %226 = vector.shape_cast %225 : vector<1xf32> to vector<1x1x1xf32>
    %227 = vector.extract %226[0, 0, 0] : f32 from vector<1x1x1xf32>
    %228 = arith.mulf %219, %219 : vector<32x256xf32>
    %229 = vector.shape_cast %228 : vector<32x256xf32> to vector<1x32x256xf32>
    %cst_183 = arith.constant dense<0.000000e+00> : vector<1xf32>
    %230 = vector.multi_reduction <add>, %229, %cst_183 [1, 2] : vector<1x32x256xf32> to vector<1xf32>
    %231 = vector.shape_cast %230 : vector<1xf32> to vector<1x1x1xf32>
    %232 = vector.extract %231[0, 0, 0] : f32 from vector<1x1x1xf32>
    %cst_184 = arith.constant 8.192000e+03 : f32
    %233 = arith.divf %227, %cst_184 : f32
    %cst_185 = arith.constant 8.192000e+03 : f32
    %234 = arith.divf %232, %cst_185 : f32
    %235 = arith.mulf %233, %233 : f32
    %236 = arith.subf %234, %235 : f32
    %cst_186 = arith.constant 9.99999974E-6 : f32
    %237 = arith.addf %236, %cst_186 : f32
    %238 = math.rsqrt %237 : f32
    %239 = vector.broadcast %233 : f32 to vector<32x256xf32>
    %240 = arith.subf %219, %239 : vector<32x256xf32>
    %241 = vector.broadcast %238 : f32 to vector<32x256xf32>
    %242 = arith.mulf %240, %241 : vector<32x256xf32>
    %243 = arith.mulf %242, %221 : vector<32x256xf32>
    %244 = arith.addf %243, %223 : vector<32x256xf32>
    %245 = arith.addf %244, %76 : vector<32x256xf32>
    %cst_187 = arith.constant 0.000000e+00 : f32
    %246 = vector.broadcast %cst_187 : f32 to vector<32x256xf32>
    %247 = arith.maximumf %245, %246 : vector<32x256xf32>
    %c2_188 = arith.constant 2 : index
    %c0_189 = arith.constant 0 : index
    %c0_190 = arith.constant 0 : index
    %248 = vector.load %arg5[%c2_188, %c0_189, %c0_190] : memref<4x32x288xbf16, #tpu.memory_space<vmem>>, vector<1x32x288xbf16>
    %249 = vector.shape_cast %248 : vector<1x32x288xbf16> to vector<32x288xbf16>
    %c2_191 = arith.constant 2 : index
    %c0_192 = arith.constant 0 : index
    %c0_193 = arith.constant 0 : index
    %250 = vector.load %arg6[%c2_191, %c0_192, %c0_193] : memref<4x32x1xf32, #tpu.memory_space<vmem>>, vector<1x32x1xf32>
    %251 = vector.shape_cast %250 : vector<1x32x1xf32> to vector<32x1xf32>
    %c17_i32_194 = arith.constant 17 : i32
    %252 = tpu.dynamic_rotate %247 by %c17_i32_194 dim 1 : vector<32x256xf32>, i32 -> vector<32x256xf32>
    %c0_195 = arith.constant 0 : index
    %c0_196 = arith.constant 0 : index
    %c0_197 = arith.constant 0 : index
    %253 = vector.load %arg2[%c0_195, %c0_196, %c0_197] : memref<9x1x256xf32, #tpu.memory_space<vmem>>, vector<1x1x256xf32>
    %254 = vector.shape_cast %253 : vector<1x1x256xf32> to vector<1x256xf32>
    %255 = vector.broadcast %254 : vector<1x256xf32> to vector<32x256xf32>
    %256 = arith.mulf %252, %255 : vector<32x256xf32>
    %c0_198 = arith.constant 0 : index
    %c0_199 = arith.constant 0 : index
    %257 = vector.load %arg12[%c0_198, %c0_199] : memref<288x256xf32, #tpu.memory_space<vmem>>, vector<32x256xf32>
    tpu.vector_store %arg12[%c0_198, %c0_199], %256 {strides = array<i32>} : memref<288x256xf32, #tpu.memory_space<vmem>>, vector<32x256xf32>,
    %c16_i32_200 = arith.constant 16 : i32
    %258 = tpu.dynamic_rotate %247 by %c16_i32_200 dim 1 : vector<32x256xf32>, i32 -> vector<32x256xf32>
    %c1_201 = arith.constant 1 : index
    %c0_202 = arith.constant 0 : index
    %c0_203 = arith.constant 0 : index
    %259 = vector.load %arg2[%c1_201, %c0_202, %c0_203] : memref<9x1x256xf32, #tpu.memory_space<vmem>>, vector<1x1x256xf32>
    %260 = vector.shape_cast %259 : vector<1x1x256xf32> to vector<1x256xf32>
    %261 = vector.broadcast %260 : vector<1x256xf32> to vector<32x256xf32>
    %262 = arith.mulf %258, %261 : vector<32x256xf32>
    %c32_204 = arith.constant 32 : index
    %c0_205 = arith.constant 0 : index
    %263 = vector.load %arg12[%c32_204, %c0_205] : memref<288x256xf32, #tpu.memory_space<vmem>>, vector<32x256xf32>
    tpu.vector_store %arg12[%c32_204, %c0_205], %262 {strides = array<i32>} : memref<288x256xf32, #tpu.memory_space<vmem>>, vector<32x256xf32>,
    %c15_i32_206 = arith.constant 15 : i32
    %264 = tpu.dynamic_rotate %247 by %c15_i32_206 dim 1 : vector<32x256xf32>, i32 -> vector<32x256xf32>
    %c2_207 = arith.constant 2 : index
    %c0_208 = arith.constant 0 : index
    %c0_209 = arith.constant 0 : index
    %265 = vector.load %arg2[%c2_207, %c0_208, %c0_209] : memref<9x1x256xf32, #tpu.memory_space<vmem>>, vector<1x1x256xf32>
    %266 = vector.shape_cast %265 : vector<1x1x256xf32> to vector<1x256xf32>
    %267 = vector.broadcast %266 : vector<1x256xf32> to vector<32x256xf32>
    %268 = arith.mulf %264, %267 : vector<32x256xf32>
    %c64_210 = arith.constant 64 : index
    %c0_211 = arith.constant 0 : index
    %269 = vector.load %arg12[%c64_210, %c0_211] : memref<288x256xf32, #tpu.memory_space<vmem>>, vector<32x256xf32>
    tpu.vector_store %arg12[%c64_210, %c0_211], %268 {strides = array<i32>} : memref<288x256xf32, #tpu.memory_space<vmem>>, vector<32x256xf32>,
    %c1_i32_212 = arith.constant 1 : i32
    %270 = tpu.dynamic_rotate %247 by %c1_i32_212 dim 1 : vector<32x256xf32>, i32 -> vector<32x256xf32>
    %c3_213 = arith.constant 3 : index
    %c0_214 = arith.constant 0 : index
    %c0_215 = arith.constant 0 : index
    %271 = vector.load %arg2[%c3_213, %c0_214, %c0_215] : memref<9x1x256xf32, #tpu.memory_space<vmem>>, vector<1x1x256xf32>
    %272 = vector.shape_cast %271 : vector<1x1x256xf32> to vector<1x256xf32>
    %273 = vector.broadcast %272 : vector<1x256xf32> to vector<32x256xf32>
    %274 = arith.mulf %270, %273 : vector<32x256xf32>
    %c96_216 = arith.constant 96 : index
    %c0_217 = arith.constant 0 : index
    %275 = vector.load %arg12[%c96_216, %c0_217] : memref<288x256xf32, #tpu.memory_space<vmem>>, vector<32x256xf32>
    tpu.vector_store %arg12[%c96_216, %c0_217], %274 {strides = array<i32>} : memref<288x256xf32, #tpu.memory_space<vmem>>, vector<32x256xf32>,
    %c128_218 = arith.constant 128 : index
    %c0_219 = arith.constant 0 : index
    %276 = vector.load %arg12[%c128_218, %c0_219] : memref<288x256xf32, #tpu.memory_space<vmem>>, vector<32x256xf32>
    tpu.vector_store %arg12[%c128_218, %c0_219], %247 {strides = array<i32>} : memref<288x256xf32, #tpu.memory_space<vmem>>, vector<32x256xf32>,
    %c255_i32_220 = arith.constant 255 : i32
    %277 = tpu.dynamic_rotate %247 by %c255_i32_220 dim 1 : vector<32x256xf32>, i32 -> vector<32x256xf32>
    %c5_221 = arith.constant 5 : index
    %c0_222 = arith.constant 0 : index
    %c0_223 = arith.constant 0 : index
    %278 = vector.load %arg2[%c5_221, %c0_222, %c0_223] : memref<9x1x256xf32, #tpu.memory_space<vmem>>, vector<1x1x256xf32>
    %279 = vector.shape_cast %278 : vector<1x1x256xf32> to vector<1x256xf32>
    %280 = vector.broadcast %279 : vector<1x256xf32> to vector<32x256xf32>
    %281 = arith.mulf %277, %280 : vector<32x256xf32>
    %c160_224 = arith.constant 160 : index
    %c0_225 = arith.constant 0 : index
    %282 = vector.load %arg12[%c160_224, %c0_225] : memref<288x256xf32, #tpu.memory_space<vmem>>, vector<32x256xf32>
    tpu.vector_store %arg12[%c160_224, %c0_225], %281 {strides = array<i32>} : memref<288x256xf32, #tpu.memory_space<vmem>>, vector<32x256xf32>,
    %c241_i32_226 = arith.constant 241 : i32
    %283 = tpu.dynamic_rotate %247 by %c241_i32_226 dim 1 : vector<32x256xf32>, i32 -> vector<32x256xf32>
    %c6_227 = arith.constant 6 : index
    %c0_228 = arith.constant 0 : index
    %c0_229 = arith.constant 0 : index
    %284 = vector.load %arg2[%c6_227, %c0_228, %c0_229] : memref<9x1x256xf32, #tpu.memory_space<vmem>>, vector<1x1x256xf32>
    %285 = vector.shape_cast %284 : vector<1x1x256xf32> to vector<1x256xf32>
    %286 = vector.broadcast %285 : vector<1x256xf32> to vector<32x256xf32>
    %287 = arith.mulf %283, %286 : vector<32x256xf32>
    %c192_230 = arith.constant 192 : index
    %c0_231 = arith.constant 0 : index
    %288 = vector.load %arg12[%c192_230, %c0_231] : memref<288x256xf32, #tpu.memory_space<vmem>>, vector<32x256xf32>
    tpu.vector_store %arg12[%c192_230, %c0_231], %287 {strides = array<i32>} : memref<288x256xf32, #tpu.memory_space<vmem>>, vector<32x256xf32>,
    %c240_i32_232 = arith.constant 240 : i32
    %289 = tpu.dynamic_rotate %247 by %c240_i32_232 dim 1 : vector<32x256xf32>, i32 -> vector<32x256xf32>
    %c7_233 = arith.constant 7 : index
    %c0_234 = arith.constant 0 : index
    %c0_235 = arith.constant 0 : index
    %290 = vector.load %arg2[%c7_233, %c0_234, %c0_235] : memref<9x1x256xf32, #tpu.memory_space<vmem>>, vector<1x1x256xf32>
    %291 = vector.shape_cast %290 : vector<1x1x256xf32> to vector<1x256xf32>
    %292 = vector.broadcast %291 : vector<1x256xf32> to vector<32x256xf32>
    %293 = arith.mulf %289, %292 : vector<32x256xf32>
    %c224_236 = arith.constant 224 : index
    %c0_237 = arith.constant 0 : index
    %294 = vector.load %arg12[%c224_236, %c0_237] : memref<288x256xf32, #tpu.memory_space<vmem>>, vector<32x256xf32>
    tpu.vector_store %arg12[%c224_236, %c0_237], %293 {strides = array<i32>} : memref<288x256xf32, #tpu.memory_space<vmem>>, vector<32x256xf32>,
    %c239_i32_238 = arith.constant 239 : i32
    %295 = tpu.dynamic_rotate %247 by %c239_i32_238 dim 1 : vector<32x256xf32>, i32 -> vector<32x256xf32>
    %c8_239 = arith.constant 8 : index
    %c0_240 = arith.constant 0 : index
    %c0_241 = arith.constant 0 : index
    %296 = vector.load %arg2[%c8_239, %c0_240, %c0_241] : memref<9x1x256xf32, #tpu.memory_space<vmem>>, vector<1x1x256xf32>
    %297 = vector.shape_cast %296 : vector<1x1x256xf32> to vector<1x256xf32>
    %298 = vector.broadcast %297 : vector<1x256xf32> to vector<32x256xf32>
    %299 = arith.mulf %295, %298 : vector<32x256xf32>
    %c256_242 = arith.constant 256 : index
    %c0_243 = arith.constant 0 : index
    %300 = vector.load %arg12[%c256_242, %c0_243] : memref<288x256xf32, #tpu.memory_space<vmem>>, vector<32x256xf32>
    tpu.vector_store %arg12[%c256_242, %c0_243], %299 {strides = array<i32>} : memref<288x256xf32, #tpu.memory_space<vmem>>, vector<32x256xf32>,
    %c0_244 = arith.constant 0 : index
    %c0_245 = arith.constant 0 : index
    %301 = vector.load %arg12[%c0_244, %c0_245] : memref<288x256xf32, #tpu.memory_space<vmem>>, vector<288x256xf32>
    %302 = arith.truncf %301 : vector<288x256xf32> to vector<288x256xbf16>
    %cst_246 = arith.constant dense<0.000000e+00> : vector<32x256xf32>
    %303 = tpu.matmul %249, %302, %cst_246 {dimension_numbers = #tpu.dot_dimension_numbers<[1], [0], [0], [1], [0, 0, 1, 1], [], []>} : vector<32x288xbf16>, vector<288x256xbf16>, vector<32x256xf32> -> vector<32x256xf32>
    %304 = vector.broadcast %251 : vector<32x1xf32> to vector<32x256xf32>
    %305 = arith.addf %303, %304 : vector<32x256xf32>
    %c3_247 = arith.constant 3 : index
    %c0_248 = arith.constant 0 : index
    %c0_249 = arith.constant 0 : index
    %306 = vector.load %arg7[%c3_247, %c0_248, %c0_249] : memref<5x32x256xf32, #tpu.memory_space<vmem>>, vector<1x32x256xf32>
    %307 = vector.shape_cast %306 : vector<1x32x256xf32> to vector<32x256xf32>
    %c3_250 = arith.constant 3 : index
    %c0_251 = arith.constant 0 : index
    %c0_252 = arith.constant 0 : index
    %308 = vector.load %arg8[%c3_250, %c0_251, %c0_252] : memref<5x32x256xf32, #tpu.memory_space<vmem>>, vector<1x32x256xf32>
    %309 = vector.shape_cast %308 : vector<1x32x256xf32> to vector<32x256xf32>
    %310 = vector.shape_cast %305 : vector<32x256xf32> to vector<1x32x256xf32>
    %cst_253 = arith.constant dense<0.000000e+00> : vector<1xf32>
    %311 = vector.multi_reduction <add>, %310, %cst_253 [1, 2] : vector<1x32x256xf32> to vector<1xf32>
    %312 = vector.shape_cast %311 : vector<1xf32> to vector<1x1x1xf32>
    %313 = vector.extract %312[0, 0, 0] : f32 from vector<1x1x1xf32>
    %314 = arith.mulf %305, %305 : vector<32x256xf32>
    %315 = vector.shape_cast %314 : vector<32x256xf32> to vector<1x32x256xf32>
    %cst_254 = arith.constant dense<0.000000e+00> : vector<1xf32>
    %316 = vector.multi_reduction <add>, %315, %cst_254 [1, 2] : vector<1x32x256xf32> to vector<1xf32>
    %317 = vector.shape_cast %316 : vector<1xf32> to vector<1x1x1xf32>
    %318 = vector.extract %317[0, 0, 0] : f32 from vector<1x1x1xf32>
    %cst_255 = arith.constant 8.192000e+03 : f32
    %319 = arith.divf %313, %cst_255 : f32
    %cst_256 = arith.constant 8.192000e+03 : f32
    %320 = arith.divf %318, %cst_256 : f32
    %321 = arith.mulf %319, %319 : f32
    %322 = arith.subf %320, %321 : f32
    %cst_257 = arith.constant 9.99999974E-6 : f32
    %323 = arith.addf %322, %cst_257 : f32
    %324 = math.rsqrt %323 : f32
    %325 = vector.broadcast %319 : f32 to vector<32x256xf32>
    %326 = arith.subf %305, %325 : vector<32x256xf32>
    %327 = vector.broadcast %324 : f32 to vector<32x256xf32>
    %328 = arith.mulf %326, %327 : vector<32x256xf32>
    %329 = arith.mulf %328, %307 : vector<32x256xf32>
    %330 = arith.addf %329, %309 : vector<32x256xf32>
    %cst_258 = arith.constant 0.000000e+00 : f32
    %331 = vector.broadcast %cst_258 : f32 to vector<32x256xf32>
    %332 = arith.maximumf %330, %331 : vector<32x256xf32>
    %c3_259 = arith.constant 3 : index
    %c0_260 = arith.constant 0 : index
    %c0_261 = arith.constant 0 : index
    %333 = vector.load %arg5[%c3_259, %c0_260, %c0_261] : memref<4x32x288xbf16, #tpu.memory_space<vmem>>, vector<1x32x288xbf16>
    %334 = vector.shape_cast %333 : vector<1x32x288xbf16> to vector<32x288xbf16>
    %c3_262 = arith.constant 3 : index
    %c0_263 = arith.constant 0 : index
    %c0_264 = arith.constant 0 : index
    %335 = vector.load %arg6[%c3_262, %c0_263, %c0_264] : memref<4x32x1xf32, #tpu.memory_space<vmem>>, vector<1x32x1xf32>
    %336 = vector.shape_cast %335 : vector<1x32x1xf32> to vector<32x1xf32>
    %c17_i32_265 = arith.constant 17 : i32
    %337 = tpu.dynamic_rotate %332 by %c17_i32_265 dim 1 : vector<32x256xf32>, i32 -> vector<32x256xf32>
    %c0_266 = arith.constant 0 : index
    %c0_267 = arith.constant 0 : index
    %c0_268 = arith.constant 0 : index
    %338 = vector.load %arg2[%c0_266, %c0_267, %c0_268] : memref<9x1x256xf32, #tpu.memory_space<vmem>>, vector<1x1x256xf32>
    %339 = vector.shape_cast %338 : vector<1x1x256xf32> to vector<1x256xf32>
    %340 = vector.broadcast %339 : vector<1x256xf32> to vector<32x256xf32>
    %341 = arith.mulf %337, %340 : vector<32x256xf32>
    %c0_269 = arith.constant 0 : index
    %c0_270 = arith.constant 0 : index
    %342 = vector.load %arg12[%c0_269, %c0_270] : memref<288x256xf32, #tpu.memory_space<vmem>>, vector<32x256xf32>
    tpu.vector_store %arg12[%c0_269, %c0_270], %341 {strides = array<i32>} : memref<288x256xf32, #tpu.memory_space<vmem>>, vector<32x256xf32>,
    %c16_i32_271 = arith.constant 16 : i32
    %343 = tpu.dynamic_rotate %332 by %c16_i32_271 dim 1 : vector<32x256xf32>, i32 -> vector<32x256xf32>
    %c1_272 = arith.constant 1 : index
    %c0_273 = arith.constant 0 : index
    %c0_274 = arith.constant 0 : index
    %344 = vector.load %arg2[%c1_272, %c0_273, %c0_274] : memref<9x1x256xf32, #tpu.memory_space<vmem>>, vector<1x1x256xf32>
    %345 = vector.shape_cast %344 : vector<1x1x256xf32> to vector<1x256xf32>
    %346 = vector.broadcast %345 : vector<1x256xf32> to vector<32x256xf32>
    %347 = arith.mulf %343, %346 : vector<32x256xf32>
    %c32_275 = arith.constant 32 : index
    %c0_276 = arith.constant 0 : index
    %348 = vector.load %arg12[%c32_275, %c0_276] : memref<288x256xf32, #tpu.memory_space<vmem>>, vector<32x256xf32>
    tpu.vector_store %arg12[%c32_275, %c0_276], %347 {strides = array<i32>} : memref<288x256xf32, #tpu.memory_space<vmem>>, vector<32x256xf32>,
    %c15_i32_277 = arith.constant 15 : i32
    %349 = tpu.dynamic_rotate %332 by %c15_i32_277 dim 1 : vector<32x256xf32>, i32 -> vector<32x256xf32>
    %c2_278 = arith.constant 2 : index
    %c0_279 = arith.constant 0 : index
    %c0_280 = arith.constant 0 : index
    %350 = vector.load %arg2[%c2_278, %c0_279, %c0_280] : memref<9x1x256xf32, #tpu.memory_space<vmem>>, vector<1x1x256xf32>
    %351 = vector.shape_cast %350 : vector<1x1x256xf32> to vector<1x256xf32>
    %352 = vector.broadcast %351 : vector<1x256xf32> to vector<32x256xf32>
    %353 = arith.mulf %349, %352 : vector<32x256xf32>
    %c64_281 = arith.constant 64 : index
    %c0_282 = arith.constant 0 : index
    %354 = vector.load %arg12[%c64_281, %c0_282] : memref<288x256xf32, #tpu.memory_space<vmem>>, vector<32x256xf32>
    tpu.vector_store %arg12[%c64_281, %c0_282], %353 {strides = array<i32>} : memref<288x256xf32, #tpu.memory_space<vmem>>, vector<32x256xf32>,
    %c1_i32_283 = arith.constant 1 : i32
    %355 = tpu.dynamic_rotate %332 by %c1_i32_283 dim 1 : vector<32x256xf32>, i32 -> vector<32x256xf32>
    %c3_284 = arith.constant 3 : index
    %c0_285 = arith.constant 0 : index
    %c0_286 = arith.constant 0 : index
    %356 = vector.load %arg2[%c3_284, %c0_285, %c0_286] : memref<9x1x256xf32, #tpu.memory_space<vmem>>, vector<1x1x256xf32>
    %357 = vector.shape_cast %356 : vector<1x1x256xf32> to vector<1x256xf32>
    %358 = vector.broadcast %357 : vector<1x256xf32> to vector<32x256xf32>
    %359 = arith.mulf %355, %358 : vector<32x256xf32>
    %c96_287 = arith.constant 96 : index
    %c0_288 = arith.constant 0 : index
    %360 = vector.load %arg12[%c96_287, %c0_288] : memref<288x256xf32, #tpu.memory_space<vmem>>, vector<32x256xf32>
    tpu.vector_store %arg12[%c96_287, %c0_288], %359 {strides = array<i32>} : memref<288x256xf32, #tpu.memory_space<vmem>>, vector<32x256xf32>,
    %c128_289 = arith.constant 128 : index
    %c0_290 = arith.constant 0 : index
    %361 = vector.load %arg12[%c128_289, %c0_290] : memref<288x256xf32, #tpu.memory_space<vmem>>, vector<32x256xf32>
    tpu.vector_store %arg12[%c128_289, %c0_290], %332 {strides = array<i32>} : memref<288x256xf32, #tpu.memory_space<vmem>>, vector<32x256xf32>,
    %c255_i32_291 = arith.constant 255 : i32
    %362 = tpu.dynamic_rotate %332 by %c255_i32_291 dim 1 : vector<32x256xf32>, i32 -> vector<32x256xf32>
    %c5_292 = arith.constant 5 : index
    %c0_293 = arith.constant 0 : index
    %c0_294 = arith.constant 0 : index
    %363 = vector.load %arg2[%c5_292, %c0_293, %c0_294] : memref<9x1x256xf32, #tpu.memory_space<vmem>>, vector<1x1x256xf32>
    %364 = vector.shape_cast %363 : vector<1x1x256xf32> to vector<1x256xf32>
    %365 = vector.broadcast %364 : vector<1x256xf32> to vector<32x256xf32>
    %366 = arith.mulf %362, %365 : vector<32x256xf32>
    %c160_295 = arith.constant 160 : index
    %c0_296 = arith.constant 0 : index
    %367 = vector.load %arg12[%c160_295, %c0_296] : memref<288x256xf32, #tpu.memory_space<vmem>>, vector<32x256xf32>
    tpu.vector_store %arg12[%c160_295, %c0_296], %366 {strides = array<i32>} : memref<288x256xf32, #tpu.memory_space<vmem>>, vector<32x256xf32>,
    %c241_i32_297 = arith.constant 241 : i32
    %368 = tpu.dynamic_rotate %332 by %c241_i32_297 dim 1 : vector<32x256xf32>, i32 -> vector<32x256xf32>
    %c6_298 = arith.constant 6 : index
    %c0_299 = arith.constant 0 : index
    %c0_300 = arith.constant 0 : index
    %369 = vector.load %arg2[%c6_298, %c0_299, %c0_300] : memref<9x1x256xf32, #tpu.memory_space<vmem>>, vector<1x1x256xf32>
    %370 = vector.shape_cast %369 : vector<1x1x256xf32> to vector<1x256xf32>
    %371 = vector.broadcast %370 : vector<1x256xf32> to vector<32x256xf32>
    %372 = arith.mulf %368, %371 : vector<32x256xf32>
    %c192_301 = arith.constant 192 : index
    %c0_302 = arith.constant 0 : index
    %373 = vector.load %arg12[%c192_301, %c0_302] : memref<288x256xf32, #tpu.memory_space<vmem>>, vector<32x256xf32>
    tpu.vector_store %arg12[%c192_301, %c0_302], %372 {strides = array<i32>} : memref<288x256xf32, #tpu.memory_space<vmem>>, vector<32x256xf32>,
    %c240_i32_303 = arith.constant 240 : i32
    %374 = tpu.dynamic_rotate %332 by %c240_i32_303 dim 1 : vector<32x256xf32>, i32 -> vector<32x256xf32>
    %c7_304 = arith.constant 7 : index
    %c0_305 = arith.constant 0 : index
    %c0_306 = arith.constant 0 : index
    %375 = vector.load %arg2[%c7_304, %c0_305, %c0_306] : memref<9x1x256xf32, #tpu.memory_space<vmem>>, vector<1x1x256xf32>
    %376 = vector.shape_cast %375 : vector<1x1x256xf32> to vector<1x256xf32>
    %377 = vector.broadcast %376 : vector<1x256xf32> to vector<32x256xf32>
    %378 = arith.mulf %374, %377 : vector<32x256xf32>
    %c224_307 = arith.constant 224 : index
    %c0_308 = arith.constant 0 : index
    %379 = vector.load %arg12[%c224_307, %c0_308] : memref<288x256xf32, #tpu.memory_space<vmem>>, vector<32x256xf32>
    tpu.vector_store %arg12[%c224_307, %c0_308], %378 {strides = array<i32>} : memref<288x256xf32, #tpu.memory_space<vmem>>, vector<32x256xf32>,
    %c239_i32_309 = arith.constant 239 : i32
    %380 = tpu.dynamic_rotate %332 by %c239_i32_309 dim 1 : vector<32x256xf32>, i32 -> vector<32x256xf32>
    %c8_310 = arith.constant 8 : index
    %c0_311 = arith.constant 0 : index
    %c0_312 = arith.constant 0 : index
    %381 = vector.load %arg2[%c8_310, %c0_311, %c0_312] : memref<9x1x256xf32, #tpu.memory_space<vmem>>, vector<1x1x256xf32>
    %382 = vector.shape_cast %381 : vector<1x1x256xf32> to vector<1x256xf32>
    %383 = vector.broadcast %382 : vector<1x256xf32> to vector<32x256xf32>
    %384 = arith.mulf %380, %383 : vector<32x256xf32>
    %c256_313 = arith.constant 256 : index
    %c0_314 = arith.constant 0 : index
    %385 = vector.load %arg12[%c256_313, %c0_314] : memref<288x256xf32, #tpu.memory_space<vmem>>, vector<32x256xf32>
    tpu.vector_store %arg12[%c256_313, %c0_314], %384 {strides = array<i32>} : memref<288x256xf32, #tpu.memory_space<vmem>>, vector<32x256xf32>,
    %c0_315 = arith.constant 0 : index
    %c0_316 = arith.constant 0 : index
    %386 = vector.load %arg12[%c0_315, %c0_316] : memref<288x256xf32, #tpu.memory_space<vmem>>, vector<288x256xf32>
    %387 = arith.truncf %386 : vector<288x256xf32> to vector<288x256xbf16>
    %cst_317 = arith.constant dense<0.000000e+00> : vector<32x256xf32>
    %388 = tpu.matmul %334, %387, %cst_317 {dimension_numbers = #tpu.dot_dimension_numbers<[1], [0], [0], [1], [0, 0, 1, 1], [], []>} : vector<32x288xbf16>, vector<288x256xbf16>, vector<32x256xf32> -> vector<32x256xf32>
    %389 = vector.broadcast %336 : vector<32x1xf32> to vector<32x256xf32>
    %390 = arith.addf %388, %389 : vector<32x256xf32>
    %c4_318 = arith.constant 4 : index
    %c0_319 = arith.constant 0 : index
    %c0_320 = arith.constant 0 : index
    %391 = vector.load %arg7[%c4_318, %c0_319, %c0_320] : memref<5x32x256xf32, #tpu.memory_space<vmem>>, vector<1x32x256xf32>
    %392 = vector.shape_cast %391 : vector<1x32x256xf32> to vector<32x256xf32>
    %c4_321 = arith.constant 4 : index
    %c0_322 = arith.constant 0 : index
    %c0_323 = arith.constant 0 : index
    %393 = vector.load %arg8[%c4_321, %c0_322, %c0_323] : memref<5x32x256xf32, #tpu.memory_space<vmem>>, vector<1x32x256xf32>
    %394 = vector.shape_cast %393 : vector<1x32x256xf32> to vector<32x256xf32>
    %395 = vector.shape_cast %390 : vector<32x256xf32> to vector<1x32x256xf32>
    %cst_324 = arith.constant dense<0.000000e+00> : vector<1xf32>
    %396 = vector.multi_reduction <add>, %395, %cst_324 [1, 2] : vector<1x32x256xf32> to vector<1xf32>
    %397 = vector.shape_cast %396 : vector<1xf32> to vector<1x1x1xf32>
    %398 = vector.extract %397[0, 0, 0] : f32 from vector<1x1x1xf32>
    %399 = arith.mulf %390, %390 : vector<32x256xf32>
    %400 = vector.shape_cast %399 : vector<32x256xf32> to vector<1x32x256xf32>
    %cst_325 = arith.constant dense<0.000000e+00> : vector<1xf32>
    %401 = vector.multi_reduction <add>, %400, %cst_325 [1, 2] : vector<1x32x256xf32> to vector<1xf32>
    %402 = vector.shape_cast %401 : vector<1xf32> to vector<1x1x1xf32>
    %403 = vector.extract %402[0, 0, 0] : f32 from vector<1x1x1xf32>
    %cst_326 = arith.constant 8.192000e+03 : f32
    %404 = arith.divf %398, %cst_326 : f32
    %cst_327 = arith.constant 8.192000e+03 : f32
    %405 = arith.divf %403, %cst_327 : f32
    %406 = arith.mulf %404, %404 : f32
    %407 = arith.subf %405, %406 : f32
    %cst_328 = arith.constant 9.99999974E-6 : f32
    %408 = arith.addf %407, %cst_328 : f32
    %409 = math.rsqrt %408 : f32
    %410 = vector.broadcast %404 : f32 to vector<32x256xf32>
    %411 = arith.subf %390, %410 : vector<32x256xf32>
    %412 = vector.broadcast %409 : f32 to vector<32x256xf32>
    %413 = arith.mulf %411, %412 : vector<32x256xf32>
    %414 = arith.mulf %413, %392 : vector<32x256xf32>
    %415 = arith.addf %414, %394 : vector<32x256xf32>
    %416 = arith.addf %415, %247 : vector<32x256xf32>
    %cst_329 = arith.constant 0.000000e+00 : f32
    %417 = vector.broadcast %cst_329 : f32 to vector<32x256xf32>
    %418 = arith.maximumf %416, %417 : vector<32x256xf32>
    %c0_330 = arith.constant 0 : index
    %c0_331 = arith.constant 0 : index
    %419 = vector.load %arg9[%c0_330, %c0_331] : memref<1x288xbf16, #tpu.memory_space<vmem>>, vector<1x288xbf16>
    %c0_332 = arith.constant 0 : index
    %c0_333 = arith.constant 0 : index
    %420 = vector.load %arg10[%c0_332, %c0_333] : memref<1x1xf32, #tpu.memory_space<vmem>>, vector<1x1xf32>
    %c17_i32_334 = arith.constant 17 : i32
    %421 = tpu.dynamic_rotate %418 by %c17_i32_334 dim 1 : vector<32x256xf32>, i32 -> vector<32x256xf32>
    %c0_335 = arith.constant 0 : index
    %c0_336 = arith.constant 0 : index
    %c0_337 = arith.constant 0 : index
    %422 = vector.load %arg2[%c0_335, %c0_336, %c0_337] : memref<9x1x256xf32, #tpu.memory_space<vmem>>, vector<1x1x256xf32>
    %423 = vector.shape_cast %422 : vector<1x1x256xf32> to vector<1x256xf32>
    %424 = vector.broadcast %423 : vector<1x256xf32> to vector<32x256xf32>
    %425 = arith.mulf %421, %424 : vector<32x256xf32>
    %c0_338 = arith.constant 0 : index
    %c0_339 = arith.constant 0 : index
    %426 = vector.load %arg12[%c0_338, %c0_339] : memref<288x256xf32, #tpu.memory_space<vmem>>, vector<32x256xf32>
    tpu.vector_store %arg12[%c0_338, %c0_339], %425 {strides = array<i32>} : memref<288x256xf32, #tpu.memory_space<vmem>>, vector<32x256xf32>,
    %c16_i32_340 = arith.constant 16 : i32
    %427 = tpu.dynamic_rotate %418 by %c16_i32_340 dim 1 : vector<32x256xf32>, i32 -> vector<32x256xf32>
    %c1_341 = arith.constant 1 : index
    %c0_342 = arith.constant 0 : index
    %c0_343 = arith.constant 0 : index
    %428 = vector.load %arg2[%c1_341, %c0_342, %c0_343] : memref<9x1x256xf32, #tpu.memory_space<vmem>>, vector<1x1x256xf32>
    %429 = vector.shape_cast %428 : vector<1x1x256xf32> to vector<1x256xf32>
    %430 = vector.broadcast %429 : vector<1x256xf32> to vector<32x256xf32>
    %431 = arith.mulf %427, %430 : vector<32x256xf32>
    %c32_344 = arith.constant 32 : index
    %c0_345 = arith.constant 0 : index
    %432 = vector.load %arg12[%c32_344, %c0_345] : memref<288x256xf32, #tpu.memory_space<vmem>>, vector<32x256xf32>
    tpu.vector_store %arg12[%c32_344, %c0_345], %431 {strides = array<i32>} : memref<288x256xf32, #tpu.memory_space<vmem>>, vector<32x256xf32>,
    %c15_i32_346 = arith.constant 15 : i32
    %433 = tpu.dynamic_rotate %418 by %c15_i32_346 dim 1 : vector<32x256xf32>, i32 -> vector<32x256xf32>
    %c2_347 = arith.constant 2 : index
    %c0_348 = arith.constant 0 : index
    %c0_349 = arith.constant 0 : index
    %434 = vector.load %arg2[%c2_347, %c0_348, %c0_349] : memref<9x1x256xf32, #tpu.memory_space<vmem>>, vector<1x1x256xf32>
    %435 = vector.shape_cast %434 : vector<1x1x256xf32> to vector<1x256xf32>
    %436 = vector.broadcast %435 : vector<1x256xf32> to vector<32x256xf32>
    %437 = arith.mulf %433, %436 : vector<32x256xf32>
    %c64_350 = arith.constant 64 : index
    %c0_351 = arith.constant 0 : index
    %438 = vector.load %arg12[%c64_350, %c0_351] : memref<288x256xf32, #tpu.memory_space<vmem>>, vector<32x256xf32>
    tpu.vector_store %arg12[%c64_350, %c0_351], %437 {strides = array<i32>} : memref<288x256xf32, #tpu.memory_space<vmem>>, vector<32x256xf32>,
    %c1_i32_352 = arith.constant 1 : i32
    %439 = tpu.dynamic_rotate %418 by %c1_i32_352 dim 1 : vector<32x256xf32>, i32 -> vector<32x256xf32>
    %c3_353 = arith.constant 3 : index
    %c0_354 = arith.constant 0 : index
    %c0_355 = arith.constant 0 : index
    %440 = vector.load %arg2[%c3_353, %c0_354, %c0_355] : memref<9x1x256xf32, #tpu.memory_space<vmem>>, vector<1x1x256xf32>
    %441 = vector.shape_cast %440 : vector<1x1x256xf32> to vector<1x256xf32>
    %442 = vector.broadcast %441 : vector<1x256xf32> to vector<32x256xf32>
    %443 = arith.mulf %439, %442 : vector<32x256xf32>
    %c96_356 = arith.constant 96 : index
    %c0_357 = arith.constant 0 : index
    %444 = vector.load %arg12[%c96_356, %c0_357] : memref<288x256xf32, #tpu.memory_space<vmem>>, vector<32x256xf32>
    tpu.vector_store %arg12[%c96_356, %c0_357], %443 {strides = array<i32>} : memref<288x256xf32, #tpu.memory_space<vmem>>, vector<32x256xf32>,
    %c128_358 = arith.constant 128 : index
    %c0_359 = arith.constant 0 : index
    %445 = vector.load %arg12[%c128_358, %c0_359] : memref<288x256xf32, #tpu.memory_space<vmem>>, vector<32x256xf32>
    tpu.vector_store %arg12[%c128_358, %c0_359], %418 {strides = array<i32>} : memref<288x256xf32, #tpu.memory_space<vmem>>, vector<32x256xf32>,
    %c255_i32_360 = arith.constant 255 : i32
    %446 = tpu.dynamic_rotate %418 by %c255_i32_360 dim 1 : vector<32x256xf32>, i32 -> vector<32x256xf32>
    %c5_361 = arith.constant 5 : index
    %c0_362 = arith.constant 0 : index
    %c0_363 = arith.constant 0 : index
    %447 = vector.load %arg2[%c5_361, %c0_362, %c0_363] : memref<9x1x256xf32, #tpu.memory_space<vmem>>, vector<1x1x256xf32>
    %448 = vector.shape_cast %447 : vector<1x1x256xf32> to vector<1x256xf32>
    %449 = vector.broadcast %448 : vector<1x256xf32> to vector<32x256xf32>
    %450 = arith.mulf %446, %449 : vector<32x256xf32>
    %c160_364 = arith.constant 160 : index
    %c0_365 = arith.constant 0 : index
    %451 = vector.load %arg12[%c160_364, %c0_365] : memref<288x256xf32, #tpu.memory_space<vmem>>, vector<32x256xf32>
    tpu.vector_store %arg12[%c160_364, %c0_365], %450 {strides = array<i32>} : memref<288x256xf32, #tpu.memory_space<vmem>>, vector<32x256xf32>,
    %c241_i32_366 = arith.constant 241 : i32
    %452 = tpu.dynamic_rotate %418 by %c241_i32_366 dim 1 : vector<32x256xf32>, i32 -> vector<32x256xf32>
    %c6_367 = arith.constant 6 : index
    %c0_368 = arith.constant 0 : index
    %c0_369 = arith.constant 0 : index
    %453 = vector.load %arg2[%c6_367, %c0_368, %c0_369] : memref<9x1x256xf32, #tpu.memory_space<vmem>>, vector<1x1x256xf32>
    %454 = vector.shape_cast %453 : vector<1x1x256xf32> to vector<1x256xf32>
    %455 = vector.broadcast %454 : vector<1x256xf32> to vector<32x256xf32>
    %456 = arith.mulf %452, %455 : vector<32x256xf32>
    %c192_370 = arith.constant 192 : index
    %c0_371 = arith.constant 0 : index
    %457 = vector.load %arg12[%c192_370, %c0_371] : memref<288x256xf32, #tpu.memory_space<vmem>>, vector<32x256xf32>
    tpu.vector_store %arg12[%c192_370, %c0_371], %456 {strides = array<i32>} : memref<288x256xf32, #tpu.memory_space<vmem>>, vector<32x256xf32>,
    %c240_i32_372 = arith.constant 240 : i32
    %458 = tpu.dynamic_rotate %418 by %c240_i32_372 dim 1 : vector<32x256xf32>, i32 -> vector<32x256xf32>
    %c7_373 = arith.constant 7 : index
    %c0_374 = arith.constant 0 : index
    %c0_375 = arith.constant 0 : index
    %459 = vector.load %arg2[%c7_373, %c0_374, %c0_375] : memref<9x1x256xf32, #tpu.memory_space<vmem>>, vector<1x1x256xf32>
    %460 = vector.shape_cast %459 : vector<1x1x256xf32> to vector<1x256xf32>
    %461 = vector.broadcast %460 : vector<1x256xf32> to vector<32x256xf32>
    %462 = arith.mulf %458, %461 : vector<32x256xf32>
    %c224_376 = arith.constant 224 : index
    %c0_377 = arith.constant 0 : index
    %463 = vector.load %arg12[%c224_376, %c0_377] : memref<288x256xf32, #tpu.memory_space<vmem>>, vector<32x256xf32>
    tpu.vector_store %arg12[%c224_376, %c0_377], %462 {strides = array<i32>} : memref<288x256xf32, #tpu.memory_space<vmem>>, vector<32x256xf32>,
    %c239_i32_378 = arith.constant 239 : i32
    %464 = tpu.dynamic_rotate %418 by %c239_i32_378 dim 1 : vector<32x256xf32>, i32 -> vector<32x256xf32>
    %c8_379 = arith.constant 8 : index
    %c0_380 = arith.constant 0 : index
    %c0_381 = arith.constant 0 : index
    %465 = vector.load %arg2[%c8_379, %c0_380, %c0_381] : memref<9x1x256xf32, #tpu.memory_space<vmem>>, vector<1x1x256xf32>
    %466 = vector.shape_cast %465 : vector<1x1x256xf32> to vector<1x256xf32>
    %467 = vector.broadcast %466 : vector<1x256xf32> to vector<32x256xf32>
    %468 = arith.mulf %464, %467 : vector<32x256xf32>
    %c256_382 = arith.constant 256 : index
    %c0_383 = arith.constant 0 : index
    %469 = vector.load %arg12[%c256_382, %c0_383] : memref<288x256xf32, #tpu.memory_space<vmem>>, vector<32x256xf32>
    tpu.vector_store %arg12[%c256_382, %c0_383], %468 {strides = array<i32>} : memref<288x256xf32, #tpu.memory_space<vmem>>, vector<32x256xf32>,
    %c0_384 = arith.constant 0 : index
    %c0_385 = arith.constant 0 : index
    %470 = vector.load %arg12[%c0_384, %c0_385] : memref<288x256xf32, #tpu.memory_space<vmem>>, vector<288x256xf32>
    %471 = arith.truncf %470 : vector<288x256xf32> to vector<288x256xbf16>
    %cst_386 = arith.constant dense<0.000000e+00> : vector<1x256xf32>
    %472 = tpu.matmul %419, %471, %cst_386 {dimension_numbers = #tpu.dot_dimension_numbers<[1], [0], [0], [1], [0, 0, 1, 1], [], []>} : vector<1x288xbf16>, vector<288x256xbf16>, vector<1x256xf32> -> vector<1x256xf32>
    %473 = vector.broadcast %420 : vector<1x1xf32> to vector<1x256xf32>
    %474 = arith.addf %472, %473 : vector<1x256xf32>
    %475 = vector.shape_cast %474 : vector<1x256xf32> to vector<1x1x256xf32>
    %c0_387 = arith.constant 0 : index
    %c0_388 = arith.constant 0 : index
    %c0_389 = arith.constant 0 : index
    %476 = vector.load %arg11[%c0_387, %c0_388, %c0_389] : memref<1x1x256xf32, #tpu.memory_space<vmem>>, vector<1x1x256xf32>
    tpu.vector_store %arg11[%c0_387, %c0_388, %c0_389], %475 {strides = array<i32>} : memref<1x1x256xf32, #tpu.memory_space<vmem>>, vector<1x1x256xf32>,
    return
  }
  func.func @transform_0(%arg0: i32) -> (i32, i32, i32) {
    %c0_i32 = arith.constant 0 : i32
    %c0_i32_0 = arith.constant 0 : i32
    %c0_i32_1 = arith.constant 0 : i32
    return %arg0, %c0_i32, %c0_i32_0 : i32, i32, i32
  }
  func.func @transform_1(%arg0: i32) -> (i32, i32, i32) {
    %c0_i32 = arith.constant 0 : i32
    %c0_i32_0 = arith.constant 0 : i32
    %c0_i32_1 = arith.constant 0 : i32
    %c0_i32_2 = arith.constant 0 : i32
    return %c0_i32, %c0_i32_0, %c0_i32_1 : i32, i32, i32
  }
  func.func @transform_2(%arg0: i32) -> (i32, i32) {
    %c0_i32 = arith.constant 0 : i32
    %c0_i32_0 = arith.constant 0 : i32
    %c0_i32_1 = arith.constant 0 : i32
    return %c0_i32, %c0_i32_0 : i32, i32
  }
  func.func @transform_3(%arg0: i32) -> (i32, i32) {
    %c0_i32 = arith.constant 0 : i32
    %c0_i32_0 = arith.constant 0 : i32
    %c0_i32_1 = arith.constant 0 : i32
    return %c0_i32, %c0_i32_0 : i32, i32
  }
  func.func @transform_4(%arg0: i32) -> (i32, i32, i32) {
    %c0_i32 = arith.constant 0 : i32
    %c0_i32_0 = arith.constant 0 : i32
    %c0_i32_1 = arith.constant 0 : i32
    %c0_i32_2 = arith.constant 0 : i32
    return %c0_i32, %c0_i32_0, %c0_i32_1 : i32, i32, i32
  }
  func.func @transform_5(%arg0: i32) -> (i32, i32, i32) {
    %c0_i32 = arith.constant 0 : i32
    %c0_i32_0 = arith.constant 0 : i32
    %c0_i32_1 = arith.constant 0 : i32
    %c0_i32_2 = arith.constant 0 : i32
    return %c0_i32, %c0_i32_0, %c0_i32_1 : i32, i32, i32
  }
  func.func @transform_6(%arg0: i32) -> (i32, i32, i32) {
    %c0_i32 = arith.constant 0 : i32
    %c0_i32_0 = arith.constant 0 : i32
    %c0_i32_1 = arith.constant 0 : i32
    %c0_i32_2 = arith.constant 0 : i32
    return %c0_i32, %c0_i32_0, %c0_i32_1 : i32, i32, i32
  }
  func.func @transform_7(%arg0: i32) -> (i32, i32, i32) {
    %c0_i32 = arith.constant 0 : i32
    %c0_i32_0 = arith.constant 0 : i32
    %c0_i32_1 = arith.constant 0 : i32
    %c0_i32_2 = arith.constant 0 : i32
    return %c0_i32, %c0_i32_0, %c0_i32_1 : i32, i32, i32
  }
  func.func @transform_8(%arg0: i32) -> (i32, i32) {
    %c0_i32 = arith.constant 0 : i32
    %c0_i32_0 = arith.constant 0 : i32
    %c0_i32_1 = arith.constant 0 : i32
    return %c0_i32, %c0_i32_0 : i32, i32
  }
  func.func @transform_9(%arg0: i32) -> (i32, i32) {
    %c0_i32 = arith.constant 0 : i32
    %c0_i32_0 = arith.constant 0 : i32
    %c0_i32_1 = arith.constant 0 : i32
    return %c0_i32, %c0_i32_0 : i32, i32
  }
  func.func @transform_10(%arg0: i32) -> (i32, i32, i32) {
    %c0_i32 = arith.constant 0 : i32
    %c0_i32_0 = arith.constant 0 : i32
    %c0_i32_1 = arith.constant 0 : i32
    return %arg0, %c0_i32, %c0_i32_0 : i32, i32, i32
  }
}

</mosaic_0001>

<llo_original>
// kernel: tpu_custom_call.1
$region0: #{tpu_custom_call.1}
  #allocation0 [shape = 'u32[]', space=smem, size = 0x4, offset = 0x4, fixed_abs, tag = 'smem constant byte address 0x4 - core index']
  #allocation1 [shape = 'u32[72,128]{1,0:T(1,128)}', space=vmem, size = 0x9000, scoped, tag = 'internal scratch']
  #allocation2 [shape = 'f32[288,256]{1,0:T(8,128)}', space=vmem, size = 0x48000, scoped, tag = 'scratch operand']
  #allocation3 [shape = 'f32[1,1]{1,0:T(1,128)S(1)}', space=vmem, size = 0x200, scoped, tag = 'scoped memory for tpu_custom_call.1']
  %s0 = inlined_call_operand.vmem [shape: f32[2,1,256], index: 0, kind: input, shape index: {}]
  %s1 = inlined_call_operand.vmem [shape: f32[9,1,256], index: 1, kind: input, shape index: {}]
  %s2 = inlined_call_operand.vmem [shape: bf16[32,9], index: 2, kind: input, shape index: {}]
  %s3 = inlined_call_operand.vmem [shape: f32[32,1], index: 3, kind: input, shape index: {}]
  %s4 = inlined_call_operand.hbm [shape: bf16[4,32,288], index: 4, kind: input, shape index: {}]
  %s5 = inlined_call_operand.vmem [shape: f32[4,32,1], index: 5, kind: input, shape index: {}]
  %s6 = inlined_call_operand.hbm [shape: f32[5,32,256], index: 6, kind: input, shape index: {}]
  %s7 = inlined_call_operand.hbm [shape: f32[5,32,256], index: 7, kind: input, shape index: {}]
  %s8 = inlined_call_operand.vmem [shape: bf16[1,288], index: 8, kind: input, shape index: {}]
  %s9 = inlined_call_operand.<no memory space> [shape: f32[1,1], index: 9, kind: input, shape index: {}]
  %s10 = inlined_call_operand.hbm [shape: f32[2,1,256], index: 10, kind: output, shape index: {}]
  %s11 = sld [smem:[#allocation0]]
  $region85: #{tpu_custom_call.1} parent=0
    _
  %s13 = ssub.s32 1, %s11
  %s14 = scalar_select 0, %s13, %s11
  %v15 = vstv %s9
  %16 = vst [vmem:[#allocation3] sm:$0x1] %v15
  $region1: #{tpu_custom_call.1} parent=0
    #allocation4 [shape = 'u8[98304]{0}', space=vmem, size = 0x18000, scoped, tag = 'input window, operand 4, single buffered']
    #allocation5 [shape = 's32[2]{0}', space=sflag, size = 0x8, scoped, tag = 'scoped memory for tpu_custom_call.1']
    #allocation6 [shape = 's32[2]{0}', space=sflag, size = 0x8, scoped, tag = 'scoped memory for tpu_custom_call.1']
    #allocation7 [shape = 'u8[163840]{0}', space=vmem, size = 0x28000, scoped, tag = 'input window, operand 6, single buffered']
    #allocation8 [shape = 's32[1]{0}', space=sflag, size = 0x4, scoped, tag = 'scoped memory for tpu_custom_call.1']
    #allocation9 [shape = 'u8[163840]{0}', space=vmem, size = 0x28000, scoped, tag = 'input window, operand 7, single buffered']
    #allocation10 [shape = 'u8[2048]{0}', space=vmem, size = 0x800, scoped, tag = 'output window, operand 0']
    %17 = vsyncpa [#allocation5], 0
    %18 = vsyncpa [#allocation8], 0
    %19 = vsyncpa [#allocation6], 0
    %s20 = scalar_lea.sflag [#allocation6], 1
    %21 = vsyncpa %s20, 0
    loop: start=0, step=1, limit=4
    $region2: #{tpu_custom_call.1} parent=1 // loop_pre_header
      _
    $region3: #{tpu_custom_call.1} parent=1 // loop_header
      %s23 = sphi 0, %s27
      %p24 = scmp.ge.s32.totalorder %s23, 4
      %s33 = sphi 0, %s35
      %s36 = sphi 0, %s33
      %s37 = sphi 0, %s36
      %s53 = sphi 0, %s37
      %s57 = sphi 0, %s57
      %s59 = sphi 0, %s57
      %s60 = sphi 0, %s59
      %s74 = sphi 0, %s60
      %s78 = sphi 0, %s78
      %s80 = sphi 0, %s78
      %s81 = sphi 0, %s80
      %s95 = sphi 0, %s81
      %s99 = sphi 0, %s99
      %s101 = sphi 0, %s99
      %s102 = sphi 0, %s101
      %s116 = sphi 0, %s102
      %s120 = sphi 0, %s120
      %s122 = sphi 0, %s120
      %s123 = sphi 0, %s122
      %s137 = sphi 0, %s123
      %s141 = sphi 0, %s141
      %s143 = sphi 0, %s141
      %s144 = sphi 0, %s143
      %s158 = sphi 0, %s144
      %s162 = sphi 0, %s162
      %s164 = sphi 0, %s162
      %s165 = sphi 0, %s164
      %s179 = sphi 0, %s165
      %s183 = sphi 0, %s183
      %s185 = sphi 0, %s183
      %s186 = sphi 0, %s185
      %s200 = sphi 0, %s186
      %s204 = sphi 0, %s204
      %s206 = sphi 0, %s204
      %s207 = sphi 0, %s206
      %s221 = sphi 0, %s207
      %s225 = sphi 0, %s225
      %s227 = sphi 0, %s225
      %s228 = sphi 0, %s227
      %s242 = sphi 0, %s228
      %s248 = sphi 0, %s250
      %s251 = sphi 0, %s248
      %s252 = sphi 0, %s251
      %s268 = sphi 0, %s252
    $region4: #{tpu_custom_call.1} parent=1 // loop_header_branch
      %26 = sbr.rel (%p24) target = $region8
    $region5: #{tpu_custom_call.1} parent=1 // loop_body
      %s28 = ssub.s32 %s23, 1
      %s29 = ssub.s32 %s23, 2
      %s30 = sadd.s32 %s23, 1
      %s31 = ssub.s32 %s23, %s30
      %p32 = scmp.eq.s32.totalorder %s31, 0
      %s34 = sadd.s32 %s33, 1
      %s35 = scalar_select %p32, %s33, %s34
      %p38 = pneg %p32
      %p39 = scmp.eq.s32.totalorder %s23, 1
      %p40 = por %p38, %p39
      %p41 = scmp.ne.s32.totalorder %s33, %s36
      %p42 = scmp.eq.s32.totalorder %s23, 0
      %p43 = por %p41, %p42
      %p44 = scmp.ne.s32.totalorder %s33, %s36
      %p45 = scmp.eq.s32.totalorder %s28, 1
      %p46 = por %p44, %p45
      %p47 = scmp.ne.s32.totalorder %s36, %s37
      %p48 = scmp.eq.s32.totalorder %s28, 0
      %p49 = por %p47, %p48
      %p50 = scmp.ne.s32.totalorder %s36, %s37
      %p51 = scmp.eq.s32.totalorder %s29, 1
      %p52 = por %p50, %p51
      %p54 = scmp.ne.s32.totalorder %s37, %s53
      %p55 = scmp.eq.s32.totalorder %s29, 0
      %p56 = por %p54, %p55
      %s58 = sadd.s32 %s57, 1
      %p61 = scmp.eq.s32.totalorder %s23, 1
      %p62 = scmp.ne.s32.totalorder %s57, %s59
      %p63 = scmp.eq.s32.totalorder %s23, 0
      %p64 = por %p62, %p63
      %p65 = scmp.ne.s32.totalorder %s57, %s59
      %p66 = scmp.eq.s32.totalorder %s28, 1
      %p67 = por %p65, %p66
      %p68 = scmp.ne.s32.totalorder %s59, %s60
      %p69 = scmp.eq.s32.totalorder %s28, 0
      %p70 = por %p68, %p69
      %p71 = scmp.ne.s32.totalorder %s59, %s60
      %p72 = scmp.eq.s32.totalorder %s29, 1
      %p73 = por %p71, %p72
      %p75 = scmp.ne.s32.totalorder %s60, %s74
      %p76 = scmp.eq.s32.totalorder %s29, 0
      %p77 = por %p75, %p76
      %s79 = sadd.s32 %s78, 1
      %p82 = scmp.eq.s32.totalorder %s23, 1
      %p83 = scmp.ne.s32.totalorder %s78, %s80
      %p84 = scmp.eq.s32.totalorder %s23, 0
      %p85 = por %p83, %p84
      %p86 = scmp.ne.s32.totalorder %s78, %s80
      %p87 = scmp.eq.s32.totalorder %s28, 1
      %p88 = por %p86, %p87
      %p89 = scmp.ne.s32.totalorder %s80, %s81
      %p90 = scmp.eq.s32.totalorder %s28, 0
      %p91 = por %p89, %p90
      %p92 = scmp.ne.s32.totalorder %s80, %s81
      %p93 = scmp.eq.s32.totalorder %s29, 1
      %p94 = por %p92, %p93
      %p96 = scmp.ne.s32.totalorder %s81, %s95
      %p97 = scmp.eq.s32.totalorder %s29, 0
      %p98 = por %p96, %p97
      %s100 = sadd.s32 %s99, 1
      %p103 = scmp.eq.s32.totalorder %s23, 1
      %p104 = scmp.ne.s32.totalorder %s99, %s101
      %p105 = scmp.eq.s32.totalorder %s23, 0
      %p106 = por %p104, %p105
      %p107 = scmp.ne.s32.totalorder %s99, %s101
      %p108 = scmp.eq.s32.totalorder %s28, 1
      %p109 = por %p107, %p108
      %p110 = scmp.ne.s32.totalorder %s101, %s102
      %p111 = scmp.eq.s32.totalorder %s28, 0
      %p112 = por %p110, %p111
      %p113 = scmp.ne.s32.totalorder %s101, %s102
      %p114 = scmp.eq.s32.totalorder %s29, 1
      %p115 = por %p113, %p114
      %p117 = scmp.ne.s32.totalorder %s102, %s116
      %p118 = scmp.eq.s32.totalorder %s29, 0
      %p119 = por %p117, %p118
      %s121 = sadd.s32 %s120, 1
      %p124 = scmp.eq.s32.totalorder %s23, 1
      %p125 = scmp.ne.s32.totalorder %s120, %s122
      %p126 = scmp.eq.s32.totalorder %s23, 0
      %p127 = por %p125, %p126
      %p128 = scmp.ne.s32.totalorder %s120, %s122
      %p129 = scmp.eq.s32.totalorder %s28, 1
      %p130 = por %p128, %p129
      %p131 = scmp.ne.s32.totalorder %s122, %s123
      %p132 = scmp.eq.s32.totalorder %s28, 0
      %p133 = por %p131, %p132
      %p134 = scmp.ne.s32.totalorder %s122, %s123
      %p135 = scmp.eq.s32.totalorder %s29, 1
      %p136 = por %p134, %p135
      %p138 = scmp.ne.s32.totalorder %s123, %s137
      %p139 = scmp.eq.s32.totalorder %s29, 0
      %p140 = por %p138, %p139
      %s142 = sadd.s32 %s141, 1
      %p145 = scmp.eq.s32.totalorder %s23, 1
      %p146 = scmp.ne.s32.totalorder %s141, %s143
      %p147 = scmp.eq.s32.totalorder %s23, 0
      %p148 = por %p146, %p147
      %p149 = scmp.ne.s32.totalorder %s141, %s143
      %p150 = scmp.eq.s32.totalorder %s28, 1
      %p151 = por %p149, %p150
      %p152 = scmp.ne.s32.totalorder %s143, %s144
      %p153 = scmp.eq.s32.totalorder %s28, 0
      %p154 = por %p152, %p153
      %p155 = scmp.ne.s32.totalorder %s143, %s144
      %p156 = scmp.eq.s32.totalorder %s29, 1
      %p157 = por %p155, %p156
      %p159 = scmp.ne.s32.totalorder %s144, %s158
      %p160 = scmp.eq.s32.totalorder %s29, 0
      %p161 = por %p159, %p160
      %s163 = sadd.s32 %s162, 1
      %p166 = scmp.eq.s32.totalorder %s23, 1
      %p167 = scmp.ne.s32.totalorder %s162, %s164
      %p168 = scmp.eq.s32.totalorder %s23, 0
      %p169 = por %p167, %p168
      %p170 = scmp.ne.s32.totalorder %s162, %s164
      %p171 = scmp.eq.s32.totalorder %s28, 1
      %p172 = por %p170, %p171
      %p173 = scmp.ne.s32.totalorder %s164, %s165
      %p174 = scmp.eq.s32.totalorder %s28, 0
      %p175 = por %p173, %p174
      %p176 = scmp.ne.s32.totalorder %s164, %s165
      %p177 = scmp.eq.s32.totalorder %s29, 1
      %p178 = por %p176, %p177
      %p180 = scmp.ne.s32.totalorder %s165, %s179
      %p181 = scmp.eq.s32.totalorder %s29, 0
      %p182 = por %p180, %p181
      %s184 = sadd.s32 %s183, 1
      %p187 = scmp.eq.s32.totalorder %s23, 1
      %p188 = scmp.ne.s32.totalorder %s183, %s185
      %p189 = scmp.eq.s32.totalorder %s23, 0
      %p190 = por %p188, %p189
      %p191 = scmp.ne.s32.totalorder %s183, %s185
      %p192 = scmp.eq.s32.totalorder %s28, 1
      %p193 = por %p191, %p192
      %p194 = scmp.ne.s32.totalorder %s185, %s186
      %p195 = scmp.eq.s32.totalorder %s28, 0
      %p196 = por %p194, %p195
      %p197 = scmp.ne.s32.totalorder %s185, %s186
      %p198 = scmp.eq.s32.totalorder %s29, 1
      %p199 = por %p197, %p198
      %p201 = scmp.ne.s32.totalorder %s186, %s200
      %p202 = scmp.eq.s32.totalorder %s29, 0
      %p203 = por %p201, %p202
      %s205 = sadd.s32 %s204, 1
      %p208 = scmp.eq.s32.totalorder %s23, 1
      %p209 = scmp.ne.s32.totalorder %s204, %s206
      %p210 = scmp.eq.s32.totalorder %s23, 0
      %p211 = por %p209, %p210
      %p212 = scmp.ne.s32.totalorder %s204, %s206
      %p213 = scmp.eq.s32.totalorder %s28, 1
      %p214 = por %p212, %p213
      %p215 = scmp.ne.s32.totalorder %s206, %s207
      %p216 = scmp.eq.s32.totalorder %s28, 0
      %p217 = por %p215, %p216
      %p218 = scmp.ne.s32.totalorder %s206, %s207
      %p219 = scmp.eq.s32.totalorder %s29, 1
      %p220 = por %p218, %p219
      %p222 = scmp.ne.s32.totalorder %s207, %s221
      %p223 = scmp.eq.s32.totalorder %s29, 0
      %p224 = por %p222, %p223
      %s226 = sadd.s32 %s225, 1
      %p229 = scmp.eq.s32.totalorder %s23, 1
      %p230 = scmp.ne.s32.totalorder %s225, %s227
      %p231 = scmp.eq.s32.totalorder %s23, 0
      %p232 = por %p230, %p231
      %p233 = scmp.ne.s32.totalorder %s225, %s227
      %p234 = scmp.eq.s32.totalorder %s28, 1
      %p235 = por %p233, %p234
      %p236 = scmp.ne.s32.totalorder %s227, %s228
      %p237 = scmp.eq.s32.totalorder %s28, 0
      %p238 = por %p236, %p237
      %p239 = scmp.ne.s32.totalorder %s227, %s228
      %p240 = scmp.eq.s32.totalorder %s29, 1
      %p241 = por %p239, %p240
      %p243 = scmp.ne.s32.totalorder %s228, %s242
      %p244 = scmp.eq.s32.totalorder %s29, 0
      %p245 = por %p243, %p244
      %s246 = ssub.s32 %s23, %s30
      %p247 = scmp.eq.s32.totalorder %s246, 0
      %s249 = sadd.s32 %s248, 1
      %s250 = scalar_select %p247, %s248, %s249
      %p253 = pneg %p247
      %p254 = scmp.eq.s32.totalorder %s23, 1
      %p255 = por %p253, %p254
      %p256 = scmp.ne.s32.totalorder %s248, %s251
      %p257 = scmp.eq.s32.totalorder %s23, 0
      %p258 = por %p256, %p257
      %p259 = scmp.ne.s32.totalorder %s248, %s251
      %p260 = scmp.eq.s32.totalorder %s28, 1
      %p261 = por %p259, %p260
      %p262 = scmp.ne.s32.totalorder %s251, %s252
      %p263 = scmp.eq.s32.totalorder %s28, 0
      %p264 = por %p262, %p263
      %p265 = scmp.ne.s32.totalorder %s251, %s252
      %p266 = scmp.eq.s32.totalorder %s29, 1
      %p267 = por %p265, %p266
      %p269 = scmp.ne.s32.totalorder %s252, %s268
      %p270 = scmp.eq.s32.totalorder %s29, 0
      %p271 = por %p269, %p270
      %p272 = scmp.le.s32.totalorder 1, %s23
      %p273 = scmp.lt.s32.totalorder %s23, 3
      %p274 = pnand %p272, %p273
      %p275 = pneg %p274
      // Predicated region
      $region9: #{tpu_custom_call.1} parent=5 // pred_check
        _
      $region10: #{tpu_custom_call.1} parent=5 // pred_check_branch
        %277 = sbr.rel (%p274) target = $region12
      $region11: #{tpu_custom_call.1} parent=5 // pred_region
        %s278 = ssub.s32 %s23, 1
        // Predicated region
        $region13: #{tpu_custom_call.1} parent=11 // pred_check
          %p279 = pneg %p70
        $region14: #{tpu_custom_call.1} parent=11 // pred_check_branch
          %281 = sbr.rel (%p279) target = $region16
        $region15: #{tpu_custom_call.1} parent=11 // pred_region
          _
        $region16: #{tpu_custom_call.1} parent=11 // pred_fallthru
          _
        // Predicated region
        $region17: #{tpu_custom_call.1} parent=11 // pred_check
          %p282 = pneg %p91
        $region18: #{tpu_custom_call.1} parent=11 // pred_check_branch
          %284 = sbr.rel (%p282) target = $region20
        $region19: #{tpu_custom_call.1} parent=11 // pred_region
          _
        $region20: #{tpu_custom_call.1} parent=11 // pred_fallthru
          _
        // Predicated region
        $region21: #{tpu_custom_call.1} parent=11 // pred_check
          %p285 = pneg %p112
        $region22: #{tpu_custom_call.1} parent=11 // pred_check_branch
          %287 = sbr.rel (%p285) target = $region24
        $region23: #{tpu_custom_call.1} parent=11 // pred_region
          _
        $region24: #{tpu_custom_call.1} parent=11 // pred_fallthru
          _
        // Predicated region
        $region25: #{tpu_custom_call.1} parent=11 // pred_check
          %p288 = pneg %p133
        $region26: #{tpu_custom_call.1} parent=11 // pred_check_branch
          %290 = sbr.rel (%p288) target = $region28
        $region27: #{tpu_custom_call.1} parent=11 // pred_region
          %292 = vsyncadd [#allocation5], 0
          %s293 = sshll.u32 %s4, 4
          %s294 = int_to_ptr.hbm [resolvable:$true] %s293
          %s295 = sshll.u32 [#allocation4], 4
          %s296 = int_to_ptr.vmem [resolvable:$true] %s295
          %301 = dma.hbm_to_vmem [thread:$0]  %s294, 3072, %s296, [#allocation5], 192, 192, 12
        $region28: #{tpu_custom_call.1} parent=11 // pred_fallthru
          _
        // Predicated region
        $region29: #{tpu_custom_call.1} parent=11 // pred_check
          %p302 = pneg %p154
        $region30: #{tpu_custom_call.1} parent=11 // pred_check_branch
          %304 = sbr.rel (%p302) target = $region32
        $region31: #{tpu_custom_call.1} parent=11 // pred_region
          _
        $region32: #{tpu_custom_call.1} parent=11 // pred_fallthru
          _
        // Predicated region
        $region33: #{tpu_custom_call.1} parent=11 // pred_check
          %p305 = pneg %p175
        $region34: #{tpu_custom_call.1} parent=11 // pred_check_branch
          %307 = sbr.rel (%p305) target = $region36
        $region35: #{tpu_custom_call.1} parent=11 // pred_region
          %309 = vsyncadd [#allocation8], 0
          %s310 = sshll.u32 %s6, 4
          %s311 = int_to_ptr.hbm [resolvable:$true] %s310
          %s312 = sshll.u32 [#allocation7], 4
          %s313 = int_to_ptr.vmem [resolvable:$true] %s312
          %318 = dma.hbm_to_vmem [thread:$0]  %s311, 5120, %s313, [#allocation8], 256, 256, 16
        $region36: #{tpu_custom_call.1} parent=11 // pred_fallthru
          _
        // Predicated region
        $region37: #{tpu_custom_call.1} parent=11 // pred_check
          %p319 = pneg %p196
        $region38: #{tpu_custom_call.1} parent=11 // pred_check_branch
          %321 = sbr.rel (%p319) target = $region40
        $region39: #{tpu_custom_call.1} parent=11 // pred_region
          %323 = vsyncadd [#allocation8], 0
          %s324 = sshll.u32 %s7, 4
          %s325 = int_to_ptr.hbm [resolvable:$true] %s324
          %s326 = sshll.u32 [#allocation9], 4
          %s327 = int_to_ptr.vmem [resolvable:$true] %s326
          %332 = dma.hbm_to_vmem [thread:$0]  %s325, 5120, %s327, [#allocation8], 256, 256, 16
        $region40: #{tpu_custom_call.1} parent=11 // pred_fallthru
          _
        // Predicated region
        $region41: #{tpu_custom_call.1} parent=11 // pred_check
          %p333 = pneg %p217
        $region42: #{tpu_custom_call.1} parent=11 // pred_check_branch
          %335 = sbr.rel (%p333) target = $region44
        $region43: #{tpu_custom_call.1} parent=11 // pred_region
          _
        $region44: #{tpu_custom_call.1} parent=11 // pred_fallthru
          _
        // Predicated region
        $region45: #{tpu_custom_call.1} parent=11 // pred_check
          %p336 = pneg %p238
        $region46: #{tpu_custom_call.1} parent=11 // pred_check_branch
          %338 = sbr.rel (%p336) target = $region48
        $region47: #{tpu_custom_call.1} parent=11 // pred_region
          _
        $region48: #{tpu_custom_call.1} parent=11 // pred_fallthru
          _
      $region12: #{tpu_custom_call.1} parent=5 // pred_fallthru
        _
      %p339 = scmp.lt.s32.totalorder %s23, 2
      // Predicated region
      $region49: #{tpu_custom_call.1} parent=5 // pred_check
        %p340 = pneg %p339
      $region50: #{tpu_custom_call.1} parent=5 // pred_check_branch
        %342 = sbr.rel (%p340) target = $region52
      $region51: #{tpu_custom_call.1} parent=5 // pred_region
        // Predicated region
        $region53: #{tpu_custom_call.1} parent=51 // pred_check
          %p343 = pneg %p43
        $region54: #{tpu_custom_call.1} parent=51 // pred_check_branch
          %345 = sbr.rel (%p343) target = $region56
        $region55: #{tpu_custom_call.1} parent=51 // pred_region
          %p346 = scmp.lt.s32.totalorder %s23, 1
          %s347 = scalar_select %p346, %s23, 1
          %s348 = smul.addr %s347, 2
          %s349 = scalar_lea.vmem %s0, %s348
        $region56: #{tpu_custom_call.1} parent=51 // pred_fallthru
          _
      $region52: #{tpu_custom_call.1} parent=5 // pred_fallthru
        _
      %p350 = scmp.le.s32.totalorder 1, %s23
      %p351 = scmp.lt.s32.totalorder %s23, 3
      %p352 = pnand %p350, %p351
      %p353 = pneg %p352
      // Predicated region
      $region57: #{tpu_custom_call.1} parent=5 // pred_check
        _
      $region58: #{tpu_custom_call.1} parent=5 // pred_check_branch
        %355 = sbr.rel (%p352) target = $region60
      $region59: #{tpu_custom_call.1} parent=5 // pred_region
        %s356 = ssub.s32 %s23, 1
        // Predicated region
        $region61: #{tpu_custom_call.1} parent=59 // pred_check
          %p357 = pneg %p133
        $region62: #{tpu_custom_call.1} parent=59 // pred_check_branch
          %359 = sbr.rel (%p357) target = $region64
        $region63: #{tpu_custom_call.1} parent=59 // pred_region
          %361 = dma.done [#allocation5], 3072
        $region64: #{tpu_custom_call.1} parent=59 // pred_fallthru
          _
        // Predicated region
        $region65: #{tpu_custom_call.1} parent=59 // pred_check
          %p362 = pneg %p175
        $region66: #{tpu_custom_call.1} parent=59 // pred_check_branch
          %364 = sbr.rel (%p362) target = $region68
        $region67: #{tpu_custom_call.1} parent=59 // pred_region
          %366 = dma.done [#allocation8], 5120
        $region68: #{tpu_custom_call.1} parent=59 // pred_fallthru
          _
        // Predicated region
        $region69: #{tpu_custom_call.1} parent=59 // pred_check
          %p367 = pneg %p196
        $region70: #{tpu_custom_call.1} parent=59 // pred_check_branch
          %369 = sbr.rel (%p367) target = $region72
        $region71: #{tpu_custom_call.1} parent=59 // pred_region
          %371 = dma.done [#allocation8], 5120
        $region72: #{tpu_custom_call.1} parent=59 // pred_fallthru
          _
        %p372 = scmp.lt.s32.totalorder %s28, 1
        %s373 = scalar_select %p372, %s28, 1
        %s374 = smul.addr %s373, 2
        %s375 = scalar_lea.vmem %s0, %s374
        %p376 = pneg %p49
        %p377 = pneg %p46
        %p378 = pneg %p70
        %p379 = pneg %p67
        %p380 = pneg %p91
        %p381 = pneg %p88
        %p382 = pneg %p112
        %p383 = pneg %p109
        %p384 = pneg %p133
        %p385 = pneg %p130
        %p386 = pneg %p154
        %p387 = pneg %p151
        %p388 = pneg %p175
        %p389 = pneg %p172
        %p390 = pneg %p196
        %p391 = pneg %p193
        %p392 = pneg %p217
        %p393 = pneg %p214
        %p394 = pneg %p238
        %p395 = pneg %p235
        %p396 = pneg %p264
        %p397 = pneg %p261
        %s398 = sand.u32 %s251, 1
        %s399 = scalar_lea.sflag [#allocation6], %s398
        %s400 = sand.u32 %s251, 1
        %s401 = smul.addr %s400, 2
        %s402 = scalar_lea.vmem [#allocation10], %s401
        %p403 = scmp.lt.s32.totalorder %s28, 1
        %s404 = scalar_select %p403, %s28, 1
        %s405 = smul.addr %s404, 2
        %s406 = scalar_lea.vmem %s0, %s405
        %v408 = vld [vmem:[%s406] sm:$0x3]
        %v409 = vld [vmem:[%s2] sm:$0xf]
        %v410 = vld [vmem:[%s2 + $0x4] sm:$0xf]
        %v411 = vld [vmem:[%s2 + $0x8] sm:$0xf]
        %v412 = vld [vmem:[%s2 + $0xc] sm:$0xf]
        %v413 = vld [vmem:[%s3] sm:$0xff]
        %v414 = vld [vmem:[%s3 + $0x8] sm:$0xff]
        %v415 = vld [vmem:[%s3 + $0x10] sm:$0xff]
        %v416 = vld [vmem:[%s3 + $0x18] sm:$0xff]
        %v418 = vperm.slane %v408, 0
        %v419 = vperm.slane %v408, 1
        %422 = vrot.lane.b32.xlu0 %v418, 17
        %v423 = vpop.permute.xlu0 %422
        %424 = vrot.lane.b32.xlu0 %v419, 17
        %v425 = vpop.permute.xlu0 %424
        %v426 = vlaneseq
        %v427 = vand.u32 %v426, 127
        %vm428 = vcmp.lt.s32.totalorder %v427, 17
        %v429 = vsel %vm428, %v423, %v425
        %v430 = vsel %vm428, %v425, %v423
        %v431 = vld [vmem:[%s1] sm:$0x3]
        %v433 = vperm.slane %v431, 0
        %v434 = vperm.slane %v431, 1
        %v437 = vmul.f32 %v430, %v433
        %v438 = vmul.f32 %v429, %v434
        %v441 = vrot.slane %v438, 7
        %vm442 = vcmask 1040384
        %v443 = vsel %vm442, %v437, %v441
        %v445 = vlaneseq
        %vm446 = vcmp.ge.s32.totalorder %v445, 0
        %vm447 = vcmp.lt.s32.totalorder %v445, 256
        %vm448 = vmand %vm446, %vm447
        %449 = vst.msk [vmem:[#allocation2] ss:$8 sm:$0x3] %vm448, %v443
        %450 = vst.msk [vmem:[#allocation2] ss:$8 sm:$0x0] %vm448, %v443
        %451 = vrot.lane.b32.xlu0 %v418, 16
        %v452 = vpop.permute.xlu0 %451
        %453 = vrot.lane.b32.xlu0 %v419, 16
        %v454 = vpop.permute.xlu0 %453
        %vm455 = vcmp.lt.s32.totalorder %v427, 16
        %v456 = vsel %vm455, %v452, %v454
        %v457 = vsel %vm455, %v454, %v452
        %s458 = scalar_lea.vmem %s1, 2
        %v459 = vld [vmem:[%s458] sm:$0x3]
        %v461 = vperm.slane %v459, 0
        %v462 = vperm.slane %v459, 1
        %v465 = vmul.f32 %v457, %v461
        %v466 = vmul.f32 %v456, %v462
        %v469 = vrot.slane %v466, 7
        %v470 = vsel %vm442, %v465, %v469
        %s472 = scalar_lea.vmem [#allocation2], 1
        %473 = vst.msk [vmem:[%s472] ss:$8 sm:$0x3] %vm448, %v470
        %474 = vst.msk [vmem:[%s472] ss:$8 sm:$0x0] %vm448, %v470
        %475 = vrot.lane.b32.xlu0 %v418, 15
        %v476 = vpop.permute.xlu0 %475
        %477 = vrot.lane.b32.xlu0 %v419, 15
        %v478 = vpop.permute.xlu0 %477
        %vm479 = vcmp.lt.s32.totalorder %v427, 15
        %v480 = vsel %vm479, %v476, %v478
        %v481 = vsel %vm479, %v478, %v476
        %s482 = scalar_lea.vmem %s1, 4
        %v483 = vld [vmem:[%s482] sm:$0x3]
        %v485 = vperm.slane %v483, 0
        %v486 = vperm.slane %v483, 1
        %v489 = vmul.f32 %v481, %v485
        %v490 = vmul.f32 %v480, %v486
        %v493 = vrot.slane %v490, 7
        %v494 = vsel %vm442, %v489, %v493
        %s496 = scalar_lea.vmem [#allocation2], 2
        %497 = vst.msk [vmem:[%s496] ss:$8 sm:$0x3] %vm448, %v494
        %498 = vst.msk [vmem:[%s496] ss:$8 sm:$0x0] %vm448, %v494
        %499 = vrot.lane.b32.xlu0 %v418, 1
        %v500 = vpop.permute.xlu0 %499
        %501 = vrot.lane.b32.xlu0 %v419, 1
        %v502 = vpop.permute.xlu0 %501
        %vm503 = vcmp.lt.s32.totalorder %v427, 1
        %v504 = vsel %vm503, %v500, %v502
        %v505 = vsel %vm503, %v502, %v500
        %s506 = scalar_lea.vmem %s1, 6
        %v507 = vld [vmem:[%s506] sm:$0x3]
        %v509 = vperm.slane %v507, 0
        %v510 = vperm.slane %v507, 1
        %v513 = vmul.f32 %v505, %v509
        %v514 = vmul.f32 %v504, %v510
        %v517 = vrot.slane %v514, 7
        %v518 = vsel %vm442, %v513, %v517
        %s520 = scalar_lea.vmem [#allocation2], 3
        %521 = vst.msk [vmem:[%s520] ss:$8 sm:$0x3] %vm448, %v518
        %522 = vst.msk [vmem:[%s520] ss:$8 sm:$0x0] %vm448, %v518
        %s523 = scalar_lea.vmem [#allocation2], 4
        %524 = vst.msk [vmem:[%s523] ss:$8 sm:$0x3] %vm448, %v408
        %525 = vst.msk [vmem:[%s523] ss:$8 sm:$0x0] %vm448, %v408
        %526 = vrot.lane.b32.xlu0 %v418, 127
        %v527 = vpop.permute.xlu0 %526
        %528 = vrot.lane.b32.xlu0 %v419, 127
        %v529 = vpop.permute.xlu0 %528
        %vm530 = vcmp.lt.s32.totalorder %v427, 127
        %v531 = vsel %vm530, %v527, %v529
        %v532 = vsel %vm530, %v529, %v527
        %s533 = scalar_lea.vmem %s1, 10
        %v534 = vld [vmem:[%s533] sm:$0x3]
        %v536 = vperm.slane %v534, 0
        %v537 = vperm.slane %v534, 1
        %v540 = vmul.f32 %v531, %v536
        %v541 = vmul.f32 %v532, %v537
        %v544 = vrot.slane %v541, 7
        %v545 = vsel %vm442, %v540, %v544
        %s547 = scalar_lea.vmem [#allocation2], 5
        %548 = vst.msk [vmem:[%s547] ss:$8 sm:$0x3] %vm448, %v545
        %549 = vst.msk [vmem:[%s547] ss:$8 sm:$0x0] %vm448, %v545
        %550 = vrot.lane.b32.xlu0 %v418, 113
        %v551 = vpop.permute.xlu0 %550
        %552 = vrot.lane.b32.xlu0 %v419, 113
        %v553 = vpop.permute.xlu0 %552
        %vm554 = vcmp.lt.s32.totalorder %v427, 113
        %v555 = vsel %vm554, %v551, %v553
        %v556 = vsel %vm554, %v553, %v551
        %s557 = scalar_lea.vmem %s1, 12
        %v558 = vld [vmem:[%s557] sm:$0x3]
        %v560 = vperm.slane %v558, 0
        %v561 = vperm.slane %v558, 1
        %v564 = vmul.f32 %v555, %v560
        %v565 = vmul.f32 %v556, %v561
        %v568 = vrot.slane %v565, 7
        %v569 = vsel %vm442, %v564, %v568
        %s571 = scalar_lea.vmem [#allocation2], 6
        %572 = vst.msk [vmem:[%s571] ss:$8 sm:$0x3] %vm448, %v569
        %573 = vst.msk [vmem:[%s571] ss:$8 sm:$0x0] %vm448, %v569
        %574 = vrot.lane.b32.xlu0 %v418, 112
        %v575 = vpop.permute.xlu0 %574
        %576 = vrot.lane.b32.xlu0 %v419, 112
        %v577 = vpop.permute.xlu0 %576
        %vm578 = vcmp.lt.s32.totalorder %v427, 112
        %v579 = vsel %vm578, %v575, %v577
        %v580 = vsel %vm578, %v577, %v575
        %s581 = scalar_lea.vmem %s1, 14
        %v582 = vld [vmem:[%s581] sm:$0x3]
        %v584 = vperm.slane %v582, 0
        %v585 = vperm.slane %v582, 1
        %v588 = vmul.f32 %v579, %v584
        %v589 = vmul.f32 %v580, %v585
        %v592 = vrot.slane %v589, 7
        %v593 = vsel %vm442, %v588, %v592
        %s595 = scalar_lea.vmem [#allocation2], 7
        %596 = vst.msk [vmem:[%s595] ss:$8 sm:$0x3] %vm448, %v593
        %597 = vst.msk [vmem:[%s595] ss:$8 sm:$0x0] %vm448, %v593
        %598 = vrot.lane.b32.xlu0 %v418, 111
        %v599 = vpop.permute.xlu0 %598
        %600 = vrot.lane.b32.xlu0 %v419, 111
        %v601 = vpop.permute.xlu0 %600
        %vm602 = vcmp.lt.s32.totalorder %v427, 111
        %v603 = vsel %vm602, %v599, %v601
        %v604 = vsel %vm602, %v601, %v599
        %s605 = scalar_lea.vmem %s1, 16
        %v606 = vld [vmem:[%s605] sm:$0x3]
        %v608 = vperm.slane %v606, 0
        %v609 = vperm.slane %v606, 1
        %v612 = vmul.f32 %v603, %v608
        %v613 = vmul.f32 %v604, %v609
        %v616 = vrot.slane %v613, 7
        %v617 = vsel %vm442, %v612, %v616
        %s619 = scalar_lea.vmem [#allocation2], 16
        %620 = vst.msk [vmem:[%s619] ss:$8 sm:$0x3] %vm448, %v617
        %621 = vst.msk [vmem:[%s619] ss:$8 sm:$0x0] %vm448, %v617
        %v622 = vld [vmem:[#allocation2] sm:$0xff]
        %v623 = vld [vmem:[#allocation2 + $0x8] sm:$0xff]
        %v624 = vld [vmem:[#allocation2 + $0x10] sm:$0x1]
        %v625 = vld [vmem:[#allocation2 + $0x18] sm:$0x1]
        %v626 = vpack.c.bf16 %v624, %v622
        %v627 = vpack.c.bf16 %v625, %v623
        %629 = vset.pattern.permute.xlu0 0
        %630 = vperm.xlu0 %629, %v413
        %v631 = vpop.permute.xlu0 %630
        %634 = vset.pattern.permute.xlu0 0
        %635 = vperm.xlu0 %634, %v414
        %v636 = vpop.permute.xlu0 %635
        %639 = vset.pattern.permute.xlu0 0
        %640 = vperm.xlu0 %639, %v415
        %v641 = vpop.permute.xlu0 %640
        %644 = vset.pattern.permute.xlu0 0
        %645 = vperm.xlu0 %644, %v416
        %v646 = vpop.permute.xlu0 %645
        %v652 = vunpack.c.l.b16 %v409
        %v653 = vunpack.c.l.b16 %v410
        %v654 = vunpack.c.l.b16 %v411
        %v655 = vunpack.c.l.b16 %v412
        %v656 = vpack.c.b16 %v653, %v652
        %v657 = vpack.c.b16 %v655, %v654
        %vm658 = vcmask 72704
        %v660 = vsel %vm658, %v656, 0
        %v663 = vsel %vm658, %v657, 0
        %vm665 = vcmask 1043456
        %vm666 = vcmask 1044480
        %v667 = vsel %vm665, 4294967295, 65535
        %v668 = vsel %vm666, %v667, 0
        %v670 = vand.u32 %v626, %v668
        %v673 = vand.u32 %v627, %v668
        %675 = vmatpush.bf16.msra.mxu0 0
        %676 = vmatpush.bf16.msra.mxu0 0
        %677 = vmatpush.bf16.msra.mxu0 0
        %678 = vmatpush.bf16.msra.mxu0 0
        %679 = vmatpush.bf16.msra.mxu0 0
        %680 = vmatpush.bf16.msra.mxu0 0
        %681 = vmatpush.bf16.msra.mxu0 0
        %682 = vmatpush.bf16.msra.mxu0 %v670
        %683 = vmatmul.bf16.gmra.mxu0 %v660
        %v684 = vpop.f32.mrf.mxu0
        %v685 = vadd.f32 %v631, %v684
        %v686 = vpop.f32.mrf.mxu0
        %v687 = vadd.f32 %v636, %v686
        %688 = vmatmul.bf16.gmra.mxu0 %v663
        %v689 = vpop.f32.mrf.mxu0
        %v690 = vadd.f32 %v641, %v689
        %v691 = vpop.f32.mrf.mxu0
        %v692 = vadd.f32 %v646, %v691
        %693 = vdwg.mxu0
        %694 = vmatpush.bf16.msra.mxu0 0
        %695 = vmatpush.bf16.msra.mxu0 0
        %696 = vmatpush.bf16.msra.mxu0 0
        %697 = vmatpush.bf16.msra.mxu0 0
        %698 = vmatpush.bf16.msra.mxu0 0
        %699 = vmatpush.bf16.msra.mxu0 0
        %700 = vmatpush.bf16.msra.mxu0 0
        %701 = vmatpush.bf16.msra.mxu0 %v673
        %702 = vmatmul.bf16.gmra.mxu0 %v660
        %v703 = vpop.f32.mrf.mxu0
        %v704 = vadd.f32 %v631, %v703
        %v705 = vpop.f32.mrf.mxu0
        %v706 = vadd.f32 %v636, %v705
        %707 = vmatmul.bf16.gmra.mxu0 %v663
        %v708 = vpop.f32.mrf.mxu0
        %v709 = vadd.f32 %v641, %v708
        %v710 = vpop.f32.mrf.mxu0
        %v711 = vadd.f32 %v646, %v710
        %712 = vdwg.mxu0
        %v713 = vld [vmem:[#allocation7] sm:$0xff]
        %v714 = vld [vmem:[#allocation7 + $0x8] sm:$0xff]
        %v715 = vld [vmem:[#allocation7 + $0x10] sm:$0xff]
        %v716 = vld [vmem:[#allocation7 + $0x18] sm:$0xff]
        %v717 = vld [vmem:[#allocation7 + $0x20] sm:$0xff]
        %v718 = vld [vmem:[#allocation7 + $0x28] sm:$0xff]
        %v719 = vld [vmem:[#allocation7 + $0x30] sm:$0xff]
        %v720 = vld [vmem:[#allocation7 + $0x38] sm:$0xff]
        %v721 = vld [vmem:[#allocation9] sm:$0xff]
        %v722 = vld [vmem:[#allocation9 + $0x8] sm:$0xff]
        %v723 = vld [vmem:[#allocation9 + $0x10] sm:$0xff]
        %v724 = vld [vmem:[#allocation9 + $0x18] sm:$0xff]
        %v725 = vld [vmem:[#allocation9 + $0x20] sm:$0xff]
        %v726 = vld [vmem:[#allocation9 + $0x28] sm:$0xff]
        %v727 = vld [vmem:[#allocation9 + $0x30] sm:$0xff]
        %v728 = vld [vmem:[#allocation9 + $0x38] sm:$0xff]
        %v729 = vadd.f32 %v685, %v704
        %v730 = vadd.f32 %v729, %v687
        %v731 = vadd.f32 %v730, %v706
        %v732 = vadd.f32 %v731, %v690
        %v733 = vadd.f32 %v732, %v709
        %v734 = vadd.f32 %v733, %v692
        %v735 = vadd.f32 %v734, %v711
        %736 = vadd.xlane.f32.xlu0 %v735
        %v737 = vpop.xlane.xlu0 %736
        %v738 = vrot.slane %v737, 4
        %v739 = vadd.f32 %v737, %v738
        %v740 = vrot.slane %v739, 2
        %v741 = vadd.f32 %v739, %v740
        %v742 = vrot.slane %v741, 1
        %v743 = vadd.f32 %v741, %v742
        %s744 = vtos %v743
        %v745 = vmul.f32 %v685, %v685
        %v746 = vmul.f32 %v704, %v704
        %v747 = vmul.f32 %v687, %v687
        %v748 = vmul.f32 %v706, %v706
        %v749 = vmul.f32 %v690, %v690
        %v750 = vmul.f32 %v709, %v709
        %v751 = vmul.f32 %v692, %v692
        %v752 = vmul.f32 %v711, %v711
        %v753 = vadd.f32 %v745, %v746
        %v754 = vadd.f32 %v753, %v747
        %v755 = vadd.f32 %v754, %v748
        %v756 = vadd.f32 %v755, %v749
        %v757 = vadd.f32 %v756, %v750
        %v758 = vadd.f32 %v757, %v751
        %v759 = vadd.f32 %v758, %v752
        %760 = vadd.xlane.f32.xlu0 %v759
        %v761 = vpop.xlane.xlu0 %760
        %v762 = vrot.slane %v761, 4
        %v763 = vadd.f32 %v761, %v762
        %v764 = vrot.slane %v763, 2
        %v765 = vadd.f32 %v763, %v764
        %v766 = vrot.slane %v765, 1
        %v767 = vadd.f32 %v765, %v766
        %s768 = vtos %v767
        %v769 = vrcp.pop 8192.0
        %v770 = vmul.f32 8192.0, %v769
        %v771 = vsub.f32 1.0, %v770
        %v772 = vmul.f32 %v769, %v771
        %v773 = vadd.f32 %v769, %v772
        %vm774 = vweird.f32 %v769
        %v775 = vsel %vm774, %v769, %v773
        %s776 = vtos %v775
        %s777 = smul.f32 %s744, %s776
        %v778 = vrcp.pop 8192.0
        %v779 = vmul.f32 8192.0, %v778
        %v780 = vsub.f32 1.0, %v779
        %v781 = vmul.f32 %v778, %v780
        %v782 = vadd.f32 %v778, %v781
        %vm783 = vweird.f32 %v778
        %v784 = vsel %vm783, %v778, %v782
        %s785 = vtos %v784
        %s786 = smul.f32 %s768, %s785
        %s787 = smul.f32 %s777, %s777
        %s788 = ssub.f32 %s786, %s787
        %s789 = sadd.f32 %s788, 1e-05
        %v790 = vstv %s789
        %v791 = vrsqrt.pop %v790
        %v792 = vmul.f32 %v791, %v790
        %v793 = vmul.f32 %v792, %v791
        %v794 = vmul.f32 0.5, %v793
        %v795 = vsub.f32 1.5, %v794
        %v796 = vmul.f32 %v791, %v795
        %vm797 = vweird.f32 %v790
        %vm798 = vweird.f32 %v791
        %vm799 = vmor %vm797, %vm798
        %v800 = vsel %vm799, %v791, %v796
        %s801 = vtos %v800
        %v802 = vstv %s777
        %v803 = vsub.f32 %v685, %v802
        %v804 = vsub.f32 %v704, %v802
        %v805 = vsub.f32 %v687, %v802
        %v806 = vsub.f32 %v706, %v802
        %v807 = vsub.f32 %v690, %v802
        %v808 = vsub.f32 %v709, %v802
        %v809 = vsub.f32 %v692, %v802
        %v810 = vsub.f32 %v711, %v802
        %v811 = vstv %s801
        %v812 = vmul.f32 %v803, %v811
        %v813 = vmul.f32 %v804, %v811
        %v814 = vmul.f32 %v805, %v811
        %v815 = vmul.f32 %v806, %v811
        %v816 = vmul.f32 %v807, %v811
        %v817 = vmul.f32 %v808, %v811
        %v818 = vmul.f32 %v809, %v811
        %v819 = vmul.f32 %v810, %v811
        %v820 = vmul.f32 %v812, %v713
        %v821 = vmul.f32 %v813, %v714
        %v822 = vmul.f32 %v814, %v715
        %v823 = vmul.f32 %v815, %v716
        %v824 = vmul.f32 %v816, %v717
        %v825 = vmul.f32 %v817, %v718
        %v826 = vmul.f32 %v818, %v719
        %v827 = vmul.f32 %v819, %v720
        %v828 = vadd.f32 %v820, %v721
        %v829 = vadd.f32 %v821, %v722
        %v830 = vadd.f32 %v822, %v723
        %v831 = vadd.f32 %v823, %v724
        %v832 = vadd.f32 %v824, %v725
        %v833 = vadd.f32 %v825, %v726
        %v834 = vadd.f32 %v826, %v727
        %v835 = vadd.f32 %v827, %v728
        %v836 = vmax.f32 %v828, 0.0
        %v837 = vmax.f32 %v829, 0.0
        %v838 = vmax.f32 %v830, 0.0
        %v839 = vmax.f32 %v831, 0.0
        %v840 = vmax.f32 %v832, 0.0
        %v841 = vmax.f32 %v833, 0.0
        %v842 = vmax.f32 %v834, 0.0
        %v843 = vmax.f32 %v835, 0.0
        %v844 = vld [vmem:[#allocation4] sm:$0xff]
        %v845 = vld [vmem:[#allocation4 + $0x8] sm:$0xf]
        %v846 = vld [vmem:[#allocation4 + $0xc] sm:$0xff]
        %v847 = vld [vmem:[#allocation4 + $0x14] sm:$0xf]
        %v848 = vld [vmem:[#allocation4 + $0x18] sm:$0xff]
        %v849 = vld [vmem:[#allocation4 + $0x20] sm:$0xf]
        %v850 = vld [vmem:[#allocation4 + $0x24] sm:$0xff]
        %v851 = vld [vmem:[#allocation4 + $0x2c] sm:$0xf]
        %v852 = vld [vmem:[%s5] sm:$0xff]
        %v853 = vld [vmem:[%s5 + $0x8] sm:$0xff]
        %v854 = vld [vmem:[%s5 + $0x10] sm:$0xff]
        %v855 = vld [vmem:[%s5 + $0x18] sm:$0xff]
        %856 = vrot.lane.b32.xlu0 %v836, 17
        %v857 = vpop.permute.xlu0 %856
        %858 = vrot.lane.b32.xlu0 %v838, 17
        %v859 = vpop.permute.xlu0 %858
        %860 = vrot.lane.b32.xlu0 %v840, 17
        %v861 = vpop.permute.xlu0 %860
        %862 = vrot.lane.b32.xlu0 %v842, 17
        %v863 = vpop.permute.xlu0 %862
        %864 = vrot.lane.b32.xlu0 %v837, 17
        %v865 = vpop.permute.xlu0 %864
        %866 = vrot.lane.b32.xlu0 %v839, 17
        %v867 = vpop.permute.xlu0 %866
        %868 = vrot.lane.b32.xlu0 %v841, 17
        %v869 = vpop.permute.xlu0 %868
        %870 = vrot.lane.b32.xlu0 %v843, 17
        %v871 = vpop.permute.xlu0 %870
        %v872 = vsel %vm428, %v857, %v865
        %v873 = vsel %vm428, %v859, %v867
        %v874 = vsel %vm428, %v861, %v869
        %v875 = vsel %vm428, %v863, %v871
        %v876 = vsel %vm428, %v865, %v857
        %v877 = vsel %vm428, %v867, %v859
        %v878 = vsel %vm428, %v869, %v861
        %v879 = vsel %vm428, %v871, %v863
        %v880 = vld [vmem:[%s1] sm:$0x3]
        %v882 = vperm.slane %v880, 0
        %v883 = vperm.slane %v880, 1
        %v886 = vmul.f32 %v876, %v882
        %v887 = vmul.f32 %v872, %v883
        %v888 = vmul.f32 %v877, %v882
        %v889 = vmul.f32 %v873, %v883
        %v890 = vmul.f32 %v878, %v882
        %v891 = vmul.f32 %v874, %v883
        %v892 = vmul.f32 %v879, %v882
        %v893 = vmul.f32 %v875, %v883
        %894 = vst [vmem:[#allocation2] sm:$0xff] %v886
        %895 = vst [vmem:[#allocation2 + $0x8] sm:$0xff] %v887
        %896 = vst [vmem:[#allocation2 + $0x10] sm:$0xff] %v888
        %897 = vst [vmem:[#allocation2 + $0x18] sm:$0xff] %v889
        %898 = vst [vmem:[#allocation2 + $0x20] sm:$0xff] %v890
        %899 = vst [vmem:[#allocation2 + $0x28] sm:$0xff] %v891
        %900 = vst [vmem:[#allocation2 + $0x30] sm:$0xff] %v892
        %901 = vst [vmem:[#allocation2 + $0x38] sm:$0xff] %v893
        %902 = vrot.lane.b32.xlu0 %v836, 16
        %v903 = vpop.permute.xlu0 %902
        %904 = vrot.lane.b32.xlu0 %v838, 16
        %v905 = vpop.permute.xlu0 %904
        %906 = vrot.lane.b32.xlu0 %v840, 16
        %v907 = vpop.permute.xlu0 %906
        %908 = vrot.lane.b32.xlu0 %v842, 16
        %v909 = vpop.permute.xlu0 %908
        %910 = vrot.lane.b32.xlu0 %v837, 16
        %v911 = vpop.permute.xlu0 %910
        %912 = vrot.lane.b32.xlu0 %v839, 16
        %v913 = vpop.permute.xlu0 %912
        %914 = vrot.lane.b32.xlu0 %v841, 16
        %v915 = vpop.permute.xlu0 %914
        %916 = vrot.lane.b32.xlu0 %v843, 16
        %v917 = vpop.permute.xlu0 %916
        %v918 = vsel %vm455, %v903, %v911
        %v919 = vsel %vm455, %v905, %v913
        %v920 = vsel %vm455, %v907, %v915
        %v921 = vsel %vm455, %v909, %v917
        %v922 = vsel %vm455, %v911, %v903
        %v923 = vsel %vm455, %v913, %v905
        %v924 = vsel %vm455, %v915, %v907
        %v925 = vsel %vm455, %v917, %v909
        %v926 = vld [vmem:[%s458] sm:$0x3]
        %v928 = vperm.slane %v926, 0
        %v929 = vperm.slane %v926, 1
        %v932 = vmul.f32 %v922, %v928
        %v933 = vmul.f32 %v918, %v929
        %v934 = vmul.f32 %v923, %v928
        %v935 = vmul.f32 %v919, %v929
        %v936 = vmul.f32 %v924, %v928
        %v937 = vmul.f32 %v920, %v929
        %v938 = vmul.f32 %v925, %v928
        %v939 = vmul.f32 %v921, %v929
        %940 = vst [vmem:[#allocation2 + $0x40] sm:$0xff] %v932
        %941 = vst [vmem:[#allocation2 + $0x48] sm:$0xff] %v933
        %942 = vst [vmem:[#allocation2 + $0x50] sm:$0xff] %v934
        %943 = vst [vmem:[#allocation2 + $0x58] sm:$0xff] %v935
        %944 = vst [vmem:[#allocation2 + $0x60] sm:$0xff] %v936
        %945 = vst [vmem:[#allocation2 + $0x68] sm:$0xff] %v937
        %946 = vst [vmem:[#allocation2 + $0x70] sm:$0xff] %v938
        %947 = vst [vmem:[#allocation2 + $0x78] sm:$0xff] %v939
        %948 = vrot.lane.b32.xlu0 %v836, 15
        %v949 = vpop.permute.xlu0 %948
        %950 = vrot.lane.b32.xlu0 %v838, 15
        %v951 = vpop.permute.xlu0 %950
        %952 = vrot.lane.b32.xlu0 %v840, 15
        %v953 = vpop.permute.xlu0 %952
        %954 = vrot.lane.b32.xlu0 %v842, 15
        %v955 = vpop.permute.xlu0 %954
        %956 = vrot.lane.b32.xlu0 %v837, 15
        %v957 = vpop.permute.xlu0 %956
        %958 = vrot.lane.b32.xlu0 %v839, 15
        %v959 = vpop.permute.xlu0 %958
        %960 = vrot.lane.b32.xlu0 %v841, 15
        %v961 = vpop.permute.xlu0 %960
        %962 = vrot.lane.b32.xlu0 %v843, 15
        %v963 = vpop.permute.xlu0 %962
        %v964 = vsel %vm479, %v949, %v957
        %v965 = vsel %vm479, %v951, %v959
        %v966 = vsel %vm479, %v953, %v961
        %v967 = vsel %vm479, %v955, %v963
        %v968 = vsel %vm479, %v957, %v949
        %v969 = vsel %vm479, %v959, %v951
        %v970 = vsel %vm479, %v961, %v953
        %v971 = vsel %vm479, %v963, %v955
        %v972 = vld [vmem:[%s482] sm:$0x3]
        %v974 = vperm.slane %v972, 0
        %v975 = vperm.slane %v972, 1
        %v978 = vmul.f32 %v968, %v974
        %v979 = vmul.f32 %v964, %v975
        %v980 = vmul.f32 %v969, %v974
        %v981 = vmul.f32 %v965, %v975
        %v982 = vmul.f32 %v970, %v974
        %v983 = vmul.f32 %v966, %v975
        %v984 = vmul.f32 %v971, %v974
        %v985 = vmul.f32 %v967, %v975
        %986 = vst [vmem:[#allocation2 + $0x80] sm:$0xff] %v978
        %987 = vst [vmem:[#allocation2 + $0x88] sm:$0xff] %v979
        %988 = vst [vmem:[#allocation2 + $0x90] sm:$0xff] %v980
        %989 = vst [vmem:[#allocation2 + $0x98] sm:$0xff] %v981
        %990 = vst [vmem:[#allocation2 + $0xa0] sm:$0xff] %v982
        %991 = vst [vmem:[#allocation2 + $0xa8] sm:$0xff] %v983
        %992 = vst [vmem:[#allocation2 + $0xb0] sm:$0xff] %v984
        %993 = vst [vmem:[#allocation2 + $0xb8] sm:$0xff] %v985
        %994 = vrot.lane.b32.xlu0 %v836, 1
        %v995 = vpop.permute.xlu0 %994
        %996 = vrot.lane.b32.xlu0 %v838, 1
        %v997 = vpop.permute.xlu0 %996
        %998 = vrot.lane.b32.xlu0 %v840, 1
        %v999 = vpop.permute.xlu0 %998
        %1000 = vrot.lane.b32.xlu0 %v842, 1
        %v1001 = vpop.permute.xlu0 %1000
        %1002 = vrot.lane.b32.xlu0 %v837, 1
        %v1003 = vpop.permute.xlu0 %1002
        %1004 = vrot.lane.b32.xlu0 %v839, 1
        %v1005 = vpop.permute.xlu0 %1004
        %1006 = vrot.lane.b32.xlu0 %v841, 1
        %v1007 = vpop.permute.xlu0 %1006
        %1008 = vrot.lane.b32.xlu0 %v843, 1
        %v1009 = vpop.permute.xlu0 %1008
        %v1010 = vsel %vm503, %v995, %v1003
        %v1011 = vsel %vm503, %v997, %v1005
        %v1012 = vsel %vm503, %v999, %v1007
        %v1013 = vsel %vm503, %v1001, %v1009
        %v1014 = vsel %vm503, %v1003, %v995
        %v1015 = vsel %vm503, %v1005, %v997
        %v1016 = vsel %vm503, %v1007, %v999
        %v1017 = vsel %vm503, %v1009, %v1001
        %v1018 = vld [vmem:[%s506] sm:$0x3]
        %v1020 = vperm.slane %v1018, 0
        %v1021 = vperm.slane %v1018, 1
        %v1024 = vmul.f32 %v1014, %v1020
        %v1025 = vmul.f32 %v1010, %v1021
        %v1026 = vmul.f32 %v1015, %v1020
        %v1027 = vmul.f32 %v1011, %v1021
        %v1028 = vmul.f32 %v1016, %v1020
        %v1029 = vmul.f32 %v1012, %v1021
        %v1030 = vmul.f32 %v1017, %v1020
        %v1031 = vmul.f32 %v1013, %v1021
        %1032 = vst [vmem:[#allocation2 + $0xc0] sm:$0xff] %v1024
        %1033 = vst [vmem:[#allocation2 + $0xc8] sm:$0xff] %v1025
        %1034 = vst [vmem:[#allocation2 + $0xd0] sm:$0xff] %v1026
        %1035 = vst [vmem:[#allocation2 + $0xd8] sm:$0xff] %v1027
        %1036 = vst [vmem:[#allocation2 + $0xe0] sm:$0xff] %v1028
        %1037 = vst [vmem:[#allocation2 + $0xe8] sm:$0xff] %v1029
        %1038 = vst [vmem:[#allocation2 + $0xf0] sm:$0xff] %v1030
        %1039 = vst [vmem:[#allocation2 + $0xf8] sm:$0xff] %v1031
        %1040 = vst [vmem:[#allocation2 + $0x100] sm:$0xff] %v836
        %1041 = vst [vmem:[#allocation2 + $0x108] sm:$0xff] %v837
        %1042 = vst [vmem:[#allocation2 + $0x110] sm:$0xff] %v838
        %1043 = vst [vmem:[#allocation2 + $0x118] sm:$0xff] %v839
        %1044 = vst [vmem:[#allocation2 + $0x120] sm:$0xff] %v840
        %1045 = vst [vmem:[#allocation2 + $0x128] sm:$0xff] %v841
        %1046 = vst [vmem:[#allocation2 + $0x130] sm:$0xff] %v842
        %1047 = vst [vmem:[#allocation2 + $0x138] sm:$0xff] %v843
        %1048 = vrot.lane.b32.xlu0 %v836, 127
        %v1049 = vpop.permute.xlu0 %1048
        %1050 = vrot.lane.b32.xlu0 %v838, 127
        %v1051 = vpop.permute.xlu0 %1050
        %1052 = vrot.lane.b32.xlu0 %v840, 127
        %v1053 = vpop.permute.xlu0 %1052
        %1054 = vrot.lane.b32.xlu0 %v842, 127
        %v1055 = vpop.permute.xlu0 %1054
        %1056 = vrot.lane.b32.xlu0 %v837, 127
        %v1057 = vpop.permute.xlu0 %1056
        %1058 = vrot.lane.b32.xlu0 %v839, 127
        %v1059 = vpop.permute.xlu0 %1058
        %1060 = vrot.lane.b32.xlu0 %v841, 127
        %v1061 = vpop.permute.xlu0 %1060
        %1062 = vrot.lane.b32.xlu0 %v843, 127
        %v1063 = vpop.permute.xlu0 %1062
        %v1064 = vsel %vm530, %v1049, %v1057
        %v1065 = vsel %vm530, %v1051, %v1059
        %v1066 = vsel %vm530, %v1053, %v1061
        %v1067 = vsel %vm530, %v1055, %v1063
        %v1068 = vsel %vm530, %v1057, %v1049
        %v1069 = vsel %vm530, %v1059, %v1051
        %v1070 = vsel %vm530, %v1061, %v1053
        %v1071 = vsel %vm530, %v1063, %v1055
        %v1072 = vld [vmem:[%s533] sm:$0x3]
        %v1074 = vperm.slane %v1072, 0
        %v1075 = vperm.slane %v1072, 1
        %v1078 = vmul.f32 %v1064, %v1074
        %v1079 = vmul.f32 %v1068, %v1075
        %v1080 = vmul.f32 %v1065, %v1074
        %v1081 = vmul.f32 %v1069, %v1075
        %v1082 = vmul.f32 %v1066, %v1074
        %v1083 = vmul.f32 %v1070, %v1075
        %v1084 = vmul.f32 %v1067, %v1074
        %v1085 = vmul.f32 %v1071, %v1075
        %1086 = vst [vmem:[#allocation2 + $0x140] sm:$0xff] %v1078
        %1087 = vst [vmem:[#allocation2 + $0x148] sm:$0xff] %v1079
        %1088 = vst [vmem:[#allocation2 + $0x150] sm:$0xff] %v1080
        %1089 = vst [vmem:[#allocation2 + $0x158] sm:$0xff] %v1081
        %1090 = vst [vmem:[#allocation2 + $0x160] sm:$0xff] %v1082
        %1091 = vst [vmem:[#allocation2 + $0x168] sm:$0xff] %v1083
        %1092 = vst [vmem:[#allocation2 + $0x170] sm:$0xff] %v1084
        %1093 = vst [vmem:[#allocation2 + $0x178] sm:$0xff] %v1085
        %1094 = vrot.lane.b32.xlu0 %v836, 113
        %v1095 = vpop.permute.xlu0 %1094
        %1096 = vrot.lane.b32.xlu0 %v838, 113
        %v1097 = vpop.permute.xlu0 %1096
        %1098 = vrot.lane.b32.xlu0 %v840, 113
        %v1099 = vpop.permute.xlu0 %1098
        %1100 = vrot.lane.b32.xlu0 %v842, 113
        %v1101 = vpop.permute.xlu0 %1100
        %1102 = vrot.lane.b32.xlu0 %v837, 113
        %v1103 = vpop.permute.xlu0 %1102
        %1104 = vrot.lane.b32.xlu0 %v839, 113
        %v1105 = vpop.permute.xlu0 %1104
        %1106 = vrot.lane.b32.xlu0 %v841, 113
        %v1107 = vpop.permute.xlu0 %1106
        %1108 = vrot.lane.b32.xlu0 %v843, 113
        %v1109 = vpop.permute.xlu0 %1108
        %v1110 = vsel %vm554, %v1095, %v1103
        %v1111 = vsel %vm554, %v1097, %v1105
        %v1112 = vsel %vm554, %v1099, %v1107
        %v1113 = vsel %vm554, %v1101, %v1109
        %v1114 = vsel %vm554, %v1103, %v1095
        %v1115 = vsel %vm554, %v1105, %v1097
        %v1116 = vsel %vm554, %v1107, %v1099
        %v1117 = vsel %vm554, %v1109, %v1101
        %v1118 = vld [vmem:[%s557] sm:$0x3]
        %v1120 = vperm.slane %v1118, 0
        %v1121 = vperm.slane %v1118, 1
        %v1124 = vmul.f32 %v1110, %v1120
        %v1125 = vmul.f32 %v1114, %v1121
        %v1126 = vmul.f32 %v1111, %v1120
        %v1127 = vmul.f32 %v1115, %v1121
        %v1128 = vmul.f32 %v1112, %v1120
        %v1129 = vmul.f32 %v1116, %v1121
        %v1130 = vmul.f32 %v1113, %v1120
        %v1131 = vmul.f32 %v1117, %v1121
        %1132 = vst [vmem:[#allocation2 + $0x180] sm:$0xff] %v1124
        %1133 = vst [vmem:[#allocation2 + $0x188] sm:$0xff] %v1125
        %1134 = vst [vmem:[#allocation2 + $0x190] sm:$0xff] %v1126
        %1135 = vst [vmem:[#allocation2 + $0x198] sm:$0xff] %v1127
        %1136 = vst [vmem:[#allocation2 + $0x1a0] sm:$0xff] %v1128
        %1137 = vst [vmem:[#allocation2 + $0x1a8] sm:$0xff] %v1129
        %1138 = vst [vmem:[#allocation2 + $0x1b0] sm:$0xff] %v1130
        %1139 = vst [vmem:[#allocation2 + $0x1b8] sm:$0xff] %v1131
        %1140 = vrot.lane.b32.xlu0 %v836, 112
        %v1141 = vpop.permute.xlu0 %1140
        %1142 = vrot.lane.b32.xlu0 %v838, 112
        %v1143 = vpop.permute.xlu0 %1142
        %1144 = vrot.lane.b32.xlu0 %v840, 112
        %v1145 = vpop.permute.xlu0 %1144
        %1146 = vrot.lane.b32.xlu0 %v842, 112
        %v1147 = vpop.permute.xlu0 %1146
        %1148 = vrot.lane.b32.xlu0 %v837, 112
        %v1149 = vpop.permute.xlu0 %1148
        %1150 = vrot.lane.b32.xlu0 %v839, 112
        %v1151 = vpop.permute.xlu0 %1150
        %1152 = vrot.lane.b32.xlu0 %v841, 112
        %v1153 = vpop.permute.xlu0 %1152
        %1154 = vrot.lane.b32.xlu0 %v843, 112
        %v1155 = vpop.permute.xlu0 %1154
        %v1156 = vsel %vm578, %v1141, %v1149
        %v1157 = vsel %vm578, %v1143, %v1151
        %v1158 = vsel %vm578, %v1145, %v1153
        %v1159 = vsel %vm578, %v1147, %v1155
        %v1160 = vsel %vm578, %v1149, %v1141
        %v1161 = vsel %vm578, %v1151, %v1143
        %v1162 = vsel %vm578, %v1153, %v1145
        %v1163 = vsel %vm578, %v1155, %v1147
        %v1164 = vld [vmem:[%s581] sm:$0x3]
        %v1166 = vperm.slane %v1164, 0
        %v1167 = vperm.slane %v1164, 1
        %v1170 = vmul.f32 %v1156, %v1166
        %v1171 = vmul.f32 %v1160, %v1167
        %v1172 = vmul.f32 %v1157, %v1166
        %v1173 = vmul.f32 %v1161, %v1167
        %v1174 = vmul.f32 %v1158, %v1166
        %v1175 = vmul.f32 %v1162, %v1167
        %v1176 = vmul.f32 %v1159, %v1166
        %v1177 = vmul.f32 %v1163, %v1167
        %1178 = vst [vmem:[#allocation2 + $0x1c0] sm:$0xff] %v1170
        %1179 = vst [vmem:[#allocation2 + $0x1c8] sm:$0xff] %v1171
        %1180 = vst [vmem:[#allocation2 + $0x1d0] sm:$0xff] %v1172
        %1181 = vst [vmem:[#allocation2 + $0x1d8] sm:$0xff] %v1173
        %1182 = vst [vmem:[#allocation2 + $0x1e0] sm:$0xff] %v1174
        %1183 = vst [vmem:[#allocation2 + $0x1e8] sm:$0xff] %v1175
        %1184 = vst [vmem:[#allocation2 + $0x1f0] sm:$0xff] %v1176
        %1185 = vst [vmem:[#allocation2 + $0x1f8] sm:$0xff] %v1177
        %1186 = vrot.lane.b32.xlu0 %v836, 111
        %v1187 = vpop.permute.xlu0 %1186
        %1188 = vrot.lane.b32.xlu0 %v838, 111
        %v1189 = vpop.permute.xlu0 %1188
        %1190 = vrot.lane.b32.xlu0 %v840, 111
        %v1191 = vpop.permute.xlu0 %1190
        %1192 = vrot.lane.b32.xlu0 %v842, 111
        %v1193 = vpop.permute.xlu0 %1192
        %1194 = vrot.lane.b32.xlu0 %v837, 111
        %v1195 = vpop.permute.xlu0 %1194
        %1196 = vrot.lane.b32.xlu0 %v839, 111
        %v1197 = vpop.permute.xlu0 %1196
        %1198 = vrot.lane.b32.xlu0 %v841, 111
        %v1199 = vpop.permute.xlu0 %1198
        %1200 = vrot.lane.b32.xlu0 %v843, 111
        %v1201 = vpop.permute.xlu0 %1200
        %v1202 = vsel %vm602, %v1187, %v1195
        %v1203 = vsel %vm602, %v1189, %v1197
        %v1204 = vsel %vm602, %v1191, %v1199
        %v1205 = vsel %vm602, %v1193, %v1201
        %v1206 = vsel %vm602, %v1195, %v1187
        %v1207 = vsel %vm602, %v1197, %v1189
        %v1208 = vsel %vm602, %v1199, %v1191
        %v1209 = vsel %vm602, %v1201, %v1193
        %v1210 = vld [vmem:[%s605] sm:$0x3]
        %v1212 = vperm.slane %v1210, 0
        %v1213 = vperm.slane %v1210, 1
        %v1216 = vmul.f32 %v1202, %v1212
        %v1217 = vmul.f32 %v1206, %v1213
        %v1218 = vmul.f32 %v1203, %v1212
        %v1219 = vmul.f32 %v1207, %v1213
        %v1220 = vmul.f32 %v1204, %v1212
        %v1221 = vmul.f32 %v1208, %v1213
        %v1222 = vmul.f32 %v1205, %v1212
        %v1223 = vmul.f32 %v1209, %v1213
        %1224 = vst [vmem:[#allocation2 + $0x200] sm:$0xff] %v1216
        %1225 = vst [vmem:[#allocation2 + $0x208] sm:$0xff] %v1217
        %1226 = vst [vmem:[#allocation2 + $0x210] sm:$0xff] %v1218
        %1227 = vst [vmem:[#allocation2 + $0x218] sm:$0xff] %v1219
        %1228 = vst [vmem:[#allocation2 + $0x220] sm:$0xff] %v1220
        %1229 = vst [vmem:[#allocation2 + $0x228] sm:$0xff] %v1221
        %1230 = vst [vmem:[#allocation2 + $0x230] sm:$0xff] %v1222
        %1231 = vst [vmem:[#allocation2 + $0x238] sm:$0xff] %v1223
        %v1232 = vld [vmem:[#allocation2] sm:$0xff]
        %v1233 = vld [vmem:[#allocation2 + $0x8] sm:$0xff]
        %v1234 = vld [vmem:[#allocation2 + $0x10] sm:$0xff]
        %v1235 = vld [vmem:[#allocation2 + $0x18] sm:$0xff]
        %v1236 = vld [vmem:[#allocation2 + $0x20] sm:$0xff]
        %v1237 = vld [vmem:[#allocation2 + $0x28] sm:$0xff]
        %v1238 = vld [vmem:[#allocation2 + $0x30] sm:$0xff]
        %v1239 = vld [vmem:[#allocation2 + $0x38] sm:$0xff]
        %v1240 = vld [vmem:[#allocation2 + $0x40] sm:$0xff]
        %v1241 = vld [vmem:[#allocation2 + $0x48] sm:$0xff]
        %v1242 = vld [vmem:[#allocation2 + $0x50] sm:$0xff]
        %v1243 = vld [vmem:[#allocation2 + $0x58] sm:$0xff]
        %v1244 = vld [vmem:[#allocation2 + $0x60] sm:$0xff]
        %v1245 = vld [vmem:[#allocation2 + $0x68] sm:$0xff]
        %v1246 = vld [vmem:[#allocation2 + $0x70] sm:$0xff]
        %v1247 = vld [vmem:[#allocation2 + $0x78] sm:$0xff]
        %v1248 = vld [vmem:[#allocation2 + $0x80] sm:$0xff]
        %v1249 = vld [vmem:[#allocation2 + $0x88] sm:$0xff]
        %v1250 = vld [vmem:[#allocation2 + $0x90] sm:$0xff]
        %v1251 = vld [vmem:[#allocation2 + $0x98] sm:$0xff]
        %v1252 = vld [vmem:[#allocation2 + $0xa0] sm:$0xff]
        %v1253 = vld [vmem:[#allocation2 + $0xa8] sm:$0xff]
        %v1254 = vld [vmem:[#allocation2 + $0xb0] sm:$0xff]
        %v1255 = vld [vmem:[#allocation2 + $0xb8] sm:$0xff]
        %v1256 = vld [vmem:[#allocation2 + $0xc0] sm:$0xff]
        %v1257 = vld [vmem:[#allocation2 + $0xc8] sm:$0xff]
        %v1258 = vld [vmem:[#allocation2 + $0xd0] sm:$0xff]
        %v1259 = vld [vmem:[#allocation2 + $0xd8] sm:$0xff]
        %v1260 = vld [vmem:[#allocation2 + $0xe0] sm:$0xff]
        %v1261 = vld [vmem:[#allocation2 + $0xe8] sm:$0xff]
        %v1262 = vld [vmem:[#allocation2 + $0xf0] sm:$0xff]
        %v1263 = vld [vmem:[#allocation2 + $0xf8] sm:$0xff]
        %v1264 = vld [vmem:[#allocation2 + $0x100] sm:$0xff]
        %v1265 = vld [vmem:[#allocation2 + $0x108] sm:$0xff]
        %v1266 = vld [vmem:[#allocation2 + $0x110] sm:$0xff]
        %v1267 = vld [vmem:[#allocation2 + $0x118] sm:$0xff]
        %v1268 = vld [vmem:[#allocation2 + $0x120] sm:$0xff]
        %v1269 = vld [vmem:[#allocation2 + $0x128] sm:$0xff]
        %v1270 = vld [vmem:[#allocation2 + $0x130] sm:$0xff]
        %v1271 = vld [vmem:[#allocation2 + $0x138] sm:$0xff]
        %v1272 = vld [vmem:[#allocation2 + $0x140] sm:$0xff]
        %v1273 = vld [vmem:[#allocation2 + $0x148] sm:$0xff]
        %v1274 = vld [vmem:[#allocation2 + $0x150] sm:$0xff]
        %v1275 = vld [vmem:[#allocation2 + $0x158] sm:$0xff]
        %v1276 = vld [vmem:[#allocation2 + $0x160] sm:$0xff]
        %v1277 = vld [vmem:[#allocation2 + $0x168] sm:$0xff]
        %v1278 = vld [vmem:[#allocation2 + $0x170] sm:$0xff]
        %v1279 = vld [vmem:[#allocation2 + $0x178] sm:$0xff]
        %v1280 = vld [vmem:[#allocation2 + $0x180] sm:$0xff]
        %v1281 = vld [vmem:[#allocation2 + $0x188] sm:$0xff]
        %v1282 = vld [vmem:[#allocation2 + $0x190] sm:$0xff]
        %v1283 = vld [vmem:[#allocation2 + $0x198] sm:$0xff]
        %v1284 = vld [vmem:[#allocation2 + $0x1a0] sm:$0xff]
        %v1285 = vld [vmem:[#allocation2 + $0x1a8] sm:$0xff]
        %v1286 = vld [vmem:[#allocation2 + $0x1b0] sm:$0xff]
        %v1287 = vld [vmem:[#allocation2 + $0x1b8] sm:$0xff]
        %v1288 = vld [vmem:[#allocation2 + $0x1c0] sm:$0xff]
        %v1289 = vld [vmem:[#allocation2 + $0x1c8] sm:$0xff]
        %v1290 = vld [vmem:[#allocation2 + $0x1d0] sm:$0xff]
        %v1291 = vld [vmem:[#allocation2 + $0x1d8] sm:$0xff]
        %v1292 = vld [vmem:[#allocation2 + $0x1e0] sm:$0xff]
        %v1293 = vld [vmem:[#allocation2 + $0x1e8] sm:$0xff]
        %v1294 = vld [vmem:[#allocation2 + $0x1f0] sm:$0xff]
        %v1295 = vld [vmem:[#allocation2 + $0x1f8] sm:$0xff]
        %v1296 = vld [vmem:[#allocation2 + $0x200] sm:$0xff]
        %v1297 = vld [vmem:[#allocation2 + $0x208] sm:$0xff]
        %v1298 = vld [vmem:[#allocation2 + $0x210] sm:$0xff]
        %v1299 = vld [vmem:[#allocation2 + $0x218] sm:$0xff]
        %v1300 = vld [vmem:[#allocation2 + $0x220] sm:$0xff]
        %v1301 = vld [vmem:[#allocation2 + $0x228] sm:$0xff]
        %v1302 = vld [vmem:[#allocation2 + $0x230] sm:$0xff]
        %v1303 = vld [vmem:[#allocation2 + $0x238] sm:$0xff]
        %v1304 = vpack.c.bf16 %v1234, %v1232
        %v1305 = vpack.c.bf16 %v1235, %v1233
        %v1306 = vpack.c.bf16 %v1238, %v1236
        %v1307 = vpack.c.bf16 %v1239, %v1237
        %v1308 = vpack.c.bf16 %v1242, %v1240
        %v1309 = vpack.c.bf16 %v1243, %v1241
        %v1310 = vpack.c.bf16 %v1246, %v1244
        %v1311 = vpack.c.bf16 %v1247, %v1245
        %v1312 = vpack.c.bf16 %v1250, %v1248
        %v1313 = vpack.c.bf16 %v1251, %v1249
        %v1314 = vpack.c.bf16 %v1254, %v1252
        %v1315 = vpack.c.bf16 %v1255, %v1253
        %v1316 = vpack.c.bf16 %v1258, %v1256
        %v1317 = vpack.c.bf16 %v1259, %v1257
        %v1318 = vpack.c.bf16 %v1262, %v1260
        %v1319 = vpack.c.bf16 %v1263, %v1261
        %v1320 = vpack.c.bf16 %v1266, %v1264
        %v1321 = vpack.c.bf16 %v1267, %v1265
        %v1322 = vpack.c.bf16 %v1270, %v1268
        %v1323 = vpack.c.bf16 %v1271, %v1269
        %v1324 = vpack.c.bf16 %v1274, %v1272
        %v1325 = vpack.c.bf16 %v1275, %v1273
        %v1326 = vpack.c.bf16 %v1278, %v1276
        %v1327 = vpack.c.bf16 %v1279, %v1277
        %v1328 = vpack.c.bf16 %v1282, %v1280
        %v1329 = vpack.c.bf16 %v1283, %v1281
        %v1330 = vpack.c.bf16 %v1286, %v1284
        %v1331 = vpack.c.bf16 %v1287, %v1285
        %v1332 = vpack.c.bf16 %v1290, %v1288
        %v1333 = vpack.c.bf16 %v1291, %v1289
        %v1334 = vpack.c.bf16 %v1294, %v1292
        %v1335 = vpack.c.bf16 %v1295, %v1293
        %v1336 = vpack.c.bf16 %v1298, %v1296
        %v1337 = vpack.c.bf16 %v1299, %v1297
        %v1338 = vpack.c.bf16 %v1302, %v1300
        %v1339 = vpack.c.bf16 %v1303, %v1301
        %1341 = vset.pattern.permute.xlu0 0
        %1342 = vperm.xlu0 %1341, %v852
        %v1343 = vpop.permute.xlu0 %1342
        %1346 = vset.pattern.permute.xlu0 0
        %1347 = vperm.xlu0 %1346, %v853
        %v1348 = vpop.permute.xlu0 %1347
        %1351 = vset.pattern.permute.xlu0 0
        %1352 = vperm.xlu0 %1351, %v854
        %v1353 = vpop.permute.xlu0 %1352
        %1356 = vset.pattern.permute.xlu0 0
        %1357 = vperm.xlu0 %1356, %v855
        %v1358 = vpop.permute.xlu0 %1357
        %v1368 = vunpack.c.l.b16 %v844
        %v1369 = vunpack.c.h.b16 %v844
        %v1370 = vunpack.c.l.b16 %v845
        %v1371 = vunpack.c.l.b16 %v846
        %v1372 = vunpack.c.h.b16 %v846
        %v1373 = vunpack.c.l.b16 %v847
        %v1374 = vunpack.c.l.b16 %v848
        %v1375 = vunpack.c.h.b16 %v848
        %v1376 = vunpack.c.l.b16 %v849
        %v1377 = vunpack.c.l.b16 %v850
        %v1378 = vunpack.c.h.b16 %v850
        %v1379 = vunpack.c.l.b16 %v851
        %v1380 = vpack.c.b16 %v1371, %v1368
        %v1381 = vpack.c.b16 %v1372, %v1369
        %v1382 = vpack.c.b16 %v1373, %v1370
        %v1383 = vpack.c.b16 %v1377, %v1374
        %v1384 = vpack.c.b16 %v1378, %v1375
        %v1385 = vpack.c.b16 %v1379, %v1376
        %vm1390 = vcmask 261120
        %v1392 = vsel %vm1390, %v1382, 0
        %v1395 = vsel %vm1390, %v1385, 0
        %1397 = vmatpush.bf16.msra.mxu0 %v1318
        %1398 = vmatpush.bf16.msra.mxu0 %v1316
        %1399 = vmatpush.bf16.msra.mxu0 %v1314
        %1400 = vmatpush.bf16.msra.mxu0 %v1312
        %1401 = vmatpush.bf16.msra.mxu0 %v1310
        %1402 = vmatpush.bf16.msra.mxu0 %v1308
        %1403 = vmatpush.bf16.msra.mxu0 %v1306
        %1404 = vmatpush.bf16.msra.mxu0 %v1304
        %1405 = vmatmul.bf16.gmra.mxu0 %v1380
        %v1406 = vpop.f32.mrf.mxu0
        %v1407 = vadd.f32 %v1343, %v1406
        %v1408 = vpop.f32.mrf.mxu0
        %v1409 = vadd.f32 %v1348, %v1408
        %1410 = vmatmul.bf16.gmra.mxu0 %v1383
        %v1411 = vpop.f32.mrf.mxu0
        %v1412 = vadd.f32 %v1353, %v1411
        %v1413 = vpop.f32.mrf.mxu0
        %v1414 = vadd.f32 %v1358, %v1413
        %1415 = vdwg.mxu0
        %1416 = vmatpush.bf16.msra.mxu0 %v1334
        %1417 = vmatpush.bf16.msra.mxu0 %v1332
        %1418 = vmatpush.bf16.msra.mxu0 %v1330
        %1419 = vmatpush.bf16.msra.mxu0 %v1328
        %1420 = vmatpush.bf16.msra.mxu0 %v1326
        %1421 = vmatpush.bf16.msra.mxu0 %v1324
        %1422 = vmatpush.bf16.msra.mxu0 %v1322
        %1423 = vmatpush.bf16.msra.mxu0 %v1320
        %1424 = vmatmul.bf16.gmra.mxu0 %v1381
        %v1425 = vpop.f32.mrf.mxu0
        %v1426 = vadd.f32 %v1407, %v1425
        %v1427 = vpop.f32.mrf.mxu0
        %v1428 = vadd.f32 %v1409, %v1427
        %1429 = vmatmul.bf16.gmra.mxu0 %v1384
        %v1430 = vpop.f32.mrf.mxu0
        %v1431 = vadd.f32 %v1412, %v1430
        %v1432 = vpop.f32.mrf.mxu0
        %v1433 = vadd.f32 %v1414, %v1432
        %1434 = vdwg.mxu0
        %1435 = vmatpush.bf16.msra.mxu0 0
        %1436 = vmatpush.bf16.msra.mxu0 0
        %1437 = vmatpush.bf16.msra.mxu0 0
        %1438 = vmatpush.bf16.msra.mxu0 0
        %1439 = vmatpush.bf16.msra.mxu0 0
        %1440 = vmatpush.bf16.msra.mxu0 0
        %1441 = vmatpush.bf16.msra.mxu0 %v1338
        %1442 = vmatpush.bf16.msra.mxu0 %v1336
        %1443 = vmatmul.bf16.gmra.mxu0 %v1392
        %v1444 = vpop.f32.mrf.mxu0
        %v1445 = vadd.f32 %v1426, %v1444
        %v1446 = vpop.f32.mrf.mxu0
        %v1447 = vadd.f32 %v1428, %v1446
        %1448 = vmatmul.bf16.gmra.mxu0 %v1395
        %v1449 = vpop.f32.mrf.mxu0
        %v1450 = vadd.f32 %v1431, %v1449
        %v1451 = vpop.f32.mrf.mxu0
        %v1452 = vadd.f32 %v1433, %v1451
        %1453 = vdwg.mxu0
        %1454 = vmatpush.bf16.msra.mxu0 %v1319
        %1455 = vmatpush.bf16.msra.mxu0 %v1317
        %1456 = vmatpush.bf16.msra.mxu0 %v1315
        %1457 = vmatpush.bf16.msra.mxu0 %v1313
        %1458 = vmatpush.bf16.msra.mxu0 %v1311
        %1459 = vmatpush.bf16.msra.mxu0 %v1309
        %1460 = vmatpush.bf16.msra.mxu0 %v1307
        %1461 = vmatpush.bf16.msra.mxu0 %v1305
        %1462 = vmatmul.bf16.gmra.mxu0 %v1380
        %v1463 = vpop.f32.mrf.mxu0
        %v1464 = vadd.f32 %v1343, %v1463
        %v1465 = vpop.f32.mrf.mxu0
        %v1466 = vadd.f32 %v1348, %v1465
        %1467 = vmatmul.bf16.gmra.mxu0 %v1383
        %v1468 = vpop.f32.mrf.mxu0
        %v1469 = vadd.f32 %v1353, %v1468
        %v1470 = vpop.f32.mrf.mxu0
        %v1471 = vadd.f32 %v1358, %v1470
        %1472 = vdwg.mxu0
        %1473 = vmatpush.bf16.msra.mxu0 %v1335
        %1474 = vmatpush.bf16.msra.mxu0 %v1333
        %1475 = vmatpush.bf16.msra.mxu0 %v1331
        %1476 = vmatpush.bf16.msra.mxu0 %v1329
        %1477 = vmatpush.bf16.msra.mxu0 %v1327
        %1478 = vmatpush.bf16.msra.mxu0 %v1325
        %1479 = vmatpush.bf16.msra.mxu0 %v1323
        %1480 = vmatpush.bf16.msra.mxu0 %v1321
        %1481 = vmatmul.bf16.gmra.mxu0 %v1381
        %v1482 = vpop.f32.mrf.mxu0
        %v1483 = vadd.f32 %v1464, %v1482
        %v1484 = vpop.f32.mrf.mxu0
        %v1485 = vadd.f32 %v1466, %v1484
        %1486 = vmatmul.bf16.gmra.mxu0 %v1384
        %v1487 = vpop.f32.mrf.mxu0
        %v1488 = vadd.f32 %v1469, %v1487
        %v1489 = vpop.f32.mrf.mxu0
        %v1490 = vadd.f32 %v1471, %v1489
        %1491 = vdwg.mxu0
        %1492 = vmatpush.bf16.msra.mxu0 0
        %1493 = vmatpush.bf16.msra.mxu0 0
        %1494 = vmatpush.bf16.msra.mxu0 0
        %1495 = vmatpush.bf16.msra.mxu0 0
        %1496 = vmatpush.bf16.msra.mxu0 0
        %1497 = vmatpush.bf16.msra.mxu0 0
        %1498 = vmatpush.bf16.msra.mxu0 %v1339
        %1499 = vmatpush.bf16.msra.mxu0 %v1337
        %1500 = vmatmul.bf16.gmra.mxu0 %v1392
        %v1501 = vpop.f32.mrf.mxu0
        %v1502 = vadd.f32 %v1483, %v1501
        %v1503 = vpop.f32.mrf.mxu0
        %v1504 = vadd.f32 %v1485, %v1503
        %1505 = vmatmul.bf16.gmra.mxu0 %v1395
        %v1506 = vpop.f32.mrf.mxu0
        %v1507 = vadd.f32 %v1488, %v1506
        %v1508 = vpop.f32.mrf.mxu0
        %v1509 = vadd.f32 %v1490, %v1508
        %1510 = vdwg.mxu0
        %s1511 = scalar_lea.vmem [#allocation7], 64
        %v1512 = vld [vmem:[%s1511] sm:$0xff]
        %v1513 = vld [vmem:[%s1511 + $0x8] sm:$0xff]
        %v1514 = vld [vmem:[%s1511 + $0x10] sm:$0xff]
        %v1515 = vld [vmem:[%s1511 + $0x18] sm:$0xff]
        %v1516 = vld [vmem:[%s1511 + $0x20] sm:$0xff]
        %v1517 = vld [vmem:[%s1511 + $0x28] sm:$0xff]
        %v1518 = vld [vmem:[%s1511 + $0x30] sm:$0xff]
        %v1519 = vld [vmem:[%s1511 + $0x38] sm:$0xff]
        %s1520 = scalar_lea.vmem [#allocation9], 64
        %v1521 = vld [vmem:[%s1520] sm:$0xff]
        %v1522 = vld [vmem:[%s1520 + $0x8] sm:$0xff]
        %v1523 = vld [vmem:[%s1520 + $0x10] sm:$0xff]
        %v1524 = vld [vmem:[%s1520 + $0x18] sm:$0xff]
        %v1525 = vld [vmem:[%s1520 + $0x20] sm:$0xff]
        %v1526 = vld [vmem:[%s1520 + $0x28] sm:$0xff]
        %v1527 = vld [vmem:[%s1520 + $0x30] sm:$0xff]
        %v1528 = vld [vmem:[%s1520 + $0x38] sm:$0xff]
        %v1529 = vadd.f32 %v1445, %v1502
        %v1530 = vadd.f32 %v1529, %v1447
        %v1531 = vadd.f32 %v1530, %v1504
        %v1532 = vadd.f32 %v1531, %v1450
        %v1533 = vadd.f32 %v1532, %v1507
        %v1534 = vadd.f32 %v1533, %v1452
        %v1535 = vadd.f32 %v1534, %v1509
        %1536 = vadd.xlane.f32.xlu0 %v1535
        %v1537 = vpop.xlane.xlu0 %1536
        %v1538 = vrot.slane %v1537, 4
        %v1539 = vadd.f32 %v1537, %v1538
        %v1540 = vrot.slane %v1539, 2
        %v1541 = vadd.f32 %v1539, %v1540
        %v1542 = vrot.slane %v1541, 1
        %v1543 = vadd.f32 %v1541, %v1542
        %s1544 = vtos %v1543
        %v1545 = vmul.f32 %v1445, %v1445
        %v1546 = vmul.f32 %v1502, %v1502
        %v1547 = vmul.f32 %v1447, %v1447
        %v1548 = vmul.f32 %v1504, %v1504
        %v1549 = vmul.f32 %v1450, %v1450
        %v1550 = vmul.f32 %v1507, %v1507
        %v1551 = vmul.f32 %v1452, %v1452
        %v1552 = vmul.f32 %v1509, %v1509
        %v1553 = vadd.f32 %v1545, %v1546
        %v1554 = vadd.f32 %v1553, %v1547
        %v1555 = vadd.f32 %v1554, %v1548
        %v1556 = vadd.f32 %v1555, %v1549
        %v1557 = vadd.f32 %v1556, %v1550
        %v1558 = vadd.f32 %v1557, %v1551
        %v1559 = vadd.f32 %v1558, %v1552
        %1560 = vadd.xlane.f32.xlu0 %v1559
        %v1561 = vpop.xlane.xlu0 %1560
        %v1562 = vrot.slane %v1561, 4
        %v1563 = vadd.f32 %v1561, %v1562
        %v1564 = vrot.slane %v1563, 2
        %v1565 = vadd.f32 %v1563, %v1564
        %v1566 = vrot.slane %v1565, 1
        %v1567 = vadd.f32 %v1565, %v1566
        %s1568 = vtos %v1567
        %v1569 = vrcp.pop 8192.0
        %v1570 = vmul.f32 8192.0, %v1569
        %v1571 = vsub.f32 1.0, %v1570
        %v1572 = vmul.f32 %v1569, %v1571
        %v1573 = vadd.f32 %v1569, %v1572
        %vm1574 = vweird.f32 %v1569
        %v1575 = vsel %vm1574, %v1569, %v1573
        %s1576 = vtos %v1575
        %s1577 = smul.f32 %s1544, %s1576
        %v1578 = vrcp.pop 8192.0
        %v1579 = vmul.f32 8192.0, %v1578
        %v1580 = vsub.f32 1.0, %v1579
        %v1581 = vmul.f32 %v1578, %v1580
        %v1582 = vadd.f32 %v1578, %v1581
        %vm1583 = vweird.f32 %v1578
        %v1584 = vsel %vm1583, %v1578, %v1582
        %s1585 = vtos %v1584
        %s1586 = smul.f32 %s1568, %s1585
        %s1587 = smul.f32 %s1577, %s1577
        %s1588 = ssub.f32 %s1586, %s1587
        %s1589 = sadd.f32 %s1588, 1e-05
        %v1590 = vstv %s1589
        %v1591 = vrsqrt.pop %v1590
        %v1592 = vmul.f32 %v1591, %v1590
        %v1593 = vmul.f32 %v1592, %v1591
        %v1594 = vmul.f32 0.5, %v1593
        %v1595 = vsub.f32 1.5, %v1594
        %v1596 = vmul.f32 %v1591, %v1595
        %vm1597 = vweird.f32 %v1590
        %vm1598 = vweird.f32 %v1591
        %vm1599 = vmor %vm1597, %vm1598
        %v1600 = vsel %vm1599, %v1591, %v1596
        %s1601 = vtos %v1600
        %v1602 = vstv %s1577
        %v1603 = vsub.f32 %v1445, %v1602
        %v1604 = vsub.f32 %v1502, %v1602
        %v1605 = vsub.f32 %v1447, %v1602
        %v1606 = vsub.f32 %v1504, %v1602
        %v1607 = vsub.f32 %v1450, %v1602
        %v1608 = vsub.f32 %v1507, %v1602
        %v1609 = vsub.f32 %v1452, %v1602
        %v1610 = vsub.f32 %v1509, %v1602
        %v1611 = vstv %s1601
        %v1612 = vmul.f32 %v1603, %v1611
        %v1613 = vmul.f32 %v1604, %v1611
        %v1614 = vmul.f32 %v1605, %v1611
        %v1615 = vmul.f32 %v1606, %v1611
        %v1616 = vmul.f32 %v1607, %v1611
        %v1617 = vmul.f32 %v1608, %v1611
        %v1618 = vmul.f32 %v1609, %v1611
        %v1619 = vmul.f32 %v1610, %v1611
        %v1620 = vmul.f32 %v1612, %v1512
        %v1621 = vmul.f32 %v1613, %v1513
        %v1622 = vmul.f32 %v1614, %v1514
        %v1623 = vmul.f32 %v1615, %v1515
        %v1624 = vmul.f32 %v1616, %v1516
        %v1625 = vmul.f32 %v1617, %v1517
        %v1626 = vmul.f32 %v1618, %v1518
        %v1627 = vmul.f32 %v1619, %v1519
        %v1628 = vadd.f32 %v1620, %v1521
        %v1629 = vadd.f32 %v1621, %v1522
        %v1630 = vadd.f32 %v1622, %v1523
        %v1631 = vadd.f32 %v1623, %v1524
        %v1632 = vadd.f32 %v1624, %v1525
        %v1633 = vadd.f32 %v1625, %v1526
        %v1634 = vadd.f32 %v1626, %v1527
        %v1635 = vadd.f32 %v1627, %v1528
        %v1636 = vmax.f32 %v1628, 0.0
        %v1637 = vmax.f32 %v1629, 0.0
        %v1638 = vmax.f32 %v1630, 0.0
        %v1639 = vmax.f32 %v1631, 0.0
        %v1640 = vmax.f32 %v1632, 0.0
        %v1641 = vmax.f32 %v1633, 0.0
        %v1642 = vmax.f32 %v1634, 0.0
        %v1643 = vmax.f32 %v1635, 0.0
        %s1644 = scalar_lea.vmem [#allocation4], 48
        %v1645 = vld [vmem:[%s1644] sm:$0xff]
        %v1646 = vld [vmem:[%s1644 + $0x8] sm:$0xf]
        %v1647 = vld [vmem:[%s1644 + $0xc] sm:$0xff]
        %v1648 = vld [vmem:[%s1644 + $0x14] sm:$0xf]
        %v1649 = vld [vmem:[%s1644 + $0x18] sm:$0xff]
        %v1650 = vld [vmem:[%s1644 + $0x20] sm:$0xf]
        %v1651 = vld [vmem:[%s1644 + $0x24] sm:$0xff]
        %v1652 = vld [vmem:[%s1644 + $0x2c] sm:$0xf]
        %s1653 = scalar_lea.vmem %s5, 32
        %v1654 = vld [vmem:[%s1653] sm:$0xff]
        %v1655 = vld [vmem:[%s1653 + $0x8] sm:$0xff]
        %v1656 = vld [vmem:[%s1653 + $0x10] sm:$0xff]
        %v1657 = vld [vmem:[%s1653 + $0x18] sm:$0xff]
        %1658 = vrot.lane.b32.xlu0 %v1636, 17
        %v1659 = vpop.permute.xlu0 %1658
        %1660 = vrot.lane.b32.xlu0 %v1638, 17
        %v1661 = vpop.permute.xlu0 %1660
        %1662 = vrot.lane.b32.xlu0 %v1640, 17
        %v1663 = vpop.permute.xlu0 %1662
        %1664 = vrot.lane.b32.xlu0 %v1642, 17
        %v1665 = vpop.permute.xlu0 %1664
        %1666 = vrot.lane.b32.xlu0 %v1637, 17
        %v1667 = vpop.permute.xlu0 %1666
        %1668 = vrot.lane.b32.xlu0 %v1639, 17
        %v1669 = vpop.permute.xlu0 %1668
        %1670 = vrot.lane.b32.xlu0 %v1641, 17
        %v1671 = vpop.permute.xlu0 %1670
        %1672 = vrot.lane.b32.xlu0 %v1643, 17
        %v1673 = vpop.permute.xlu0 %1672
        %v1674 = vsel %vm428, %v1659, %v1667
        %v1675 = vsel %vm428, %v1661, %v1669
        %v1676 = vsel %vm428, %v1663, %v1671
        %v1677 = vsel %vm428, %v1665, %v1673
        %v1678 = vsel %vm428, %v1667, %v1659
        %v1679 = vsel %vm428, %v1669, %v1661
        %v1680 = vsel %vm428, %v1671, %v1663
        %v1681 = vsel %vm428, %v1673, %v1665
        %v1682 = vld [vmem:[%s1] sm:$0x3]
        %v1684 = vperm.slane %v1682, 0
        %v1685 = vperm.slane %v1682, 1
        %v1688 = vmul.f32 %v1678, %v1684
        %v1689 = vmul.f32 %v1674, %v1685
        %v1690 = vmul.f32 %v1679, %v1684
        %v1691 = vmul.f32 %v1675, %v1685
        %v1692 = vmul.f32 %v1680, %v1684
        %v1693 = vmul.f32 %v1676, %v1685
        %v1694 = vmul.f32 %v1681, %v1684
        %v1695 = vmul.f32 %v1677, %v1685
        %1696 = vst [vmem:[#allocation2] sm:$0xff] %v1688
        %1697 = vst [vmem:[#allocation2 + $0x8] sm:$0xff] %v1689
        %1698 = vst [vmem:[#allocation2 + $0x10] sm:$0xff] %v1690
        %1699 = vst [vmem:[#allocation2 + $0x18] sm:$0xff] %v1691
        %1700 = vst [vmem:[#allocation2 + $0x20] sm:$0xff] %v1692
        %1701 = vst [vmem:[#allocation2 + $0x28] sm:$0xff] %v1693
        %1702 = vst [vmem:[#allocation2 + $0x30] sm:$0xff] %v1694
        %1703 = vst [vmem:[#allocation2 + $0x38] sm:$0xff] %v1695
        %1704 = vrot.lane.b32.xlu0 %v1636, 16
        %v1705 = vpop.permute.xlu0 %1704
        %1706 = vrot.lane.b32.xlu0 %v1638, 16
        %v1707 = vpop.permute.xlu0 %1706
        %1708 = vrot.lane.b32.xlu0 %v1640, 16
        %v1709 = vpop.permute.xlu0 %1708
        %1710 = vrot.lane.b32.xlu0 %v1642, 16
        %v1711 = vpop.permute.xlu0 %1710
        %1712 = vrot.lane.b32.xlu0 %v1637, 16
        %v1713 = vpop.permute.xlu0 %1712
        %1714 = vrot.lane.b32.xlu0 %v1639, 16
        %v1715 = vpop.permute.xlu0 %1714
        %1716 = vrot.lane.b32.xlu0 %v1641, 16
        %v1717 = vpop.permute.xlu0 %1716
        %1718 = vrot.lane.b32.xlu0 %v1643, 16
        %v1719 = vpop.permute.xlu0 %1718
        %v1720 = vsel %vm455, %v1705, %v1713
        %v1721 = vsel %vm455, %v1707, %v1715
        %v1722 = vsel %vm455, %v1709, %v1717
        %v1723 = vsel %vm455, %v1711, %v1719
        %v1724 = vsel %vm455, %v1713, %v1705
        %v1725 = vsel %vm455, %v1715, %v1707
        %v1726 = vsel %vm455, %v1717, %v1709
        %v1727 = vsel %vm455, %v1719, %v1711
        %v1728 = vld [vmem:[%s458] sm:$0x3]
        %v1730 = vperm.slane %v1728, 0
        %v1731 = vperm.slane %v1728, 1
        %v1734 = vmul.f32 %v1724, %v1730
        %v1735 = vmul.f32 %v1720, %v1731
        %v1736 = vmul.f32 %v1725, %v1730
        %v1737 = vmul.f32 %v1721, %v1731
        %v1738 = vmul.f32 %v1726, %v1730
        %v1739 = vmul.f32 %v1722, %v1731
        %v1740 = vmul.f32 %v1727, %v1730
        %v1741 = vmul.f32 %v1723, %v1731
        %1742 = vst [vmem:[#allocation2 + $0x40] sm:$0xff] %v1734
        %1743 = vst [vmem:[#allocation2 + $0x48] sm:$0xff] %v1735
        %1744 = vst [vmem:[#allocation2 + $0x50] sm:$0xff] %v1736
        %1745 = vst [vmem:[#allocation2 + $0x58] sm:$0xff] %v1737
        %1746 = vst [vmem:[#allocation2 + $0x60] sm:$0xff] %v1738
        %1747 = vst [vmem:[#allocation2 + $0x68] sm:$0xff] %v1739
        %1748 = vst [vmem:[#allocation2 + $0x70] sm:$0xff] %v1740
        %1749 = vst [vmem:[#allocation2 + $0x78] sm:$0xff] %v1741
        %1750 = vrot.lane.b32.xlu0 %v1636, 15
        %v1751 = vpop.permute.xlu0 %1750
        %1752 = vrot.lane.b32.xlu0 %v1638, 15
        %v1753 = vpop.permute.xlu0 %1752
        %1754 = vrot.lane.b32.xlu0 %v1640, 15
        %v1755 = vpop.permute.xlu0 %1754
        %1756 = vrot.lane.b32.xlu0 %v1642, 15
        %v1757 = vpop.permute.xlu0 %1756
        %1758 = vrot.lane.b32.xlu0 %v1637, 15
        %v1759 = vpop.permute.xlu0 %1758
        %1760 = vrot.lane.b32.xlu0 %v1639, 15
        %v1761 = vpop.permute.xlu0 %1760
        %1762 = vrot.lane.b32.xlu0 %v1641, 15
        %v1763 = vpop.permute.xlu0 %1762
        %1764 = vrot.lane.b32.xlu0 %v1643, 15
        %v1765 = vpop.permute.xlu0 %1764
        %v1766 = vsel %vm479, %v1751, %v1759
        %v1767 = vsel %vm479, %v1753, %v1761
        %v1768 = vsel %vm479, %v1755, %v1763
        %v1769 = vsel %vm479, %v1757, %v1765
        %v1770 = vsel %vm479, %v1759, %v1751
        %v1771 = vsel %vm479, %v1761, %v1753
        %v1772 = vsel %vm479, %v1763, %v1755
        %v1773 = vsel %vm479, %v1765, %v1757
        %v1774 = vld [vmem:[%s482] sm:$0x3]
        %v1776 = vperm.slane %v1774, 0
        %v1777 = vperm.slane %v1774, 1
        %v1780 = vmul.f32 %v1770, %v1776
        %v1781 = vmul.f32 %v1766, %v1777
        %v1782 = vmul.f32 %v1771, %v1776
        %v1783 = vmul.f32 %v1767, %v1777
        %v1784 = vmul.f32 %v1772, %v1776
        %v1785 = vmul.f32 %v1768, %v1777
        %v1786 = vmul.f32 %v1773, %v1776
        %v1787 = vmul.f32 %v1769, %v1777
        %1788 = vst [vmem:[#allocation2 + $0x80] sm:$0xff] %v1780
        %1789 = vst [vmem:[#allocation2 + $0x88] sm:$0xff] %v1781
        %1790 = vst [vmem:[#allocation2 + $0x90] sm:$0xff] %v1782
        %1791 = vst [vmem:[#allocation2 + $0x98] sm:$0xff] %v1783
        %1792 = vst [vmem:[#allocation2 + $0xa0] sm:$0xff] %v1784
        %1793 = vst [vmem:[#allocation2 + $0xa8] sm:$0xff] %v1785
        %1794 = vst [vmem:[#allocation2 + $0xb0] sm:$0xff] %v1786
        %1795 = vst [vmem:[#allocation2 + $0xb8] sm:$0xff] %v1787
        %1796 = vrot.lane.b32.xlu0 %v1636, 1
        %v1797 = vpop.permute.xlu0 %1796
        %1798 = vrot.lane.b32.xlu0 %v1638, 1
        %v1799 = vpop.permute.xlu0 %1798
        %1800 = vrot.lane.b32.xlu0 %v1640, 1
        %v1801 = vpop.permute.xlu0 %1800
        %1802 = vrot.lane.b32.xlu0 %v1642, 1
        %v1803 = vpop.permute.xlu0 %1802
        %1804 = vrot.lane.b32.xlu0 %v1637, 1
        %v1805 = vpop.permute.xlu0 %1804
        %1806 = vrot.lane.b32.xlu0 %v1639, 1
        %v1807 = vpop.permute.xlu0 %1806
        %1808 = vrot.lane.b32.xlu0 %v1641, 1
        %v1809 = vpop.permute.xlu0 %1808
        %1810 = vrot.lane.b32.xlu0 %v1643, 1
        %v1811 = vpop.permute.xlu0 %1810
        %v1812 = vsel %vm503, %v1797, %v1805
        %v1813 = vsel %vm503, %v1799, %v1807
        %v1814 = vsel %vm503, %v1801, %v1809
        %v1815 = vsel %vm503, %v1803, %v1811
        %v1816 = vsel %vm503, %v1805, %v1797
        %v1817 = vsel %vm503, %v1807, %v1799
        %v1818 = vsel %vm503, %v1809, %v1801
        %v1819 = vsel %vm503, %v1811, %v1803
        %v1820 = vld [vmem:[%s506] sm:$0x3]
        %v1822 = vperm.slane %v1820, 0
        %v1823 = vperm.slane %v1820, 1
        %v1826 = vmul.f32 %v1816, %v1822
        %v1827 = vmul.f32 %v1812, %v1823
        %v1828 = vmul.f32 %v1817, %v1822
        %v1829 = vmul.f32 %v1813, %v1823
        %v1830 = vmul.f32 %v1818, %v1822
        %v1831 = vmul.f32 %v1814, %v1823
        %v1832 = vmul.f32 %v1819, %v1822
        %v1833 = vmul.f32 %v1815, %v1823
        %1834 = vst [vmem:[#allocation2 + $0xc0] sm:$0xff] %v1826
        %1835 = vst [vmem:[#allocation2 + $0xc8] sm:$0xff] %v1827
        %1836 = vst [vmem:[#allocation2 + $0xd0] sm:$0xff] %v1828
        %1837 = vst [vmem:[#allocation2 + $0xd8] sm:$0xff] %v1829
        %1838 = vst [vmem:[#allocation2 + $0xe0] sm:$0xff] %v1830
        %1839 = vst [vmem:[#allocation2 + $0xe8] sm:$0xff] %v1831
        %1840 = vst [vmem:[#allocation2 + $0xf0] sm:$0xff] %v1832
        %1841 = vst [vmem:[#allocation2 + $0xf8] sm:$0xff] %v1833
        %1842 = vst [vmem:[#allocation2 + $0x100] sm:$0xff] %v1636
        %1843 = vst [vmem:[#allocation2 + $0x108] sm:$0xff] %v1637
        %1844 = vst [vmem:[#allocation2 + $0x110] sm:$0xff] %v1638
        %1845 = vst [vmem:[#allocation2 + $0x118] sm:$0xff] %v1639
        %1846 = vst [vmem:[#allocation2 + $0x120] sm:$0xff] %v1640
        %1847 = vst [vmem:[#allocation2 + $0x128] sm:$0xff] %v1641
        %1848 = vst [vmem:[#allocation2 + $0x130] sm:$0xff] %v1642
        %1849 = vst [vmem:[#allocation2 + $0x138] sm:$0xff] %v1643
        %1850 = vrot.lane.b32.xlu0 %v1636, 127
        %v1851 = vpop.permute.xlu0 %1850
        %1852 = vrot.lane.b32.xlu0 %v1638, 127
        %v1853 = vpop.permute.xlu0 %1852
        %1854 = vrot.lane.b32.xlu0 %v1640, 127
        %v1855 = vpop.permute.xlu0 %1854
        %1856 = vrot.lane.b32.xlu0 %v1642, 127
        %v1857 = vpop.permute.xlu0 %1856
        %1858 = vrot.lane.b32.xlu0 %v1637, 127
        %v1859 = vpop.permute.xlu0 %1858
        %1860 = vrot.lane.b32.xlu0 %v1639, 127
        %v1861 = vpop.permute.xlu0 %1860
        %1862 = vrot.lane.b32.xlu0 %v1641, 127
        %v1863 = vpop.permute.xlu0 %1862
        %1864 = vrot.lane.b32.xlu0 %v1643, 127
        %v1865 = vpop.permute.xlu0 %1864
        %v1866 = vsel %vm530, %v1851, %v1859
        %v1867 = vsel %vm530, %v1853, %v1861
        %v1868 = vsel %vm530, %v1855, %v1863
        %v1869 = vsel %vm530, %v1857, %v1865
        %v1870 = vsel %vm530, %v1859, %v1851
        %v1871 = vsel %vm530, %v1861, %v1853
        %v1872 = vsel %vm530, %v1863, %v1855
        %v1873 = vsel %vm530, %v1865, %v1857
        %v1874 = vld [vmem:[%s533] sm:$0x3]
        %v1876 = vperm.slane %v1874, 0
        %v1877 = vperm.slane %v1874, 1
        %v1880 = vmul.f32 %v1866, %v1876
        %v1881 = vmul.f32 %v1870, %v1877
        %v1882 = vmul.f32 %v1867, %v1876
        %v1883 = vmul.f32 %v1871, %v1877
        %v1884 = vmul.f32 %v1868, %v1876
        %v1885 = vmul.f32 %v1872, %v1877
        %v1886 = vmul.f32 %v1869, %v1876
        %v1887 = vmul.f32 %v1873, %v1877
        %1888 = vst [vmem:[#allocation2 + $0x140] sm:$0xff] %v1880
        %1889 = vst [vmem:[#allocation2 + $0x148] sm:$0xff] %v1881
        %1890 = vst [vmem:[#allocation2 + $0x150] sm:$0xff] %v1882
        %1891 = vst [vmem:[#allocation2 + $0x158] sm:$0xff] %v1883
        %1892 = vst [vmem:[#allocation2 + $0x160] sm:$0xff] %v1884
        %1893 = vst [vmem:[#allocation2 + $0x168] sm:$0xff] %v1885
        %1894 = vst [vmem:[#allocation2 + $0x170] sm:$0xff] %v1886
        %1895 = vst [vmem:[#allocation2 + $0x178] sm:$0xff] %v1887
        %1896 = vrot.lane.b32.xlu0 %v1636, 113
        %v1897 = vpop.permute.xlu0 %1896
        %1898 = vrot.lane.b32.xlu0 %v1638, 113
        %v1899 = vpop.permute.xlu0 %1898
        %1900 = vrot.lane.b32.xlu0 %v1640, 113
        %v1901 = vpop.permute.xlu0 %1900
        %1902 = vrot.lane.b32.xlu0 %v1642, 113
        %v1903 = vpop.permute.xlu0 %1902
        %1904 = vrot.lane.b32.xlu0 %v1637, 113
        %v1905 = vpop.permute.xlu0 %1904
        %1906 = vrot.lane.b32.xlu0 %v1639, 113
        %v1907 = vpop.permute.xlu0 %1906
        %1908 = vrot.lane.b32.xlu0 %v1641, 113
        %v1909 = vpop.permute.xlu0 %1908
        %1910 = vrot.lane.b32.xlu0 %v1643, 113
        %v1911 = vpop.permute.xlu0 %1910
        %v1912 = vsel %vm554, %v1897, %v1905
        %v1913 = vsel %vm554, %v1899, %v1907
        %v1914 = vsel %vm554, %v1901, %v1909
        %v1915 = vsel %vm554, %v1903, %v1911
        %v1916 = vsel %vm554, %v1905, %v1897
        %v1917 = vsel %vm554, %v1907, %v1899
        %v1918 = vsel %vm554, %v1909, %v1901
        %v1919 = vsel %vm554, %v1911, %v1903
        %v1920 = vld [vmem:[%s557] sm:$0x3]
        %v1922 = vperm.slane %v1920, 0
        %v1923 = vperm.slane %v1920, 1
        %v1926 = vmul.f32 %v1912, %v1922
        %v1927 = vmul.f32 %v1916, %v1923
        %v1928 = vmul.f32 %v1913, %v1922
        %v1929 = vmul.f32 %v1917, %v1923
        %v1930 = vmul.f32 %v1914, %v1922
        %v1931 = vmul.f32 %v1918, %v1923
        %v1932 = vmul.f32 %v1915, %v1922
        %v1933 = vmul.f32 %v1919, %v1923
        %1934 = vst [vmem:[#allocation2 + $0x180] sm:$0xff] %v1926
        %1935 = vst [vmem:[#allocation2 + $0x188] sm:$0xff] %v1927
        %1936 = vst [vmem:[#allocation2 + $0x190] sm:$0xff] %v1928
        %1937 = vst [vmem:[#allocation2 + $0x198] sm:$0xff] %v1929
        %1938 = vst [vmem:[#allocation2 + $0x1a0] sm:$0xff] %v1930
        %1939 = vst [vmem:[#allocation2 + $0x1a8] sm:$0xff] %v1931
        %1940 = vst [vmem:[#allocation2 + $0x1b0] sm:$0xff] %v1932
        %1941 = vst [vmem:[#allocation2 + $0x1b8] sm:$0xff] %v1933
        %1942 = vrot.lane.b32.xlu0 %v1636, 112
        %v1943 = vpop.permute.xlu0 %1942
        %1944 = vrot.lane.b32.xlu0 %v1638, 112
        %v1945 = vpop.permute.xlu0 %1944
        %1946 = vrot.lane.b32.xlu0 %v1640, 112
        %v1947 = vpop.permute.xlu0 %1946
        %1948 = vrot.lane.b32.xlu0 %v1642, 112
        %v1949 = vpop.permute.xlu0 %1948
        %1950 = vrot.lane.b32.xlu0 %v1637, 112
        %v1951 = vpop.permute.xlu0 %1950
        %1952 = vrot.lane.b32.xlu0 %v1639, 112
        %v1953 = vpop.permute.xlu0 %1952
        %1954 = vrot.lane.b32.xlu0 %v1641, 112
        %v1955 = vpop.permute.xlu0 %1954
        %1956 = vrot.lane.b32.xlu0 %v1643, 112
        %v1957 = vpop.permute.xlu0 %1956
        %v1958 = vsel %vm578, %v1943, %v1951
        %v1959 = vsel %vm578, %v1945, %v1953
        %v1960 = vsel %vm578, %v1947, %v1955
        %v1961 = vsel %vm578, %v1949, %v1957
        %v1962 = vsel %vm578, %v1951, %v1943
        %v1963 = vsel %vm578, %v1953, %v1945
        %v1964 = vsel %vm578, %v1955, %v1947
        %v1965 = vsel %vm578, %v1957, %v1949
        %v1966 = vld [vmem:[%s581] sm:$0x3]
        %v1968 = vperm.slane %v1966, 0
        %v1969 = vperm.slane %v1966, 1
        %v1972 = vmul.f32 %v1958, %v1968
        %v1973 = vmul.f32 %v1962, %v1969
        %v1974 = vmul.f32 %v1959, %v1968
        %v1975 = vmul.f32 %v1963, %v1969
        %v1976 = vmul.f32 %v1960, %v1968
        %v1977 = vmul.f32 %v1964, %v1969
        %v1978 = vmul.f32 %v1961, %v1968
        %v1979 = vmul.f32 %v1965, %v1969
        %1980 = vst [vmem:[#allocation2 + $0x1c0] sm:$0xff] %v1972
        %1981 = vst [vmem:[#allocation2 + $0x1c8] sm:$0xff] %v1973
        %1982 = vst [vmem:[#allocation2 + $0x1d0] sm:$0xff] %v1974
        %1983 = vst [vmem:[#allocation2 + $0x1d8] sm:$0xff] %v1975
        %1984 = vst [vmem:[#allocation2 + $0x1e0] sm:$0xff] %v1976
        %1985 = vst [vmem:[#allocation2 + $0x1e8] sm:$0xff] %v1977
        %1986 = vst [vmem:[#allocation2 + $0x1f0] sm:$0xff] %v1978
        %1987 = vst [vmem:[#allocation2 + $0x1f8] sm:$0xff] %v1979
        %1988 = vrot.lane.b32.xlu0 %v1636, 111
        %v1989 = vpop.permute.xlu0 %1988
        %1990 = vrot.lane.b32.xlu0 %v1638, 111
        %v1991 = vpop.permute.xlu0 %1990
        %1992 = vrot.lane.b32.xlu0 %v1640, 111
        %v1993 = vpop.permute.xlu0 %1992
        %1994 = vrot.lane.b32.xlu0 %v1642, 111
        %v1995 = vpop.permute.xlu0 %1994
        %1996 = vrot.lane.b32.xlu0 %v1637, 111
        %v1997 = vpop.permute.xlu0 %1996
        %1998 = vrot.lane.b32.xlu0 %v1639, 111
        %v1999 = vpop.permute.xlu0 %1998
        %2000 = vrot.lane.b32.xlu0 %v1641, 111
        %v2001 = vpop.permute.xlu0 %2000
        %2002 = vrot.lane.b32.xlu0 %v1643, 111
        %v2003 = vpop.permute.xlu0 %2002
        %v2004 = vsel %vm602, %v1989, %v1997
        %v2005 = vsel %vm602, %v1991, %v1999
        %v2006 = vsel %vm602, %v1993, %v2001
        %v2007 = vsel %vm602, %v1995, %v2003
        %v2008 = vsel %vm602, %v1997, %v1989
        %v2009 = vsel %vm602, %v1999, %v1991
        %v2010 = vsel %vm602, %v2001, %v1993
        %v2011 = vsel %vm602, %v2003, %v1995
        %v2012 = vld [vmem:[%s605] sm:$0x3]
        %v2014 = vperm.slane %v2012, 0
        %v2015 = vperm.slane %v2012, 1
        %v2018 = vmul.f32 %v2004, %v2014
        %v2019 = vmul.f32 %v2008, %v2015
        %v2020 = vmul.f32 %v2005, %v2014
        %v2021 = vmul.f32 %v2009, %v2015
        %v2022 = vmul.f32 %v2006, %v2014
        %v2023 = vmul.f32 %v2010, %v2015
        %v2024 = vmul.f32 %v2007, %v2014
        %v2025 = vmul.f32 %v2011, %v2015
        %2026 = vst [vmem:[#allocation2 + $0x200] sm:$0xff] %v2018
        %2027 = vst [vmem:[#allocation2 + $0x208] sm:$0xff] %v2019
        %2028 = vst [vmem:[#allocation2 + $0x210] sm:$0xff] %v2020
        %2029 = vst [vmem:[#allocation2 + $0x218] sm:$0xff] %v2021
        %2030 = vst [vmem:[#allocation2 + $0x220] sm:$0xff] %v2022
        %2031 = vst [vmem:[#allocation2 + $0x228] sm:$0xff] %v2023
        %2032 = vst [vmem:[#allocation2 + $0x230] sm:$0xff] %v2024
        %2033 = vst [vmem:[#allocation2 + $0x238] sm:$0xff] %v2025
        %v2034 = vld [vmem:[#allocation2] sm:$0xff]
        %v2035 = vld [vmem:[#allocation2 + $0x8] sm:$0xff]
        %v2036 = vld [vmem:[#allocation2 + $0x10] sm:$0xff]
        %v2037 = vld [vmem:[#allocation2 + $0x18] sm:$0xff]
        %v2038 = vld [vmem:[#allocation2 + $0x20] sm:$0xff]
        %v2039 = vld [vmem:[#allocation2 + $0x28] sm:$0xff]
        %v2040 = vld [vmem:[#allocation2 + $0x30] sm:$0xff]
        %v2041 = vld [vmem:[#allocation2 + $0x38] sm:$0xff]
        %v2042 = vld [vmem:[#allocation2 + $0x40] sm:$0xff]
        %v2043 = vld [vmem:[#allocation2 + $0x48] sm:$0xff]
        %v2044 = vld [vmem:[#allocation2 + $0x50] sm:$0xff]
        %v2045 = vld [vmem:[#allocation2 + $0x58] sm:$0xff]
        %v2046 = vld [vmem:[#allocation2 + $0x60] sm:$0xff]
        %v2047 = vld [vmem:[#allocation2 + $0x68] sm:$0xff]
        %v2048 = vld [vmem:[#allocation2 + $0x70] sm:$0xff]
        %v2049 = vld [vmem:[#allocation2 + $0x78] sm:$0xff]
        %v2050 = vld [vmem:[#allocation2 + $0x80] sm:$0xff]
        %v2051 = vld [vmem:[#allocation2 + $0x88] sm:$0xff]
        %v2052 = vld [vmem:[#allocation2 + $0x90] sm:$0xff]
        %v2053 = vld [vmem:[#allocation2 + $0x98] sm:$0xff]
        %v2054 = vld [vmem:[#allocation2 + $0xa0] sm:$0xff]
        %v2055 = vld [vmem:[#allocation2 + $0xa8] sm:$0xff]
        %v2056 = vld [vmem:[#allocation2 + $0xb0] sm:$0xff]
        %v2057 = vld [vmem:[#allocation2 + $0xb8] sm:$0xff]
        %v2058 = vld [vmem:[#allocation2 + $0xc0] sm:$0xff]
        %v2059 = vld [vmem:[#allocation2 + $0xc8] sm:$0xff]
        %v2060 = vld [vmem:[#allocation2 + $0xd0] sm:$0xff]
        %v2061 = vld [vmem:[#allocation2 + $0xd8] sm:$0xff]
        %v2062 = vld [vmem:[#allocation2 + $0xe0] sm:$0xff]
        %v2063 = vld [vmem:[#allocation2 + $0xe8] sm:$0xff]
        %v2064 = vld [vmem:[#allocation2 + $0xf0] sm:$0xff]
        %v2065 = vld [vmem:[#allocation2 + $0xf8] sm:$0xff]
        %v2066 = vld [vmem:[#allocation2 + $0x100] sm:$0xff]
        %v2067 = vld [vmem:[#allocation2 + $0x108] sm:$0xff]
        %v2068 = vld [vmem:[#allocation2 + $0x110] sm:$0xff]
        %v2069 = vld [vmem:[#allocation2 + $0x118] sm:$0xff]
        %v2070 = vld [vmem:[#allocation2 + $0x120] sm:$0xff]
        %v2071 = vld [vmem:[#allocation2 + $0x128] sm:$0xff]
        %v2072 = vld [vmem:[#allocation2 + $0x130] sm:$0xff]
        %v2073 = vld [vmem:[#allocation2 + $0x138] sm:$0xff]
        %v2074 = vld [vmem:[#allocation2 + $0x140] sm:$0xff]
        %v2075 = vld [vmem:[#allocation2 + $0x148] sm:$0xff]
        %v2076 = vld [vmem:[#allocation2 + $0x150] sm:$0xff]
        %v2077 = vld [vmem:[#allocation2 + $0x158] sm:$0xff]
        %v2078 = vld [vmem:[#allocation2 + $0x160] sm:$0xff]
        %v2079 = vld [vmem:[#allocation2 + $0x168] sm:$0xff]
        %v2080 = vld [vmem:[#allocation2 + $0x170] sm:$0xff]
        %v2081 = vld [vmem:[#allocation2 + $0x178] sm:$0xff]
        %v2082 = vld [vmem:[#allocation2 + $0x180] sm:$0xff]
        %v2083 = vld [vmem:[#allocation2 + $0x188] sm:$0xff]
        %v2084 = vld [vmem:[#allocation2 + $0x190] sm:$0xff]
        %v2085 = vld [vmem:[#allocation2 + $0x198] sm:$0xff]
        %v2086 = vld [vmem:[#allocation2 + $0x1a0] sm:$0xff]
        %v2087 = vld [vmem:[#allocation2 + $0x1a8] sm:$0xff]
        %v2088 = vld [vmem:[#allocation2 + $0x1b0] sm:$0xff]
        %v2089 = vld [vmem:[#allocation2 + $0x1b8] sm:$0xff]
        %v2090 = vld [vmem:[#allocation2 + $0x1c0] sm:$0xff]
        %v2091 = vld [vmem:[#allocation2 + $0x1c8] sm:$0xff]
        %v2092 = vld [vmem:[#allocation2 + $0x1d0] sm:$0xff]
        %v2093 = vld [vmem:[#allocation2 + $0x1d8] sm:$0xff]
        %v2094 = vld [vmem:[#allocation2 + $0x1e0] sm:$0xff]
        %v2095 = vld [vmem:[#allocation2 + $0x1e8] sm:$0xff]
        %v2096 = vld [vmem:[#allocation2 + $0x1f0] sm:$0xff]
        %v2097 = vld [vmem:[#allocation2 + $0x1f8] sm:$0xff]
        %v2098 = vld [vmem:[#allocation2 + $0x200] sm:$0xff]
        %v2099 = vld [vmem:[#allocation2 + $0x208] sm:$0xff]
        %v2100 = vld [vmem:[#allocation2 + $0x210] sm:$0xff]
        %v2101 = vld [vmem:[#allocation2 + $0x218] sm:$0xff]
        %v2102 = vld [vmem:[#allocation2 + $0x220] sm:$0xff]
        %v2103 = vld [vmem:[#allocation2 + $0x228] sm:$0xff]
        %v2104 = vld [vmem:[#allocation2 + $0x230] sm:$0xff]
        %v2105 = vld [vmem:[#allocation2 + $0x238] sm:$0xff]
        %v2106 = vpack.c.bf16 %v2036, %v2034
        %v2107 = vpack.c.bf16 %v2037, %v2035
        %v2108 = vpack.c.bf16 %v2040, %v2038
        %v2109 = vpack.c.bf16 %v2041, %v2039
        %v2110 = vpack.c.bf16 %v2044, %v2042
        %v2111 = vpack.c.bf16 %v2045, %v2043
        %v2112 = vpack.c.bf16 %v2048, %v2046
        %v2113 = vpack.c.bf16 %v2049, %v2047
        %v2114 = vpack.c.bf16 %v2052, %v2050
        %v2115 = vpack.c.bf16 %v2053, %v2051
        %v2116 = vpack.c.bf16 %v2056, %v2054
        %v2117 = vpack.c.bf16 %v2057, %v2055
        %v2118 = vpack.c.bf16 %v2060, %v2058
        %v2119 = vpack.c.bf16 %v2061, %v2059
        %v2120 = vpack.c.bf16 %v2064, %v2062
        %v2121 = vpack.c.bf16 %v2065, %v2063
        %v2122 = vpack.c.bf16 %v2068, %v2066
        %v2123 = vpack.c.bf16 %v2069, %v2067
        %v2124 = vpack.c.bf16 %v2072, %v2070
        %v2125 = vpack.c.bf16 %v2073, %v2071
        %v2126 = vpack.c.bf16 %v2076, %v2074
        %v2127 = vpack.c.bf16 %v2077, %v2075
        %v2128 = vpack.c.bf16 %v2080, %v2078
        %v2129 = vpack.c.bf16 %v2081, %v2079
        %v2130 = vpack.c.bf16 %v2084, %v2082
        %v2131 = vpack.c.bf16 %v2085, %v2083
        %v2132 = vpack.c.bf16 %v2088, %v2086
        %v2133 = vpack.c.bf16 %v2089, %v2087
        %v2134 = vpack.c.bf16 %v2092, %v2090
        %v2135 = vpack.c.bf16 %v2093, %v2091
        %v2136 = vpack.c.bf16 %v2096, %v2094
        %v2137 = vpack.c.bf16 %v2097, %v2095
        %v2138 = vpack.c.bf16 %v2100, %v2098
        %v2139 = vpack.c.bf16 %v2101, %v2099
        %v2140 = vpack.c.bf16 %v2104, %v2102
        %v2141 = vpack.c.bf16 %v2105, %v2103
        %2143 = vset.pattern.permute.xlu0 0
        %2144 = vperm.xlu0 %2143, %v1654
        %v2145 = vpop.permute.xlu0 %2144
        %2148 = vset.pattern.permute.xlu0 0
        %2149 = vperm.xlu0 %2148, %v1655
        %v2150 = vpop.permute.xlu0 %2149
        %2153 = vset.pattern.permute.xlu0 0
        %2154 = vperm.xlu0 %2153, %v1656
        %v2155 = vpop.permute.xlu0 %2154
        %2158 = vset.pattern.permute.xlu0 0
        %2159 = vperm.xlu0 %2158, %v1657
        %v2160 = vpop.permute.xlu0 %2159
        %v2170 = vunpack.c.l.b16 %v1645
        %v2171 = vunpack.c.h.b16 %v1645
        %v2172 = vunpack.c.l.b16 %v1646
        %v2173 = vunpack.c.l.b16 %v1647
        %v2174 = vunpack.c.h.b16 %v1647
        %v2175 = vunpack.c.l.b16 %v1648
        %v2176 = vunpack.c.l.b16 %v1649
        %v2177 = vunpack.c.h.b16 %v1649
        %v2178 = vunpack.c.l.b16 %v1650
        %v2179 = vunpack.c.l.b16 %v1651
        %v2180 = vunpack.c.h.b16 %v1651
        %v2181 = vunpack.c.l.b16 %v1652
        %v2182 = vpack.c.b16 %v2173, %v2170
        %v2183 = vpack.c.b16 %v2174, %v2171
        %v2184 = vpack.c.b16 %v2175, %v2172
        %v2185 = vpack.c.b16 %v2179, %v2176
        %v2186 = vpack.c.b16 %v2180, %v2177
        %v2187 = vpack.c.b16 %v2181, %v2178
        %v2193 = vsel %vm1390, %v2184, 0
        %v2196 = vsel %vm1390, %v2187, 0
        %2198 = vmatpush.bf16.msra.mxu0 %v2120
        %2199 = vmatpush.bf16.msra.mxu0 %v2118
        %2200 = vmatpush.bf16.msra.mxu0 %v2116
        %2201 = vmatpush.bf16.msra.mxu0 %v2114
        %2202 = vmatpush.bf16.msra.mxu0 %v2112
        %2203 = vmatpush.bf16.msra.mxu0 %v2110
        %2204 = vmatpush.bf16.msra.mxu0 %v2108
        %2205 = vmatpush.bf16.msra.mxu0 %v2106
        %2206 = vmatmul.bf16.gmra.mxu0 %v2182
        %v2207 = vpop.f32.mrf.mxu0
        %v2208 = vadd.f32 %v2145, %v2207
        %v2209 = vpop.f32.mrf.mxu0
        %v2210 = vadd.f32 %v2150, %v2209
        %2211 = vmatmul.bf16.gmra.mxu0 %v2185
        %v2212 = vpop.f32.mrf.mxu0
        %v2213 = vadd.f32 %v2155, %v2212
        %v2214 = vpop.f32.mrf.mxu0
        %v2215 = vadd.f32 %v2160, %v2214
        %2216 = vdwg.mxu0
        %2217 = vmatpush.bf16.msra.mxu0 %v2136
        %2218 = vmatpush.bf16.msra.mxu0 %v2134
        %2219 = vmatpush.bf16.msra.mxu0 %v2132
        %2220 = vmatpush.bf16.msra.mxu0 %v2130
        %2221 = vmatpush.bf16.msra.mxu0 %v2128
        %2222 = vmatpush.bf16.msra.mxu0 %v2126
        %2223 = vmatpush.bf16.msra.mxu0 %v2124
        %2224 = vmatpush.bf16.msra.mxu0 %v2122
        %2225 = vmatmul.bf16.gmra.mxu0 %v2183
        %v2226 = vpop.f32.mrf.mxu0
        %v2227 = vadd.f32 %v2208, %v2226
        %v2228 = vpop.f32.mrf.mxu0
        %v2229 = vadd.f32 %v2210, %v2228
        %2230 = vmatmul.bf16.gmra.mxu0 %v2186
        %v2231 = vpop.f32.mrf.mxu0
        %v2232 = vadd.f32 %v2213, %v2231
        %v2233 = vpop.f32.mrf.mxu0
        %v2234 = vadd.f32 %v2215, %v2233
        %2235 = vdwg.mxu0
        %2236 = vmatpush.bf16.msra.mxu0 0
        %2237 = vmatpush.bf16.msra.mxu0 0
        %2238 = vmatpush.bf16.msra.mxu0 0
        %2239 = vmatpush.bf16.msra.mxu0 0
        %2240 = vmatpush.bf16.msra.mxu0 0
        %2241 = vmatpush.bf16.msra.mxu0 0
        %2242 = vmatpush.bf16.msra.mxu0 %v2140
        %2243 = vmatpush.bf16.msra.mxu0 %v2138
        %2244 = vmatmul.bf16.gmra.mxu0 %v2193
        %v2245 = vpop.f32.mrf.mxu0
        %v2246 = vadd.f32 %v2227, %v2245
        %v2247 = vpop.f32.mrf.mxu0
        %v2248 = vadd.f32 %v2229, %v2247
        %2249 = vmatmul.bf16.gmra.mxu0 %v2196
        %v2250 = vpop.f32.mrf.mxu0
        %v2251 = vadd.f32 %v2232, %v2250
        %v2252 = vpop.f32.mrf.mxu0
        %v2253 = vadd.f32 %v2234, %v2252
        %2254 = vdwg.mxu0
        %2255 = vmatpush.bf16.msra.mxu0 %v2121
        %2256 = vmatpush.bf16.msra.mxu0 %v2119
        %2257 = vmatpush.bf16.msra.mxu0 %v2117
        %2258 = vmatpush.bf16.msra.mxu0 %v2115
        %2259 = vmatpush.bf16.msra.mxu0 %v2113
        %2260 = vmatpush.bf16.msra.mxu0 %v2111
        %2261 = vmatpush.bf16.msra.mxu0 %v2109
        %2262 = vmatpush.bf16.msra.mxu0 %v2107
        %2263 = vmatmul.bf16.gmra.mxu0 %v2182
        %v2264 = vpop.f32.mrf.mxu0
        %v2265 = vadd.f32 %v2145, %v2264
        %v2266 = vpop.f32.mrf.mxu0
        %v2267 = vadd.f32 %v2150, %v2266
        %2268 = vmatmul.bf16.gmra.mxu0 %v2185
        %v2269 = vpop.f32.mrf.mxu0
        %v2270 = vadd.f32 %v2155, %v2269
        %v2271 = vpop.f32.mrf.mxu0
        %v2272 = vadd.f32 %v2160, %v2271
        %2273 = vdwg.mxu0
        %2274 = vmatpush.bf16.msra.mxu0 %v2137
        %2275 = vmatpush.bf16.msra.mxu0 %v2135
        %2276 = vmatpush.bf16.msra.mxu0 %v2133
        %2277 = vmatpush.bf16.msra.mxu0 %v2131
        %2278 = vmatpush.bf16.msra.mxu0 %v2129
        %2279 = vmatpush.bf16.msra.mxu0 %v2127
        %2280 = vmatpush.bf16.msra.mxu0 %v2125
        %2281 = vmatpush.bf16.msra.mxu0 %v2123
        %2282 = vmatmul.bf16.gmra.mxu0 %v2183
        %v2283 = vpop.f32.mrf.mxu0
        %v2284 = vadd.f32 %v2265, %v2283
        %v2285 = vpop.f32.mrf.mxu0
        %v2286 = vadd.f32 %v2267, %v2285
        %2287 = vmatmul.bf16.gmra.mxu0 %v2186
        %v2288 = vpop.f32.mrf.mxu0
        %v2289 = vadd.f32 %v2270, %v2288
        %v2290 = vpop.f32.mrf.mxu0
        %v2291 = vadd.f32 %v2272, %v2290
        %2292 = vdwg.mxu0
        %2293 = vmatpush.bf16.msra.mxu0 0
        %2294 = vmatpush.bf16.msra.mxu0 0
        %2295 = vmatpush.bf16.msra.mxu0 0
        %2296 = vmatpush.bf16.msra.mxu0 0
        %2297 = vmatpush.bf16.msra.mxu0 0
        %2298 = vmatpush.bf16.msra.mxu0 0
        %2299 = vmatpush.bf16.msra.mxu0 %v2141
        %2300 = vmatpush.bf16.msra.mxu0 %v2139
        %2301 = vmatmul.bf16.gmra.mxu0 %v2193
        %v2302 = vpop.f32.mrf.mxu0
        %v2303 = vadd.f32 %v2284, %v2302
        %v2304 = vpop.f32.mrf.mxu0
        %v2305 = vadd.f32 %v2286, %v2304
        %2306 = vmatmul.bf16.gmra.mxu0 %v2196
        %v2307 = vpop.f32.mrf.mxu0
        %v2308 = vadd.f32 %v2289, %v2307
        %v2309 = vpop.f32.mrf.mxu0
        %v2310 = vadd.f32 %v2291, %v2309
        %2311 = vdwg.mxu0
        %s2312 = scalar_lea.vmem [#allocation7], 128
        %v2313 = vld [vmem:[%s2312] sm:$0xff]
        %v2314 = vld [vmem:[%s2312 + $0x8] sm:$0xff]
        %v2315 = vld [vmem:[%s2312 + $0x10] sm:$0xff]
        %v2316 = vld [vmem:[%s2312 + $0x18] sm:$0xff]
        %v2317 = vld [vmem:[%s2312 + $0x20] sm:$0xff]
        %v2318 = vld [vmem:[%s2312 + $0x28] sm:$0xff]
        %v2319 = vld [vmem:[%s2312 + $0x30] sm:$0xff]
        %v2320 = vld [vmem:[%s2312 + $0x38] sm:$0xff]
        %s2321 = scalar_lea.vmem [#allocation9], 128
        %v2322 = vld [vmem:[%s2321] sm:$0xff]
        %v2323 = vld [vmem:[%s2321 + $0x8] sm:$0xff]
        %v2324 = vld [vmem:[%s2321 + $0x10] sm:$0xff]
        %v2325 = vld [vmem:[%s2321 + $0x18] sm:$0xff]
        %v2326 = vld [vmem:[%s2321 + $0x20] sm:$0xff]
        %v2327 = vld [vmem:[%s2321 + $0x28] sm:$0xff]
        %v2328 = vld [vmem:[%s2321 + $0x30] sm:$0xff]
        %v2329 = vld [vmem:[%s2321 + $0x38] sm:$0xff]
        %v2330 = vadd.f32 %v2246, %v2303
        %v2331 = vadd.f32 %v2330, %v2248
        %v2332 = vadd.f32 %v2331, %v2305
        %v2333 = vadd.f32 %v2332, %v2251
        %v2334 = vadd.f32 %v2333, %v2308
        %v2335 = vadd.f32 %v2334, %v2253
        %v2336 = vadd.f32 %v2335, %v2310
        %2337 = vadd.xlane.f32.xlu0 %v2336
        %v2338 = vpop.xlane.xlu0 %2337
        %v2339 = vrot.slane %v2338, 4
        %v2340 = vadd.f32 %v2338, %v2339
        %v2341 = vrot.slane %v2340, 2
        %v2342 = vadd.f32 %v2340, %v2341
        %v2343 = vrot.slane %v2342, 1
        %v2344 = vadd.f32 %v2342, %v2343
        %s2345 = vtos %v2344
        %v2346 = vmul.f32 %v2246, %v2246
        %v2347 = vmul.f32 %v2303, %v2303
        %v2348 = vmul.f32 %v2248, %v2248
        %v2349 = vmul.f32 %v2305, %v2305
        %v2350 = vmul.f32 %v2251, %v2251
        %v2351 = vmul.f32 %v2308, %v2308
        %v2352 = vmul.f32 %v2253, %v2253
        %v2353 = vmul.f32 %v2310, %v2310
        %v2354 = vadd.f32 %v2346, %v2347
        %v2355 = vadd.f32 %v2354, %v2348
        %v2356 = vadd.f32 %v2355, %v2349
        %v2357 = vadd.f32 %v2356, %v2350
        %v2358 = vadd.f32 %v2357, %v2351
        %v2359 = vadd.f32 %v2358, %v2352
        %v2360 = vadd.f32 %v2359, %v2353
        %2361 = vadd.xlane.f32.xlu0 %v2360
        %v2362 = vpop.xlane.xlu0 %2361
        %v2363 = vrot.slane %v2362, 4
        %v2364 = vadd.f32 %v2362, %v2363
        %v2365 = vrot.slane %v2364, 2
        %v2366 = vadd.f32 %v2364, %v2365
        %v2367 = vrot.slane %v2366, 1
        %v2368 = vadd.f32 %v2366, %v2367
        %s2369 = vtos %v2368
        %v2370 = vrcp.pop 8192.0
        %v2371 = vmul.f32 8192.0, %v2370
        %v2372 = vsub.f32 1.0, %v2371
        %v2373 = vmul.f32 %v2370, %v2372
        %v2374 = vadd.f32 %v2370, %v2373
        %vm2375 = vweird.f32 %v2370
        %v2376 = vsel %vm2375, %v2370, %v2374
        %s2377 = vtos %v2376
        %s2378 = smul.f32 %s2345, %s2377
        %v2379 = vrcp.pop 8192.0
        %v2380 = vmul.f32 8192.0, %v2379
        %v2381 = vsub.f32 1.0, %v2380
        %v2382 = vmul.f32 %v2379, %v2381
        %v2383 = vadd.f32 %v2379, %v2382
        %vm2384 = vweird.f32 %v2379
        %v2385 = vsel %vm2384, %v2379, %v2383
        %s2386 = vtos %v2385
        %s2387 = smul.f32 %s2369, %s2386
        %s2388 = smul.f32 %s2378, %s2378
        %s2389 = ssub.f32 %s2387, %s2388
        %s2390 = sadd.f32 %s2389, 1e-05
        %v2391 = vstv %s2390
        %v2392 = vrsqrt.pop %v2391
        %v2393 = vmul.f32 %v2392, %v2391
        %v2394 = vmul.f32 %v2393, %v2392
        %v2395 = vmul.f32 0.5, %v2394
        %v2396 = vsub.f32 1.5, %v2395
        %v2397 = vmul.f32 %v2392, %v2396
        %vm2398 = vweird.f32 %v2391
        %vm2399 = vweird.f32 %v2392
        %vm2400 = vmor %vm2398, %vm2399
        %v2401 = vsel %vm2400, %v2392, %v2397
        %s2402 = vtos %v2401
        %v2403 = vstv %s2378
        %v2404 = vsub.f32 %v2246, %v2403
        %v2405 = vsub.f32 %v2303, %v2403
        %v2406 = vsub.f32 %v2248, %v2403
        %v2407 = vsub.f32 %v2305, %v2403
        %v2408 = vsub.f32 %v2251, %v2403
        %v2409 = vsub.f32 %v2308, %v2403
        %v2410 = vsub.f32 %v2253, %v2403
        %v2411 = vsub.f32 %v2310, %v2403
        %v2412 = vstv %s2402
        %v2413 = vmul.f32 %v2404, %v2412
        %v2414 = vmul.f32 %v2405, %v2412
        %v2415 = vmul.f32 %v2406, %v2412
        %v2416 = vmul.f32 %v2407, %v2412
        %v2417 = vmul.f32 %v2408, %v2412
        %v2418 = vmul.f32 %v2409, %v2412
        %v2419 = vmul.f32 %v2410, %v2412
        %v2420 = vmul.f32 %v2411, %v2412
        %v2421 = vmul.f32 %v2413, %v2313
        %v2422 = vmul.f32 %v2414, %v2314
        %v2423 = vmul.f32 %v2415, %v2315
        %v2424 = vmul.f32 %v2416, %v2316
        %v2425 = vmul.f32 %v2417, %v2317
        %v2426 = vmul.f32 %v2418, %v2318
        %v2427 = vmul.f32 %v2419, %v2319
        %v2428 = vmul.f32 %v2420, %v2320
        %v2429 = vadd.f32 %v2421, %v2322
        %v2430 = vadd.f32 %v2422, %v2323
        %v2431 = vadd.f32 %v2423, %v2324
        %v2432 = vadd.f32 %v2424, %v2325
        %v2433 = vadd.f32 %v2425, %v2326
        %v2434 = vadd.f32 %v2426, %v2327
        %v2435 = vadd.f32 %v2427, %v2328
        %v2436 = vadd.f32 %v2428, %v2329
        %v2437 = vadd.f32 %v2429, %v836
        %v2438 = vadd.f32 %v2430, %v837
        %v2439 = vadd.f32 %v2431, %v838
        %v2440 = vadd.f32 %v2432, %v839
        %v2441 = vadd.f32 %v2433, %v840
        %v2442 = vadd.f32 %v2434, %v841
        %v2443 = vadd.f32 %v2435, %v842
        %v2444 = vadd.f32 %v2436, %v843
        %v2445 = vmax.f32 %v2437, 0.0
        %v2446 = vmax.f32 %v2438, 0.0
        %v2447 = vmax.f32 %v2439, 0.0
        %v2448 = vmax.f32 %v2440, 0.0
        %v2449 = vmax.f32 %v2441, 0.0
        %v2450 = vmax.f32 %v2442, 0.0
        %v2451 = vmax.f32 %v2443, 0.0
        %v2452 = vmax.f32 %v2444, 0.0
        %s2453 = scalar_lea.vmem [#allocation4], 96
        %v2454 = vld [vmem:[%s2453] sm:$0xff]
        %v2455 = vld [vmem:[%s2453 + $0x8] sm:$0xf]
        %v2456 = vld [vmem:[%s2453 + $0xc] sm:$0xff]
        %v2457 = vld [vmem:[%s2453 + $0x14] sm:$0xf]
        %v2458 = vld [vmem:[%s2453 + $0x18] sm:$0xff]
        %v2459 = vld [vmem:[%s2453 + $0x20] sm:$0xf]
        %v2460 = vld [vmem:[%s2453 + $0x24] sm:$0xff]
        %v2461 = vld [vmem:[%s2453 + $0x2c] sm:$0xf]
        %s2462 = scalar_lea.vmem %s5, 64
        %v2463 = vld [vmem:[%s2462] sm:$0xff]
        %v2464 = vld [vmem:[%s2462 + $0x8] sm:$0xff]
        %v2465 = vld [vmem:[%s2462 + $0x10] sm:$0xff]
        %v2466 = vld [vmem:[%s2462 + $0x18] sm:$0xff]
        %2467 = vrot.lane.b32.xlu0 %v2445, 17
        %v2468 = vpop.permute.xlu0 %2467
        %2469 = vrot.lane.b32.xlu0 %v2447, 17
        %v2470 = vpop.permute.xlu0 %2469
        %2471 = vrot.lane.b32.xlu0 %v2449, 17
        %v2472 = vpop.permute.xlu0 %2471
        %2473 = vrot.lane.b32.xlu0 %v2451, 17
        %v2474 = vpop.permute.xlu0 %2473
        %2475 = vrot.lane.b32.xlu0 %v2446, 17
        %v2476 = vpop.permute.xlu0 %2475
        %2477 = vrot.lane.b32.xlu0 %v2448, 17
        %v2478 = vpop.permute.xlu0 %2477
        %2479 = vrot.lane.b32.xlu0 %v2450, 17
        %v2480 = vpop.permute.xlu0 %2479
        %2481 = vrot.lane.b32.xlu0 %v2452, 17
        %v2482 = vpop.permute.xlu0 %2481
        %v2483 = vsel %vm428, %v2468, %v2476
        %v2484 = vsel %vm428, %v2470, %v2478
        %v2485 = vsel %vm428, %v2472, %v2480
        %v2486 = vsel %vm428, %v2474, %v2482
        %v2487 = vsel %vm428, %v2476, %v2468
        %v2488 = vsel %vm428, %v2478, %v2470
        %v2489 = vsel %vm428, %v2480, %v2472
        %v2490 = vsel %vm428, %v2482, %v2474
        %v2491 = vld [vmem:[%s1] sm:$0x3]
        %v2493 = vperm.slane %v2491, 0
        %v2494 = vperm.slane %v2491, 1
        %v2497 = vmul.f32 %v2487, %v2493
        %v2498 = vmul.f32 %v2483, %v2494
        %v2499 = vmul.f32 %v2488, %v2493
        %v2500 = vmul.f32 %v2484, %v2494
        %v2501 = vmul.f32 %v2489, %v2493
        %v2502 = vmul.f32 %v2485, %v2494
        %v2503 = vmul.f32 %v2490, %v2493
        %v2504 = vmul.f32 %v2486, %v2494
        %2505 = vst [vmem:[#allocation2] sm:$0xff] %v2497
        %2506 = vst [vmem:[#allocation2 + $0x8] sm:$0xff] %v2498
        %2507 = vst [vmem:[#allocation2 + $0x10] sm:$0xff] %v2499
        %2508 = vst [vmem:[#allocation2 + $0x18] sm:$0xff] %v2500
        %2509 = vst [vmem:[#allocation2 + $0x20] sm:$0xff] %v2501
        %2510 = vst [vmem:[#allocation2 + $0x28] sm:$0xff] %v2502
        %2511 = vst [vmem:[#allocation2 + $0x30] sm:$0xff] %v2503
        %2512 = vst [vmem:[#allocation2 + $0x38] sm:$0xff] %v2504
        %2513 = vrot.lane.b32.xlu0 %v2445, 16
        %v2514 = vpop.permute.xlu0 %2513
        %2515 = vrot.lane.b32.xlu0 %v2447, 16
        %v2516 = vpop.permute.xlu0 %2515
        %2517 = vrot.lane.b32.xlu0 %v2449, 16
        %v2518 = vpop.permute.xlu0 %2517
        %2519 = vrot.lane.b32.xlu0 %v2451, 16
        %v2520 = vpop.permute.xlu0 %2519
        %2521 = vrot.lane.b32.xlu0 %v2446, 16
        %v2522 = vpop.permute.xlu0 %2521
        %2523 = vrot.lane.b32.xlu0 %v2448, 16
        %v2524 = vpop.permute.xlu0 %2523
        %2525 = vrot.lane.b32.xlu0 %v2450, 16
        %v2526 = vpop.permute.xlu0 %2525
        %2527 = vrot.lane.b32.xlu0 %v2452, 16
        %v2528 = vpop.permute.xlu0 %2527
        %v2529 = vsel %vm455, %v2514, %v2522
        %v2530 = vsel %vm455, %v2516, %v2524
        %v2531 = vsel %vm455, %v2518, %v2526
        %v2532 = vsel %vm455, %v2520, %v2528
        %v2533 = vsel %vm455, %v2522, %v2514
        %v2534 = vsel %vm455, %v2524, %v2516
        %v2535 = vsel %vm455, %v2526, %v2518
        %v2536 = vsel %vm455, %v2528, %v2520
        %v2537 = vld [vmem:[%s458] sm:$0x3]
        %v2539 = vperm.slane %v2537, 0
        %v2540 = vperm.slane %v2537, 1
        %v2543 = vmul.f32 %v2533, %v2539
        %v2544 = vmul.f32 %v2529, %v2540
        %v2545 = vmul.f32 %v2534, %v2539
        %v2546 = vmul.f32 %v2530, %v2540
        %v2547 = vmul.f32 %v2535, %v2539
        %v2548 = vmul.f32 %v2531, %v2540
        %v2549 = vmul.f32 %v2536, %v2539
        %v2550 = vmul.f32 %v2532, %v2540
        %2551 = vst [vmem:[#allocation2 + $0x40] sm:$0xff] %v2543
        %2552 = vst [vmem:[#allocation2 + $0x48] sm:$0xff] %v2544
        %2553 = vst [vmem:[#allocation2 + $0x50] sm:$0xff] %v2545
        %2554 = vst [vmem:[#allocation2 + $0x58] sm:$0xff] %v2546
        %2555 = vst [vmem:[#allocation2 + $0x60] sm:$0xff] %v2547
        %2556 = vst [vmem:[#allocation2 + $0x68] sm:$0xff] %v2548
        %2557 = vst [vmem:[#allocation2 + $0x70] sm:$0xff] %v2549
        %2558 = vst [vmem:[#allocation2 + $0x78] sm:$0xff] %v2550
        %2559 = vrot.lane.b32.xlu0 %v2445, 15
        %v2560 = vpop.permute.xlu0 %2559
        %2561 = vrot.lane.b32.xlu0 %v2447, 15
        %v2562 = vpop.permute.xlu0 %2561
        %2563 = vrot.lane.b32.xlu0 %v2449, 15
        %v2564 = vpop.permute.xlu0 %2563
        %2565 = vrot.lane.b32.xlu0 %v2451, 15
        %v2566 = vpop.permute.xlu0 %2565
        %2567 = vrot.lane.b32.xlu0 %v2446, 15
        %v2568 = vpop.permute.xlu0 %2567
        %2569 = vrot.lane.b32.xlu0 %v2448, 15
        %v2570 = vpop.permute.xlu0 %2569
        %2571 = vrot.lane.b32.xlu0 %v2450, 15
        %v2572 = vpop.permute.xlu0 %2571
        %2573 = vrot.lane.b32.xlu0 %v2452, 15
        %v2574 = vpop.permute.xlu0 %2573
        %v2575 = vsel %vm479, %v2560, %v2568
        %v2576 = vsel %vm479, %v2562, %v2570
        %v2577 = vsel %vm479, %v2564, %v2572
        %v2578 = vsel %vm479, %v2566, %v2574
        %v2579 = vsel %vm479, %v2568, %v2560
        %v2580 = vsel %vm479, %v2570, %v2562
        %v2581 = vsel %vm479, %v2572, %v2564
        %v2582 = vsel %vm479, %v2574, %v2566
        %v2583 = vld [vmem:[%s482] sm:$0x3]
        %v2585 = vperm.slane %v2583, 0
        %v2586 = vperm.slane %v2583, 1
        %v2589 = vmul.f32 %v2579, %v2585
        %v2590 = vmul.f32 %v2575, %v2586
        %v2591 = vmul.f32 %v2580, %v2585
        %v2592 = vmul.f32 %v2576, %v2586
        %v2593 = vmul.f32 %v2581, %v2585
        %v2594 = vmul.f32 %v2577, %v2586
        %v2595 = vmul.f32 %v2582, %v2585
        %v2596 = vmul.f32 %v2578, %v2586
        %2597 = vst [vmem:[#allocation2 + $0x80] sm:$0xff] %v2589
        %2598 = vst [vmem:[#allocation2 + $0x88] sm:$0xff] %v2590
        %2599 = vst [vmem:[#allocation2 + $0x90] sm:$0xff] %v2591
        %2600 = vst [vmem:[#allocation2 + $0x98] sm:$0xff] %v2592
        %2601 = vst [vmem:[#allocation2 + $0xa0] sm:$0xff] %v2593
        %2602 = vst [vmem:[#allocation2 + $0xa8] sm:$0xff] %v2594
        %2603 = vst [vmem:[#allocation2 + $0xb0] sm:$0xff] %v2595
        %2604 = vst [vmem:[#allocation2 + $0xb8] sm:$0xff] %v2596
        %2605 = vrot.lane.b32.xlu0 %v2445, 1
        %v2606 = vpop.permute.xlu0 %2605
        %2607 = vrot.lane.b32.xlu0 %v2447, 1
        %v2608 = vpop.permute.xlu0 %2607
        %2609 = vrot.lane.b32.xlu0 %v2449, 1
        %v2610 = vpop.permute.xlu0 %2609
        %2611 = vrot.lane.b32.xlu0 %v2451, 1
        %v2612 = vpop.permute.xlu0 %2611
        %2613 = vrot.lane.b32.xlu0 %v2446, 1
        %v2614 = vpop.permute.xlu0 %2613
        %2615 = vrot.lane.b32.xlu0 %v2448, 1
        %v2616 = vpop.permute.xlu0 %2615
        %2617 = vrot.lane.b32.xlu0 %v2450, 1
        %v2618 = vpop.permute.xlu0 %2617
        %2619 = vrot.lane.b32.xlu0 %v2452, 1
        %v2620 = vpop.permute.xlu0 %2619
        %v2621 = vsel %vm503, %v2606, %v2614
        %v2622 = vsel %vm503, %v2608, %v2616
        %v2623 = vsel %vm503, %v2610, %v2618
        %v2624 = vsel %vm503, %v2612, %v2620
        %v2625 = vsel %vm503, %v2614, %v2606
        %v2626 = vsel %vm503, %v2616, %v2608
        %v2627 = vsel %vm503, %v2618, %v2610
        %v2628 = vsel %vm503, %v2620, %v2612
        %v2629 = vld [vmem:[%s506] sm:$0x3]
        %v2631 = vperm.slane %v2629, 0
        %v2632 = vperm.slane %v2629, 1
        %v2635 = vmul.f32 %v2625, %v2631
        %v2636 = vmul.f32 %v2621, %v2632
        %v2637 = vmul.f32 %v2626, %v2631
        %v2638 = vmul.f32 %v2622, %v2632
        %v2639 = vmul.f32 %v2627, %v2631
        %v2640 = vmul.f32 %v2623, %v2632
        %v2641 = vmul.f32 %v2628, %v2631
        %v2642 = vmul.f32 %v2624, %v2632
        %2643 = vst [vmem:[#allocation2 + $0xc0] sm:$0xff] %v2635
        %2644 = vst [vmem:[#allocation2 + $0xc8] sm:$0xff] %v2636
        %2645 = vst [vmem:[#allocation2 + $0xd0] sm:$0xff] %v2637
        %2646 = vst [vmem:[#allocation2 + $0xd8] sm:$0xff] %v2638
        %2647 = vst [vmem:[#allocation2 + $0xe0] sm:$0xff] %v2639
        %2648 = vst [vmem:[#allocation2 + $0xe8] sm:$0xff] %v2640
        %2649 = vst [vmem:[#allocation2 + $0xf0] sm:$0xff] %v2641
        %2650 = vst [vmem:[#allocation2 + $0xf8] sm:$0xff] %v2642
        %2651 = vst [vmem:[#allocation2 + $0x100] sm:$0xff] %v2445
        %2652 = vst [vmem:[#allocation2 + $0x108] sm:$0xff] %v2446
        %2653 = vst [vmem:[#allocation2 + $0x110] sm:$0xff] %v2447
        %2654 = vst [vmem:[#allocation2 + $0x118] sm:$0xff] %v2448
        %2655 = vst [vmem:[#allocation2 + $0x120] sm:$0xff] %v2449
        %2656 = vst [vmem:[#allocation2 + $0x128] sm:$0xff] %v2450
        %2657 = vst [vmem:[#allocation2 + $0x130] sm:$0xff] %v2451
        %2658 = vst [vmem:[#allocation2 + $0x138] sm:$0xff] %v2452
        %2659 = vrot.lane.b32.xlu0 %v2445, 127
        %v2660 = vpop.permute.xlu0 %2659
        %2661 = vrot.lane.b32.xlu0 %v2447, 127
        %v2662 = vpop.permute.xlu0 %2661
        %2663 = vrot.lane.b32.xlu0 %v2449, 127
        %v2664 = vpop.permute.xlu0 %2663
        %2665 = vrot.lane.b32.xlu0 %v2451, 127
        %v2666 = vpop.permute.xlu0 %2665
        %2667 = vrot.lane.b32.xlu0 %v2446, 127
        %v2668 = vpop.permute.xlu0 %2667
        %2669 = vrot.lane.b32.xlu0 %v2448, 127
        %v2670 = vpop.permute.xlu0 %2669
        %2671 = vrot.lane.b32.xlu0 %v2450, 127
        %v2672 = vpop.permute.xlu0 %2671
        %2673 = vrot.lane.b32.xlu0 %v2452, 127
        %v2674 = vpop.permute.xlu0 %2673
        %v2675 = vsel %vm530, %v2660, %v2668
        %v2676 = vsel %vm530, %v2662, %v2670
        %v2677 = vsel %vm530, %v2664, %v2672
        %v2678 = vsel %vm530, %v2666, %v2674
        %v2679 = vsel %vm530, %v2668, %v2660
        %v2680 = vsel %vm530, %v2670, %v2662
        %v2681 = vsel %vm530, %v2672, %v2664
        %v2682 = vsel %vm530, %v2674, %v2666
        %v2683 = vld [vmem:[%s533] sm:$0x3]
        %v2685 = vperm.slane %v2683, 0
        %v2686 = vperm.slane %v2683, 1
        %v2689 = vmul.f32 %v2675, %v2685
        %v2690 = vmul.f32 %v2679, %v2686
        %v2691 = vmul.f32 %v2676, %v2685
        %v2692 = vmul.f32 %v2680, %v2686
        %v2693 = vmul.f32 %v2677, %v2685
        %v2694 = vmul.f32 %v2681, %v2686
        %v2695 = vmul.f32 %v2678, %v2685
        %v2696 = vmul.f32 %v2682, %v2686
        %2697 = vst [vmem:[#allocation2 + $0x140] sm:$0xff] %v2689
        %2698 = vst [vmem:[#allocation2 + $0x148] sm:$0xff] %v2690
        %2699 = vst [vmem:[#allocation2 + $0x150] sm:$0xff] %v2691
        %2700 = vst [vmem:[#allocation2 + $0x158] sm:$0xff] %v2692
        %2701 = vst [vmem:[#allocation2 + $0x160] sm:$0xff] %v2693
        %2702 = vst [vmem:[#allocation2 + $0x168] sm:$0xff] %v2694
        %2703 = vst [vmem:[#allocation2 + $0x170] sm:$0xff] %v2695
        %2704 = vst [vmem:[#allocation2 + $0x178] sm:$0xff] %v2696
        %2705 = vrot.lane.b32.xlu0 %v2445, 113
        %v2706 = vpop.permute.xlu0 %2705
        %2707 = vrot.lane.b32.xlu0 %v2447, 113
        %v2708 = vpop.permute.xlu0 %2707
        %2709 = vrot.lane.b32.xlu0 %v2449, 113
        %v2710 = vpop.permute.xlu0 %2709
        %2711 = vrot.lane.b32.xlu0 %v2451, 113
        %v2712 = vpop.permute.xlu0 %2711
        %2713 = vrot.lane.b32.xlu0 %v2446, 113
        %v2714 = vpop.permute.xlu0 %2713
        %2715 = vrot.lane.b32.xlu0 %v2448, 113
        %v2716 = vpop.permute.xlu0 %2715
        %2717 = vrot.lane.b32.xlu0 %v2450, 113
        %v2718 = vpop.permute.xlu0 %2717
        %2719 = vrot.lane.b32.xlu0 %v2452, 113
        %v2720 = vpop.permute.xlu0 %2719
        %v2721 = vsel %vm554, %v2706, %v2714
        %v2722 = vsel %vm554, %v2708, %v2716
        %v2723 = vsel %vm554, %v2710, %v2718
        %v2724 = vsel %vm554, %v2712, %v2720
        %v2725 = vsel %vm554, %v2714, %v2706
        %v2726 = vsel %vm554, %v2716, %v2708
        %v2727 = vsel %vm554, %v2718, %v2710
        %v2728 = vsel %vm554, %v2720, %v2712
        %v2729 = vld [vmem:[%s557] sm:$0x3]
        %v2731 = vperm.slane %v2729, 0
        %v2732 = vperm.slane %v2729, 1
        %v2735 = vmul.f32 %v2721, %v2731
        %v2736 = vmul.f32 %v2725, %v2732
        %v2737 = vmul.f32 %v2722, %v2731
        %v2738 = vmul.f32 %v2726, %v2732
        %v2739 = vmul.f32 %v2723, %v2731
        %v2740 = vmul.f32 %v2727, %v2732
        %v2741 = vmul.f32 %v2724, %v2731
        %v2742 = vmul.f32 %v2728, %v2732
        %2743 = vst [vmem:[#allocation2 + $0x180] sm:$0xff] %v2735
        %2744 = vst [vmem:[#allocation2 + $0x188] sm:$0xff] %v2736
        %2745 = vst [vmem:[#allocation2 + $0x190] sm:$0xff] %v2737
        %2746 = vst [vmem:[#allocation2 + $0x198] sm:$0xff] %v2738
        %2747 = vst [vmem:[#allocation2 + $0x1a0] sm:$0xff] %v2739
        %2748 = vst [vmem:[#allocation2 + $0x1a8] sm:$0xff] %v2740
        %2749 = vst [vmem:[#allocation2 + $0x1b0] sm:$0xff] %v2741
        %2750 = vst [vmem:[#allocation2 + $0x1b8] sm:$0xff] %v2742
        %2751 = vrot.lane.b32.xlu0 %v2445, 112
        %v2752 = vpop.permute.xlu0 %2751
        %2753 = vrot.lane.b32.xlu0 %v2447, 112
        %v2754 = vpop.permute.xlu0 %2753
        %2755 = vrot.lane.b32.xlu0 %v2449, 112
        %v2756 = vpop.permute.xlu0 %2755
        %2757 = vrot.lane.b32.xlu0 %v2451, 112
        %v2758 = vpop.permute.xlu0 %2757
        %2759 = vrot.lane.b32.xlu0 %v2446, 112
        %v2760 = vpop.permute.xlu0 %2759
        %2761 = vrot.lane.b32.xlu0 %v2448, 112
        %v2762 = vpop.permute.xlu0 %2761
        %2763 = vrot.lane.b32.xlu0 %v2450, 112
        %v2764 = vpop.permute.xlu0 %2763
        %2765 = vrot.lane.b32.xlu0 %v2452, 112
        %v2766 = vpop.permute.xlu0 %2765
        %v2767 = vsel %vm578, %v2752, %v2760
        %v2768 = vsel %vm578, %v2754, %v2762
        %v2769 = vsel %vm578, %v2756, %v2764
        %v2770 = vsel %vm578, %v2758, %v2766
        %v2771 = vsel %vm578, %v2760, %v2752
        %v2772 = vsel %vm578, %v2762, %v2754
        %v2773 = vsel %vm578, %v2764, %v2756
        %v2774 = vsel %vm578, %v2766, %v2758
        %v2775 = vld [vmem:[%s581] sm:$0x3]
        %v2777 = vperm.slane %v2775, 0
        %v2778 = vperm.slane %v2775, 1
        %v2781 = vmul.f32 %v2767, %v2777
        %v2782 = vmul.f32 %v2771, %v2778
        %v2783 = vmul.f32 %v2768, %v2777
        %v2784 = vmul.f32 %v2772, %v2778
        %v2785 = vmul.f32 %v2769, %v2777
        %v2786 = vmul.f32 %v2773, %v2778
        %v2787 = vmul.f32 %v2770, %v2777
        %v2788 = vmul.f32 %v2774, %v2778
        %2789 = vst [vmem:[#allocation2 + $0x1c0] sm:$0xff] %v2781
        %2790 = vst [vmem:[#allocation2 + $0x1c8] sm:$0xff] %v2782
        %2791 = vst [vmem:[#allocation2 + $0x1d0] sm:$0xff] %v2783
        %2792 = vst [vmem:[#allocation2 + $0x1d8] sm:$0xff] %v2784
        %2793 = vst [vmem:[#allocation2 + $0x1e0] sm:$0xff] %v2785
        %2794 = vst [vmem:[#allocation2 + $0x1e8] sm:$0xff] %v2786
        %2795 = vst [vmem:[#allocation2 + $0x1f0] sm:$0xff] %v2787
        %2796 = vst [vmem:[#allocation2 + $0x1f8] sm:$0xff] %v2788
        %2797 = vrot.lane.b32.xlu0 %v2445, 111
        %v2798 = vpop.permute.xlu0 %2797
        %2799 = vrot.lane.b32.xlu0 %v2447, 111
        %v2800 = vpop.permute.xlu0 %2799
        %2801 = vrot.lane.b32.xlu0 %v2449, 111
        %v2802 = vpop.permute.xlu0 %2801
        %2803 = vrot.lane.b32.xlu0 %v2451, 111
        %v2804 = vpop.permute.xlu0 %2803
        %2805 = vrot.lane.b32.xlu0 %v2446, 111
        %v2806 = vpop.permute.xlu0 %2805
        %2807 = vrot.lane.b32.xlu0 %v2448, 111
        %v2808 = vpop.permute.xlu0 %2807
        %2809 = vrot.lane.b32.xlu0 %v2450, 111
        %v2810 = vpop.permute.xlu0 %2809
        %2811 = vrot.lane.b32.xlu0 %v2452, 111
        %v2812 = vpop.permute.xlu0 %2811
        %v2813 = vsel %vm602, %v2798, %v2806
        %v2814 = vsel %vm602, %v2800, %v2808
        %v2815 = vsel %vm602, %v2802, %v2810
        %v2816 = vsel %vm602, %v2804, %v2812
        %v2817 = vsel %vm602, %v2806, %v2798
        %v2818 = vsel %vm602, %v2808, %v2800
        %v2819 = vsel %vm602, %v2810, %v2802
        %v2820 = vsel %vm602, %v2812, %v2804
        %v2821 = vld [vmem:[%s605] sm:$0x3]
        %v2823 = vperm.slane %v2821, 0
        %v2824 = vperm.slane %v2821, 1
        %v2827 = vmul.f32 %v2813, %v2823
        %v2828 = vmul.f32 %v2817, %v2824
        %v2829 = vmul.f32 %v2814, %v2823
        %v2830 = vmul.f32 %v2818, %v2824
        %v2831 = vmul.f32 %v2815, %v2823
        %v2832 = vmul.f32 %v2819, %v2824
        %v2833 = vmul.f32 %v2816, %v2823
        %v2834 = vmul.f32 %v2820, %v2824
        %2835 = vst [vmem:[#allocation2 + $0x200] sm:$0xff] %v2827
        %2836 = vst [vmem:[#allocation2 + $0x208] sm:$0xff] %v2828
        %2837 = vst [vmem:[#allocation2 + $0x210] sm:$0xff] %v2829
        %2838 = vst [vmem:[#allocation2 + $0x218] sm:$0xff] %v2830
        %2839 = vst [vmem:[#allocation2 + $0x220] sm:$0xff] %v2831
        %2840 = vst [vmem:[#allocation2 + $0x228] sm:$0xff] %v2832
        %2841 = vst [vmem:[#allocation2 + $0x230] sm:$0xff] %v2833
        %2842 = vst [vmem:[#allocation2 + $0x238] sm:$0xff] %v2834
        %v2843 = vld [vmem:[#allocation2] sm:$0xff]
        %v2844 = vld [vmem:[#allocation2 + $0x8] sm:$0xff]
        %v2845 = vld [vmem:[#allocation2 + $0x10] sm:$0xff]
        %v2846 = vld [vmem:[#allocation2 + $0x18] sm:$0xff]
        %v2847 = vld [vmem:[#allocation2 + $0x20] sm:$0xff]
        %v2848 = vld [vmem:[#allocation2 + $0x28] sm:$0xff]
        %v2849 = vld [vmem:[#allocation2 + $0x30] sm:$0xff]
        %v2850 = vld [vmem:[#allocation2 + $0x38] sm:$0xff]
        %v2851 = vld [vmem:[#allocation2 + $0x40] sm:$0xff]
        %v2852 = vld [vmem:[#allocation2 + $0x48] sm:$0xff]
        %v2853 = vld [vmem:[#allocation2 + $0x50] sm:$0xff]
        %v2854 = vld [vmem:[#allocation2 + $0x58] sm:$0xff]
        %v2855 = vld [vmem:[#allocation2 + $0x60] sm:$0xff]
        %v2856 = vld [vmem:[#allocation2 + $0x68] sm:$0xff]
        %v2857 = vld [vmem:[#allocation2 + $0x70] sm:$0xff]
        %v2858 = vld [vmem:[#allocation2 + $0x78] sm:$0xff]
        %v2859 = vld [vmem:[#allocation2 + $0x80] sm:$0xff]
        %v2860 = vld [vmem:[#allocation2 + $0x88] sm:$0xff]
        %v2861 = vld [vmem:[#allocation2 + $0x90] sm:$0xff]
        %v2862 = vld [vmem:[#allocation2 + $0x98] sm:$0xff]
        %v2863 = vld [vmem:[#allocation2 + $0xa0] sm:$0xff]
        %v2864 = vld [vmem:[#allocation2 + $0xa8] sm:$0xff]
        %v2865 = vld [vmem:[#allocation2 + $0xb0] sm:$0xff]
        %v2866 = vld [vmem:[#allocation2 + $0xb8] sm:$0xff]
        %v2867 = vld [vmem:[#allocation2 + $0xc0] sm:$0xff]
        %v2868 = vld [vmem:[#allocation2 + $0xc8] sm:$0xff]
        %v2869 = vld [vmem:[#allocation2 + $0xd0] sm:$0xff]
        %v2870 = vld [vmem:[#allocation2 + $0xd8] sm:$0xff]
        %v2871 = vld [vmem:[#allocation2 + $0xe0] sm:$0xff]
        %v2872 = vld [vmem:[#allocation2 + $0xe8] sm:$0xff]
        %v2873 = vld [vmem:[#allocation2 + $0xf0] sm:$0xff]
        %v2874 = vld [vmem:[#allocation2 + $0xf8] sm:$0xff]
        %v2875 = vld [vmem:[#allocation2 + $0x100] sm:$0xff]
        %v2876 = vld [vmem:[#allocation2 + $0x108] sm:$0xff]
        %v2877 = vld [vmem:[#allocation2 + $0x110] sm:$0xff]
        %v2878 = vld [vmem:[#allocation2 + $0x118] sm:$0xff]
        %v2879 = vld [vmem:[#allocation2 + $0x120] sm:$0xff]
        %v2880 = vld [vmem:[#allocation2 + $0x128] sm:$0xff]
        %v2881 = vld [vmem:[#allocation2 + $0x130] sm:$0xff]
        %v2882 = vld [vmem:[#allocation2 + $0x138] sm:$0xff]
        %v2883 = vld [vmem:[#allocation2 + $0x140] sm:$0xff]
        %v2884 = vld [vmem:[#allocation2 + $0x148] sm:$0xff]
        %v2885 = vld [vmem:[#allocation2 + $0x150] sm:$0xff]
        %v2886 = vld [vmem:[#allocation2 + $0x158] sm:$0xff]
        %v2887 = vld [vmem:[#allocation2 + $0x160] sm:$0xff]
        %v2888 = vld [vmem:[#allocation2 + $0x168] sm:$0xff]
        %v2889 = vld [vmem:[#allocation2 + $0x170] sm:$0xff]
        %v2890 = vld [vmem:[#allocation2 + $0x178] sm:$0xff]
        %v2891 = vld [vmem:[#allocation2 + $0x180] sm:$0xff]
        %v2892 = vld [vmem:[#allocation2 + $0x188] sm:$0xff]
        %v2893 = vld [vmem:[#allocation2 + $0x190] sm:$0xff]
        %v2894 = vld [vmem:[#allocation2 + $0x198] sm:$0xff]
        %v2895 = vld [vmem:[#allocation2 + $0x1a0] sm:$0xff]
        %v2896 = vld [vmem:[#allocation2 + $0x1a8] sm:$0xff]
        %v2897 = vld [vmem:[#allocation2 + $0x1b0] sm:$0xff]
        %v2898 = vld [vmem:[#allocation2 + $0x1b8] sm:$0xff]
        %v2899 = vld [vmem:[#allocation2 + $0x1c0] sm:$0xff]
        %v2900 = vld [vmem:[#allocation2 + $0x1c8] sm:$0xff]
        %v2901 = vld [vmem:[#allocation2 + $0x1d0] sm:$0xff]
        %v2902 = vld [vmem:[#allocation2 + $0x1d8] sm:$0xff]
        %v2903 = vld [vmem:[#allocation2 + $0x1e0] sm:$0xff]
        %v2904 = vld [vmem:[#allocation2 + $0x1e8] sm:$0xff]
        %v2905 = vld [vmem:[#allocation2 + $0x1f0] sm:$0xff]
        %v2906 = vld [vmem:[#allocation2 + $0x1f8] sm:$0xff]
        %v2907 = vld [vmem:[#allocation2 + $0x200] sm:$0xff]
        %v2908 = vld [vmem:[#allocation2 + $0x208] sm:$0xff]
        %v2909 = vld [vmem:[#allocation2 + $0x210] sm:$0xff]
        %v2910 = vld [vmem:[#allocation2 + $0x218] sm:$0xff]
        %v2911 = vld [vmem:[#allocation2 + $0x220] sm:$0xff]
        %v2912 = vld [vmem:[#allocation2 + $0x228] sm:$0xff]
        %v2913 = vld [vmem:[#allocation2 + $0x230] sm:$0xff]
        %v2914 = vld [vmem:[#allocation2 + $0x238] sm:$0xff]
        %v2915 = vpack.c.bf16 %v2845, %v2843
        %v2916 = vpack.c.bf16 %v2846, %v2844
        %v2917 = vpack.c.bf16 %v2849, %v2847
        %v2918 = vpack.c.bf16 %v2850, %v2848
        %v2919 = vpack.c.bf16 %v2853, %v2851
        %v2920 = vpack.c.bf16 %v2854, %v2852
        %v2921 = vpack.c.bf16 %v2857, %v2855
        %v2922 = vpack.c.bf16 %v2858, %v2856
        %v2923 = vpack.c.bf16 %v2861, %v2859
        %v2924 = vpack.c.bf16 %v2862, %v2860
        %v2925 = vpack.c.bf16 %v2865, %v2863
        %v2926 = vpack.c.bf16 %v2866, %v2864
        %v2927 = vpack.c.bf16 %v2869, %v2867
        %v2928 = vpack.c.bf16 %v2870, %v2868
        %v2929 = vpack.c.bf16 %v2873, %v2871
        %v2930 = vpack.c.bf16 %v2874, %v2872
        %v2931 = vpack.c.bf16 %v2877, %v2875
        %v2932 = vpack.c.bf16 %v2878, %v2876
        %v2933 = vpack.c.bf16 %v2881, %v2879
        %v2934 = vpack.c.bf16 %v2882, %v2880
        %v2935 = vpack.c.bf16 %v2885, %v2883
        %v2936 = vpack.c.bf16 %v2886, %v2884
        %v2937 = vpack.c.bf16 %v2889, %v2887
        %v2938 = vpack.c.bf16 %v2890, %v2888
        %v2939 = vpack.c.bf16 %v2893, %v2891
        %v2940 = vpack.c.bf16 %v2894, %v2892
        %v2941 = vpack.c.bf16 %v2897, %v2895
        %v2942 = vpack.c.bf16 %v2898, %v2896
        %v2943 = vpack.c.bf16 %v2901, %v2899
        %v2944 = vpack.c.bf16 %v2902, %v2900
        %v2945 = vpack.c.bf16 %v2905, %v2903
        %v2946 = vpack.c.bf16 %v2906, %v2904
        %v2947 = vpack.c.bf16 %v2909, %v2907
        %v2948 = vpack.c.bf16 %v2910, %v2908
        %v2949 = vpack.c.bf16 %v2913, %v2911
        %v2950 = vpack.c.bf16 %v2914, %v2912
        %2952 = vset.pattern.permute.xlu0 0
        %2953 = vperm.xlu0 %2952, %v2463
        %v2954 = vpop.permute.xlu0 %2953
        %2957 = vset.pattern.permute.xlu0 0
        %2958 = vperm.xlu0 %2957, %v2464
        %v2959 = vpop.permute.xlu0 %2958
        %2962 = vset.pattern.permute.xlu0 0
        %2963 = vperm.xlu0 %2962, %v2465
        %v2964 = vpop.permute.xlu0 %2963
        %2967 = vset.pattern.permute.xlu0 0
        %2968 = vperm.xlu0 %2967, %v2466
        %v2969 = vpop.permute.xlu0 %2968
        %v2979 = vunpack.c.l.b16 %v2454
        %v2980 = vunpack.c.h.b16 %v2454
        %v2981 = vunpack.c.l.b16 %v2455
        %v2982 = vunpack.c.l.b16 %v2456
        %v2983 = vunpack.c.h.b16 %v2456
        %v2984 = vunpack.c.l.b16 %v2457
        %v2985 = vunpack.c.l.b16 %v2458
        %v2986 = vunpack.c.h.b16 %v2458
        %v2987 = vunpack.c.l.b16 %v2459
        %v2988 = vunpack.c.l.b16 %v2460
        %v2989 = vunpack.c.h.b16 %v2460
        %v2990 = vunpack.c.l.b16 %v2461
        %v2991 = vpack.c.b16 %v2982, %v2979
        %v2992 = vpack.c.b16 %v2983, %v2980
        %v2993 = vpack.c.b16 %v2984, %v2981
        %v2994 = vpack.c.b16 %v2988, %v2985
        %v2995 = vpack.c.b16 %v2989, %v2986
        %v2996 = vpack.c.b16 %v2990, %v2987
        %v3002 = vsel %vm1390, %v2993, 0
        %v3005 = vsel %vm1390, %v2996, 0
        %3007 = vmatpush.bf16.msra.mxu0 %v2929
        %3008 = vmatpush.bf16.msra.mxu0 %v2927
        %3009 = vmatpush.bf16.msra.mxu0 %v2925
        %3010 = vmatpush.bf16.msra.mxu0 %v2923
        %3011 = vmatpush.bf16.msra.mxu0 %v2921
        %3012 = vmatpush.bf16.msra.mxu0 %v2919
        %3013 = vmatpush.bf16.msra.mxu0 %v2917
        %3014 = vmatpush.bf16.msra.mxu0 %v2915
        %3015 = vmatmul.bf16.gmra.mxu0 %v2991
        %v3016 = vpop.f32.mrf.mxu0
        %v3017 = vadd.f32 %v2954, %v3016
        %v3018 = vpop.f32.mrf.mxu0
        %v3019 = vadd.f32 %v2959, %v3018
        %3020 = vmatmul.bf16.gmra.mxu0 %v2994
        %v3021 = vpop.f32.mrf.mxu0
        %v3022 = vadd.f32 %v2964, %v3021
        %v3023 = vpop.f32.mrf.mxu0
        %v3024 = vadd.f32 %v2969, %v3023
        %3025 = vdwg.mxu0
        %3026 = vmatpush.bf16.msra.mxu0 %v2945
        %3027 = vmatpush.bf16.msra.mxu0 %v2943
        %3028 = vmatpush.bf16.msra.mxu0 %v2941
        %3029 = vmatpush.bf16.msra.mxu0 %v2939
        %3030 = vmatpush.bf16.msra.mxu0 %v2937
        %3031 = vmatpush.bf16.msra.mxu0 %v2935
        %3032 = vmatpush.bf16.msra.mxu0 %v2933
        %3033 = vmatpush.bf16.msra.mxu0 %v2931
        %3034 = vmatmul.bf16.gmra.mxu0 %v2992
        %v3035 = vpop.f32.mrf.mxu0
        %v3036 = vadd.f32 %v3017, %v3035
        %v3037 = vpop.f32.mrf.mxu0
        %v3038 = vadd.f32 %v3019, %v3037
        %3039 = vmatmul.bf16.gmra.mxu0 %v2995
        %v3040 = vpop.f32.mrf.mxu0
        %v3041 = vadd.f32 %v3022, %v3040
        %v3042 = vpop.f32.mrf.mxu0
        %v3043 = vadd.f32 %v3024, %v3042
        %3044 = vdwg.mxu0
        %3045 = vmatpush.bf16.msra.mxu0 0
        %3046 = vmatpush.bf16.msra.mxu0 0
        %3047 = vmatpush.bf16.msra.mxu0 0
        %3048 = vmatpush.bf16.msra.mxu0 0
        %3049 = vmatpush.bf16.msra.mxu0 0
        %3050 = vmatpush.bf16.msra.mxu0 0
        %3051 = vmatpush.bf16.msra.mxu0 %v2949
        %3052 = vmatpush.bf16.msra.mxu0 %v2947
        %3053 = vmatmul.bf16.gmra.mxu0 %v3002
        %v3054 = vpop.f32.mrf.mxu0
        %v3055 = vadd.f32 %v3036, %v3054
        %v3056 = vpop.f32.mrf.mxu0
        %v3057 = vadd.f32 %v3038, %v3056
        %3058 = vmatmul.bf16.gmra.mxu0 %v3005
        %v3059 = vpop.f32.mrf.mxu0
        %v3060 = vadd.f32 %v3041, %v3059
        %v3061 = vpop.f32.mrf.mxu0
        %v3062 = vadd.f32 %v3043, %v3061
        %3063 = vdwg.mxu0
        %3064 = vmatpush.bf16.msra.mxu0 %v2930
        %3065 = vmatpush.bf16.msra.mxu0 %v2928
        %3066 = vmatpush.bf16.msra.mxu0 %v2926
        %3067 = vmatpush.bf16.msra.mxu0 %v2924
        %3068 = vmatpush.bf16.msra.mxu0 %v2922
        %3069 = vmatpush.bf16.msra.mxu0 %v2920
        %3070 = vmatpush.bf16.msra.mxu0 %v2918
        %3071 = vmatpush.bf16.msra.mxu0 %v2916
        %3072 = vmatmul.bf16.gmra.mxu0 %v2991
        %v3073 = vpop.f32.mrf.mxu0
        %v3074 = vadd.f32 %v2954, %v3073
        %v3075 = vpop.f32.mrf.mxu0
        %v3076 = vadd.f32 %v2959, %v3075
        %3077 = vmatmul.bf16.gmra.mxu0 %v2994
        %v3078 = vpop.f32.mrf.mxu0
        %v3079 = vadd.f32 %v2964, %v3078
        %v3080 = vpop.f32.mrf.mxu0
        %v3081 = vadd.f32 %v2969, %v3080
        %3082 = vdwg.mxu0
        %3083 = vmatpush.bf16.msra.mxu0 %v2946
        %3084 = vmatpush.bf16.msra.mxu0 %v2944
        %3085 = vmatpush.bf16.msra.mxu0 %v2942
        %3086 = vmatpush.bf16.msra.mxu0 %v2940
        %3087 = vmatpush.bf16.msra.mxu0 %v2938
        %3088 = vmatpush.bf16.msra.mxu0 %v2936
        %3089 = vmatpush.bf16.msra.mxu0 %v2934
        %3090 = vmatpush.bf16.msra.mxu0 %v2932
        %3091 = vmatmul.bf16.gmra.mxu0 %v2992
        %v3092 = vpop.f32.mrf.mxu0
        %v3093 = vadd.f32 %v3074, %v3092
        %v3094 = vpop.f32.mrf.mxu0
        %v3095 = vadd.f32 %v3076, %v3094
        %3096 = vmatmul.bf16.gmra.mxu0 %v2995
        %v3097 = vpop.f32.mrf.mxu0
        %v3098 = vadd.f32 %v3079, %v3097
        %v3099 = vpop.f32.mrf.mxu0
        %v3100 = vadd.f32 %v3081, %v3099
        %3101 = vdwg.mxu0
        %3102 = vmatpush.bf16.msra.mxu0 0
        %3103 = vmatpush.bf16.msra.mxu0 0
        %3104 = vmatpush.bf16.msra.mxu0 0
        %3105 = vmatpush.bf16.msra.mxu0 0
        %3106 = vmatpush.bf16.msra.mxu0 0
        %3107 = vmatpush.bf16.msra.mxu0 0
        %3108 = vmatpush.bf16.msra.mxu0 %v2950
        %3109 = vmatpush.bf16.msra.mxu0 %v2948
        %3110 = vmatmul.bf16.gmra.mxu0 %v3002
        %v3111 = vpop.f32.mrf.mxu0
        %v3112 = vadd.f32 %v3093, %v3111
        %v3113 = vpop.f32.mrf.mxu0
        %v3114 = vadd.f32 %v3095, %v3113
        %3115 = vmatmul.bf16.gmra.mxu0 %v3005
        %v3116 = vpop.f32.mrf.mxu0
        %v3117 = vadd.f32 %v3098, %v3116
        %v3118 = vpop.f32.mrf.mxu0
        %v3119 = vadd.f32 %v3100, %v3118
        %3120 = vdwg.mxu0
        %s3121 = scalar_lea.vmem [#allocation7], 192
        %v3122 = vld [vmem:[%s3121] sm:$0xff]
        %v3123 = vld [vmem:[%s3121 + $0x8] sm:$0xff]
        %v3124 = vld [vmem:[%s3121 + $0x10] sm:$0xff]
        %v3125 = vld [vmem:[%s3121 + $0x18] sm:$0xff]
        %v3126 = vld [vmem:[%s3121 + $0x20] sm:$0xff]
        %v3127 = vld [vmem:[%s3121 + $0x28] sm:$0xff]
        %v3128 = vld [vmem:[%s3121 + $0x30] sm:$0xff]
        %v3129 = vld [vmem:[%s3121 + $0x38] sm:$0xff]
        %s3130 = scalar_lea.vmem [#allocation9], 192
        %v3131 = vld [vmem:[%s3130] sm:$0xff]
        %v3132 = vld [vmem:[%s3130 + $0x8] sm:$0xff]
        %v3133 = vld [vmem:[%s3130 + $0x10] sm:$0xff]
        %v3134 = vld [vmem:[%s3130 + $0x18] sm:$0xff]
        %v3135 = vld [vmem:[%s3130 + $0x20] sm:$0xff]
        %v3136 = vld [vmem:[%s3130 + $0x28] sm:$0xff]
        %v3137 = vld [vmem:[%s3130 + $0x30] sm:$0xff]
        %v3138 = vld [vmem:[%s3130 + $0x38] sm:$0xff]
        %v3139 = vadd.f32 %v3055, %v3112
        %v3140 = vadd.f32 %v3139, %v3057
        %v3141 = vadd.f32 %v3140, %v3114
        %v3142 = vadd.f32 %v3141, %v3060
        %v3143 = vadd.f32 %v3142, %v3117
        %v3144 = vadd.f32 %v3143, %v3062
        %v3145 = vadd.f32 %v3144, %v3119
        %3146 = vadd.xlane.f32.xlu0 %v3145
        %v3147 = vpop.xlane.xlu0 %3146
        %v3148 = vrot.slane %v3147, 4
        %v3149 = vadd.f32 %v3147, %v3148
        %v3150 = vrot.slane %v3149, 2
        %v3151 = vadd.f32 %v3149, %v3150
        %v3152 = vrot.slane %v3151, 1
        %v3153 = vadd.f32 %v3151, %v3152
        %s3154 = vtos %v3153
        %v3155 = vmul.f32 %v3055, %v3055
        %v3156 = vmul.f32 %v3112, %v3112
        %v3157 = vmul.f32 %v3057, %v3057
        %v3158 = vmul.f32 %v3114, %v3114
        %v3159 = vmul.f32 %v3060, %v3060
        %v3160 = vmul.f32 %v3117, %v3117
        %v3161 = vmul.f32 %v3062, %v3062
        %v3162 = vmul.f32 %v3119, %v3119
        %v3163 = vadd.f32 %v3155, %v3156
        %v3164 = vadd.f32 %v3163, %v3157
        %v3165 = vadd.f32 %v3164, %v3158
        %v3166 = vadd.f32 %v3165, %v3159
        %v3167 = vadd.f32 %v3166, %v3160
        %v3168 = vadd.f32 %v3167, %v3161
        %v3169 = vadd.f32 %v3168, %v3162
        %3170 = vadd.xlane.f32.xlu0 %v3169
        %v3171 = vpop.xlane.xlu0 %3170
        %v3172 = vrot.slane %v3171, 4
        %v3173 = vadd.f32 %v3171, %v3172
        %v3174 = vrot.slane %v3173, 2
        %v3175 = vadd.f32 %v3173, %v3174
        %v3176 = vrot.slane %v3175, 1
        %v3177 = vadd.f32 %v3175, %v3176
        %s3178 = vtos %v3177
        %v3179 = vrcp.pop 8192.0
        %v3180 = vmul.f32 8192.0, %v3179
        %v3181 = vsub.f32 1.0, %v3180
        %v3182 = vmul.f32 %v3179, %v3181
        %v3183 = vadd.f32 %v3179, %v3182
        %vm3184 = vweird.f32 %v3179
        %v3185 = vsel %vm3184, %v3179, %v3183
        %s3186 = vtos %v3185
        %s3187 = smul.f32 %s3154, %s3186
        %v3188 = vrcp.pop 8192.0
        %v3189 = vmul.f32 8192.0, %v3188
        %v3190 = vsub.f32 1.0, %v3189
        %v3191 = vmul.f32 %v3188, %v3190
        %v3192 = vadd.f32 %v3188, %v3191
        %vm3193 = vweird.f32 %v3188
        %v3194 = vsel %vm3193, %v3188, %v3192
        %s3195 = vtos %v3194
        %s3196 = smul.f32 %s3178, %s3195
        %s3197 = smul.f32 %s3187, %s3187
        %s3198 = ssub.f32 %s3196, %s3197
        %s3199 = sadd.f32 %s3198, 1e-05
        %v3200 = vstv %s3199
        %v3201 = vrsqrt.pop %v3200
        %v3202 = vmul.f32 %v3201, %v3200
        %v3203 = vmul.f32 %v3202, %v3201
        %v3204 = vmul.f32 0.5, %v3203
        %v3205 = vsub.f32 1.5, %v3204
        %v3206 = vmul.f32 %v3201, %v3205
        %vm3207 = vweird.f32 %v3200
        %vm3208 = vweird.f32 %v3201
        %vm3209 = vmor %vm3207, %vm3208
        %v3210 = vsel %vm3209, %v3201, %v3206
        %s3211 = vtos %v3210
        %v3212 = vstv %s3187
        %v3213 = vsub.f32 %v3055, %v3212
        %v3214 = vsub.f32 %v3112, %v3212
        %v3215 = vsub.f32 %v3057, %v3212
        %v3216 = vsub.f32 %v3114, %v3212
        %v3217 = vsub.f32 %v3060, %v3212
        %v3218 = vsub.f32 %v3117, %v3212
        %v3219 = vsub.f32 %v3062, %v3212
        %v3220 = vsub.f32 %v3119, %v3212
        %v3221 = vstv %s3211
        %v3222 = vmul.f32 %v3213, %v3221
        %v3223 = vmul.f32 %v3214, %v3221
        %v3224 = vmul.f32 %v3215, %v3221
        %v3225 = vmul.f32 %v3216, %v3221
        %v3226 = vmul.f32 %v3217, %v3221
        %v3227 = vmul.f32 %v3218, %v3221
        %v3228 = vmul.f32 %v3219, %v3221
        %v3229 = vmul.f32 %v3220, %v3221
        %v3230 = vmul.f32 %v3222, %v3122
        %v3231 = vmul.f32 %v3223, %v3123
        %v3232 = vmul.f32 %v3224, %v3124
        %v3233 = vmul.f32 %v3225, %v3125
        %v3234 = vmul.f32 %v3226, %v3126
        %v3235 = vmul.f32 %v3227, %v3127
        %v3236 = vmul.f32 %v3228, %v3128
        %v3237 = vmul.f32 %v3229, %v3129
        %v3238 = vadd.f32 %v3230, %v3131
        %v3239 = vadd.f32 %v3231, %v3132
        %v3240 = vadd.f32 %v3232, %v3133
        %v3241 = vadd.f32 %v3233, %v3134
        %v3242 = vadd.f32 %v3234, %v3135
        %v3243 = vadd.f32 %v3235, %v3136
        %v3244 = vadd.f32 %v3236, %v3137
        %v3245 = vadd.f32 %v3237, %v3138
        %v3246 = vmax.f32 %v3238, 0.0
        %v3247 = vmax.f32 %v3239, 0.0
        %v3248 = vmax.f32 %v3240, 0.0
        %v3249 = vmax.f32 %v3241, 0.0
        %v3250 = vmax.f32 %v3242, 0.0
        %v3251 = vmax.f32 %v3243, 0.0
        %v3252 = vmax.f32 %v3244, 0.0
        %v3253 = vmax.f32 %v3245, 0.0
        %s3254 = scalar_lea.vmem [#allocation4], 144
        %v3255 = vld [vmem:[%s3254] sm:$0xff]
        %v3256 = vld [vmem:[%s3254 + $0x8] sm:$0xf]
        %v3257 = vld [vmem:[%s3254 + $0xc] sm:$0xff]
        %v3258 = vld [vmem:[%s3254 + $0x14] sm:$0xf]
        %v3259 = vld [vmem:[%s3254 + $0x18] sm:$0xff]
        %v3260 = vld [vmem:[%s3254 + $0x20] sm:$0xf]
        %v3261 = vld [vmem:[%s3254 + $0x24] sm:$0xff]
        %v3262 = vld [vmem:[%s3254 + $0x2c] sm:$0xf]
        %s3263 = scalar_lea.vmem %s5, 96
        %v3264 = vld [vmem:[%s3263] sm:$0xff]
        %v3265 = vld [vmem:[%s3263 + $0x8] sm:$0xff]
        %v3266 = vld [vmem:[%s3263 + $0x10] sm:$0xff]
        %v3267 = vld [vmem:[%s3263 + $0x18] sm:$0xff]
        %3268 = vrot.lane.b32.xlu0 %v3246, 17
        %v3269 = vpop.permute.xlu0 %3268
        %3270 = vrot.lane.b32.xlu0 %v3248, 17
        %v3271 = vpop.permute.xlu0 %3270
        %3272 = vrot.lane.b32.xlu0 %v3250, 17
        %v3273 = vpop.permute.xlu0 %3272
        %3274 = vrot.lane.b32.xlu0 %v3252, 17
        %v3275 = vpop.permute.xlu0 %3274
        %3276 = vrot.lane.b32.xlu0 %v3247, 17
        %v3277 = vpop.permute.xlu0 %3276
        %3278 = vrot.lane.b32.xlu0 %v3249, 17
        %v3279 = vpop.permute.xlu0 %3278
        %3280 = vrot.lane.b32.xlu0 %v3251, 17
        %v3281 = vpop.permute.xlu0 %3280
        %3282 = vrot.lane.b32.xlu0 %v3253, 17
        %v3283 = vpop.permute.xlu0 %3282
        %v3284 = vsel %vm428, %v3269, %v3277
        %v3285 = vsel %vm428, %v3271, %v3279
        %v3286 = vsel %vm428, %v3273, %v3281
        %v3287 = vsel %vm428, %v3275, %v3283
        %v3288 = vsel %vm428, %v3277, %v3269
        %v3289 = vsel %vm428, %v3279, %v3271
        %v3290 = vsel %vm428, %v3281, %v3273
        %v3291 = vsel %vm428, %v3283, %v3275
        %v3292 = vld [vmem:[%s1] sm:$0x3]
        %v3294 = vperm.slane %v3292, 0
        %v3295 = vperm.slane %v3292, 1
        %v3298 = vmul.f32 %v3288, %v3294
        %v3299 = vmul.f32 %v3284, %v3295
        %v3300 = vmul.f32 %v3289, %v3294
        %v3301 = vmul.f32 %v3285, %v3295
        %v3302 = vmul.f32 %v3290, %v3294
        %v3303 = vmul.f32 %v3286, %v3295
        %v3304 = vmul.f32 %v3291, %v3294
        %v3305 = vmul.f32 %v3287, %v3295
        %3306 = vst [vmem:[#allocation2] sm:$0xff] %v3298
        %3307 = vst [vmem:[#allocation2 + $0x8] sm:$0xff] %v3299
        %3308 = vst [vmem:[#allocation2 + $0x10] sm:$0xff] %v3300
        %3309 = vst [vmem:[#allocation2 + $0x18] sm:$0xff] %v3301
        %3310 = vst [vmem:[#allocation2 + $0x20] sm:$0xff] %v3302
        %3311 = vst [vmem:[#allocation2 + $0x28] sm:$0xff] %v3303
        %3312 = vst [vmem:[#allocation2 + $0x30] sm:$0xff] %v3304
        %3313 = vst [vmem:[#allocation2 + $0x38] sm:$0xff] %v3305
        %3314 = vrot.lane.b32.xlu0 %v3246, 16
        %v3315 = vpop.permute.xlu0 %3314
        %3316 = vrot.lane.b32.xlu0 %v3248, 16
        %v3317 = vpop.permute.xlu0 %3316
        %3318 = vrot.lane.b32.xlu0 %v3250, 16
        %v3319 = vpop.permute.xlu0 %3318
        %3320 = vrot.lane.b32.xlu0 %v3252, 16
        %v3321 = vpop.permute.xlu0 %3320
        %3322 = vrot.lane.b32.xlu0 %v3247, 16
        %v3323 = vpop.permute.xlu0 %3322
        %3324 = vrot.lane.b32.xlu0 %v3249, 16
        %v3325 = vpop.permute.xlu0 %3324
        %3326 = vrot.lane.b32.xlu0 %v3251, 16
        %v3327 = vpop.permute.xlu0 %3326
        %3328 = vrot.lane.b32.xlu0 %v3253, 16
        %v3329 = vpop.permute.xlu0 %3328
        %v3330 = vsel %vm455, %v3315, %v3323
        %v3331 = vsel %vm455, %v3317, %v3325
        %v3332 = vsel %vm455, %v3319, %v3327
        %v3333 = vsel %vm455, %v3321, %v3329
        %v3334 = vsel %vm455, %v3323, %v3315
        %v3335 = vsel %vm455, %v3325, %v3317
        %v3336 = vsel %vm455, %v3327, %v3319
        %v3337 = vsel %vm455, %v3329, %v3321
        %v3338 = vld [vmem:[%s458] sm:$0x3]
        %v3340 = vperm.slane %v3338, 0
        %v3341 = vperm.slane %v3338, 1
        %v3344 = vmul.f32 %v3334, %v3340
        %v3345 = vmul.f32 %v3330, %v3341
        %v3346 = vmul.f32 %v3335, %v3340
        %v3347 = vmul.f32 %v3331, %v3341
        %v3348 = vmul.f32 %v3336, %v3340
        %v3349 = vmul.f32 %v3332, %v3341
        %v3350 = vmul.f32 %v3337, %v3340
        %v3351 = vmul.f32 %v3333, %v3341
        %3352 = vst [vmem:[#allocation2 + $0x40] sm:$0xff] %v3344
        %3353 = vst [vmem:[#allocation2 + $0x48] sm:$0xff] %v3345
        %3354 = vst [vmem:[#allocation2 + $0x50] sm:$0xff] %v3346
        %3355 = vst [vmem:[#allocation2 + $0x58] sm:$0xff] %v3347
        %3356 = vst [vmem:[#allocation2 + $0x60] sm:$0xff] %v3348
        %3357 = vst [vmem:[#allocation2 + $0x68] sm:$0xff] %v3349
        %3358 = vst [vmem:[#allocation2 + $0x70] sm:$0xff] %v3350
        %3359 = vst [vmem:[#allocation2 + $0x78] sm:$0xff] %v3351
        %3360 = vrot.lane.b32.xlu0 %v3246, 15
        %v3361 = vpop.permute.xlu0 %3360
        %3362 = vrot.lane.b32.xlu0 %v3248, 15
        %v3363 = vpop.permute.xlu0 %3362
        %3364 = vrot.lane.b32.xlu0 %v3250, 15
        %v3365 = vpop.permute.xlu0 %3364
        %3366 = vrot.lane.b32.xlu0 %v3252, 15
        %v3367 = vpop.permute.xlu0 %3366
        %3368 = vrot.lane.b32.xlu0 %v3247, 15
        %v3369 = vpop.permute.xlu0 %3368
        %3370 = vrot.lane.b32.xlu0 %v3249, 15
        %v3371 = vpop.permute.xlu0 %3370
        %3372 = vrot.lane.b32.xlu0 %v3251, 15
        %v3373 = vpop.permute.xlu0 %3372
        %3374 = vrot.lane.b32.xlu0 %v3253, 15
        %v3375 = vpop.permute.xlu0 %3374
        %v3376 = vsel %vm479, %v3361, %v3369
        %v3377 = vsel %vm479, %v3363, %v3371
        %v3378 = vsel %vm479, %v3365, %v3373
        %v3379 = vsel %vm479, %v3367, %v3375
        %v3380 = vsel %vm479, %v3369, %v3361
        %v3381 = vsel %vm479, %v3371, %v3363
        %v3382 = vsel %vm479, %v3373, %v3365
        %v3383 = vsel %vm479, %v3375, %v3367
        %v3384 = vld [vmem:[%s482] sm:$0x3]
        %v3386 = vperm.slane %v3384, 0
        %v3387 = vperm.slane %v3384, 1
        %v3390 = vmul.f32 %v3380, %v3386
        %v3391 = vmul.f32 %v3376, %v3387
        %v3392 = vmul.f32 %v3381, %v3386
        %v3393 = vmul.f32 %v3377, %v3387
        %v3394 = vmul.f32 %v3382, %v3386
        %v3395 = vmul.f32 %v3378, %v3387
        %v3396 = vmul.f32 %v3383, %v3386
        %v3397 = vmul.f32 %v3379, %v3387
        %3398 = vst [vmem:[#allocation2 + $0x80] sm:$0xff] %v3390
        %3399 = vst [vmem:[#allocation2 + $0x88] sm:$0xff] %v3391
        %3400 = vst [vmem:[#allocation2 + $0x90] sm:$0xff] %v3392
        %3401 = vst [vmem:[#allocation2 + $0x98] sm:$0xff] %v3393
        %3402 = vst [vmem:[#allocation2 + $0xa0] sm:$0xff] %v3394
        %3403 = vst [vmem:[#allocation2 + $0xa8] sm:$0xff] %v3395
        %3404 = vst [vmem:[#allocation2 + $0xb0] sm:$0xff] %v3396
        %3405 = vst [vmem:[#allocation2 + $0xb8] sm:$0xff] %v3397
        %3406 = vrot.lane.b32.xlu0 %v3246, 1
        %v3407 = vpop.permute.xlu0 %3406
        %3408 = vrot.lane.b32.xlu0 %v3248, 1
        %v3409 = vpop.permute.xlu0 %3408
        %3410 = vrot.lane.b32.xlu0 %v3250, 1
        %v3411 = vpop.permute.xlu0 %3410
        %3412 = vrot.lane.b32.xlu0 %v3252, 1
        %v3413 = vpop.permute.xlu0 %3412
        %3414 = vrot.lane.b32.xlu0 %v3247, 1
        %v3415 = vpop.permute.xlu0 %3414
        %3416 = vrot.lane.b32.xlu0 %v3249, 1
        %v3417 = vpop.permute.xlu0 %3416
        %3418 = vrot.lane.b32.xlu0 %v3251, 1
        %v3419 = vpop.permute.xlu0 %3418
        %3420 = vrot.lane.b32.xlu0 %v3253, 1
        %v3421 = vpop.permute.xlu0 %3420
        %v3422 = vsel %vm503, %v3407, %v3415
        %v3423 = vsel %vm503, %v3409, %v3417
        %v3424 = vsel %vm503, %v3411, %v3419
        %v3425 = vsel %vm503, %v3413, %v3421
        %v3426 = vsel %vm503, %v3415, %v3407
        %v3427 = vsel %vm503, %v3417, %v3409
        %v3428 = vsel %vm503, %v3419, %v3411
        %v3429 = vsel %vm503, %v3421, %v3413
        %v3430 = vld [vmem:[%s506] sm:$0x3]
        %v3432 = vperm.slane %v3430, 0
        %v3433 = vperm.slane %v3430, 1
        %v3436 = vmul.f32 %v3426, %v3432
        %v3437 = vmul.f32 %v3422, %v3433
        %v3438 = vmul.f32 %v3427, %v3432
        %v3439 = vmul.f32 %v3423, %v3433
        %v3440 = vmul.f32 %v3428, %v3432
        %v3441 = vmul.f32 %v3424, %v3433
        %v3442 = vmul.f32 %v3429, %v3432
        %v3443 = vmul.f32 %v3425, %v3433
        %3444 = vst [vmem:[#allocation2 + $0xc0] sm:$0xff] %v3436
        %3445 = vst [vmem:[#allocation2 + $0xc8] sm:$0xff] %v3437
        %3446 = vst [vmem:[#allocation2 + $0xd0] sm:$0xff] %v3438
        %3447 = vst [vmem:[#allocation2 + $0xd8] sm:$0xff] %v3439
        %3448 = vst [vmem:[#allocation2 + $0xe0] sm:$0xff] %v3440
        %3449 = vst [vmem:[#allocation2 + $0xe8] sm:$0xff] %v3441
        %3450 = vst [vmem:[#allocation2 + $0xf0] sm:$0xff] %v3442
        %3451 = vst [vmem:[#allocation2 + $0xf8] sm:$0xff] %v3443
        %3452 = vst [vmem:[#allocation2 + $0x100] sm:$0xff] %v3246
        %3453 = vst [vmem:[#allocation2 + $0x108] sm:$0xff] %v3247
        %3454 = vst [vmem:[#allocation2 + $0x110] sm:$0xff] %v3248
        %3455 = vst [vmem:[#allocation2 + $0x118] sm:$0xff] %v3249
        %3456 = vst [vmem:[#allocation2 + $0x120] sm:$0xff] %v3250
        %3457 = vst [vmem:[#allocation2 + $0x128] sm:$0xff] %v3251
        %3458 = vst [vmem:[#allocation2 + $0x130] sm:$0xff] %v3252
        %3459 = vst [vmem:[#allocation2 + $0x138] sm:$0xff] %v3253
        %3460 = vrot.lane.b32.xlu0 %v3246, 127
        %v3461 = vpop.permute.xlu0 %3460
        %3462 = vrot.lane.b32.xlu0 %v3248, 127
        %v3463 = vpop.permute.xlu0 %3462
        %3464 = vrot.lane.b32.xlu0 %v3250, 127
        %v3465 = vpop.permute.xlu0 %3464
        %3466 = vrot.lane.b32.xlu0 %v3252, 127
        %v3467 = vpop.permute.xlu0 %3466
        %3468 = vrot.lane.b32.xlu0 %v3247, 127
        %v3469 = vpop.permute.xlu0 %3468
        %3470 = vrot.lane.b32.xlu0 %v3249, 127
        %v3471 = vpop.permute.xlu0 %3470
        %3472 = vrot.lane.b32.xlu0 %v3251, 127
        %v3473 = vpop.permute.xlu0 %3472
        %3474 = vrot.lane.b32.xlu0 %v3253, 127
        %v3475 = vpop.permute.xlu0 %3474
        %v3476 = vsel %vm530, %v3461, %v3469
        %v3477 = vsel %vm530, %v3463, %v3471
        %v3478 = vsel %vm530, %v3465, %v3473
        %v3479 = vsel %vm530, %v3467, %v3475
        %v3480 = vsel %vm530, %v3469, %v3461
        %v3481 = vsel %vm530, %v3471, %v3463
        %v3482 = vsel %vm530, %v3473, %v3465
        %v3483 = vsel %vm530, %v3475, %v3467
        %v3484 = vld [vmem:[%s533] sm:$0x3]
        %v3486 = vperm.slane %v3484, 0
        %v3487 = vperm.slane %v3484, 1
        %v3490 = vmul.f32 %v3476, %v3486
        %v3491 = vmul.f32 %v3480, %v3487
        %v3492 = vmul.f32 %v3477, %v3486
        %v3493 = vmul.f32 %v3481, %v3487
        %v3494 = vmul.f32 %v3478, %v3486
        %v3495 = vmul.f32 %v3482, %v3487
        %v3496 = vmul.f32 %v3479, %v3486
        %v3497 = vmul.f32 %v3483, %v3487
        %3498 = vst [vmem:[#allocation2 + $0x140] sm:$0xff] %v3490
        %3499 = vst [vmem:[#allocation2 + $0x148] sm:$0xff] %v3491
        %3500 = vst [vmem:[#allocation2 + $0x150] sm:$0xff] %v3492
        %3501 = vst [vmem:[#allocation2 + $0x158] sm:$0xff] %v3493
        %3502 = vst [vmem:[#allocation2 + $0x160] sm:$0xff] %v3494
        %3503 = vst [vmem:[#allocation2 + $0x168] sm:$0xff] %v3495
        %3504 = vst [vmem:[#allocation2 + $0x170] sm:$0xff] %v3496
        %3505 = vst [vmem:[#allocation2 + $0x178] sm:$0xff] %v3497
        %3506 = vrot.lane.b32.xlu0 %v3246, 113
        %v3507 = vpop.permute.xlu0 %3506
        %3508 = vrot.lane.b32.xlu0 %v3248, 113
        %v3509 = vpop.permute.xlu0 %3508
        %3510 = vrot.lane.b32.xlu0 %v3250, 113
        %v3511 = vpop.permute.xlu0 %3510
        %3512 = vrot.lane.b32.xlu0 %v3252, 113
        %v3513 = vpop.permute.xlu0 %3512
        %3514 = vrot.lane.b32.xlu0 %v3247, 113
        %v3515 = vpop.permute.xlu0 %3514
        %3516 = vrot.lane.b32.xlu0 %v3249, 113
        %v3517 = vpop.permute.xlu0 %3516
        %3518 = vrot.lane.b32.xlu0 %v3251, 113
        %v3519 = vpop.permute.xlu0 %3518
        %3520 = vrot.lane.b32.xlu0 %v3253, 113
        %v3521 = vpop.permute.xlu0 %3520
        %v3522 = vsel %vm554, %v3507, %v3515
        %v3523 = vsel %vm554, %v3509, %v3517
        %v3524 = vsel %vm554, %v3511, %v3519
        %v3525 = vsel %vm554, %v3513, %v3521
        %v3526 = vsel %vm554, %v3515, %v3507
        %v3527 = vsel %vm554, %v3517, %v3509
        %v3528 = vsel %vm554, %v3519, %v3511
        %v3529 = vsel %vm554, %v3521, %v3513
        %v3530 = vld [vmem:[%s557] sm:$0x3]
        %v3532 = vperm.slane %v3530, 0
        %v3533 = vperm.slane %v3530, 1
        %v3536 = vmul.f32 %v3522, %v3532
        %v3537 = vmul.f32 %v3526, %v3533
        %v3538 = vmul.f32 %v3523, %v3532
        %v3539 = vmul.f32 %v3527, %v3533
        %v3540 = vmul.f32 %v3524, %v3532
        %v3541 = vmul.f32 %v3528, %v3533
        %v3542 = vmul.f32 %v3525, %v3532
        %v3543 = vmul.f32 %v3529, %v3533
        %3544 = vst [vmem:[#allocation2 + $0x180] sm:$0xff] %v3536
        %3545 = vst [vmem:[#allocation2 + $0x188] sm:$0xff] %v3537
        %3546 = vst [vmem:[#allocation2 + $0x190] sm:$0xff] %v3538
        %3547 = vst [vmem:[#allocation2 + $0x198] sm:$0xff] %v3539
        %3548 = vst [vmem:[#allocation2 + $0x1a0] sm:$0xff] %v3540
        %3549 = vst [vmem:[#allocation2 + $0x1a8] sm:$0xff] %v3541
        %3550 = vst [vmem:[#allocation2 + $0x1b0] sm:$0xff] %v3542
        %3551 = vst [vmem:[#allocation2 + $0x1b8] sm:$0xff] %v3543
        %3552 = vrot.lane.b32.xlu0 %v3246, 112
        %v3553 = vpop.permute.xlu0 %3552
        %3554 = vrot.lane.b32.xlu0 %v3248, 112
        %v3555 = vpop.permute.xlu0 %3554
        %3556 = vrot.lane.b32.xlu0 %v3250, 112
        %v3557 = vpop.permute.xlu0 %3556
        %3558 = vrot.lane.b32.xlu0 %v3252, 112
        %v3559 = vpop.permute.xlu0 %3558
        %3560 = vrot.lane.b32.xlu0 %v3247, 112
        %v3561 = vpop.permute.xlu0 %3560
        %3562 = vrot.lane.b32.xlu0 %v3249, 112
        %v3563 = vpop.permute.xlu0 %3562
        %3564 = vrot.lane.b32.xlu0 %v3251, 112
        %v3565 = vpop.permute.xlu0 %3564
        %3566 = vrot.lane.b32.xlu0 %v3253, 112
        %v3567 = vpop.permute.xlu0 %3566
        %v3568 = vsel %vm578, %v3553, %v3561
        %v3569 = vsel %vm578, %v3555, %v3563
        %v3570 = vsel %vm578, %v3557, %v3565
        %v3571 = vsel %vm578, %v3559, %v3567
        %v3572 = vsel %vm578, %v3561, %v3553
        %v3573 = vsel %vm578, %v3563, %v3555
        %v3574 = vsel %vm578, %v3565, %v3557
        %v3575 = vsel %vm578, %v3567, %v3559
        %v3576 = vld [vmem:[%s581] sm:$0x3]
        %v3578 = vperm.slane %v3576, 0
        %v3579 = vperm.slane %v3576, 1
        %v3582 = vmul.f32 %v3568, %v3578
        %v3583 = vmul.f32 %v3572, %v3579
        %v3584 = vmul.f32 %v3569, %v3578
        %v3585 = vmul.f32 %v3573, %v3579
        %v3586 = vmul.f32 %v3570, %v3578
        %v3587 = vmul.f32 %v3574, %v3579
        %v3588 = vmul.f32 %v3571, %v3578
        %v3589 = vmul.f32 %v3575, %v3579
        %3590 = vst [vmem:[#allocation2 + $0x1c0] sm:$0xff] %v3582
        %3591 = vst [vmem:[#allocation2 + $0x1c8] sm:$0xff] %v3583
        %3592 = vst [vmem:[#allocation2 + $0x1d0] sm:$0xff] %v3584
        %3593 = vst [vmem:[#allocation2 + $0x1d8] sm:$0xff] %v3585
        %3594 = vst [vmem:[#allocation2 + $0x1e0] sm:$0xff] %v3586
        %3595 = vst [vmem:[#allocation2 + $0x1e8] sm:$0xff] %v3587
        %3596 = vst [vmem:[#allocation2 + $0x1f0] sm:$0xff] %v3588
        %3597 = vst [vmem:[#allocation2 + $0x1f8] sm:$0xff] %v3589
        %3598 = vrot.lane.b32.xlu0 %v3246, 111
        %v3599 = vpop.permute.xlu0 %3598
        %3600 = vrot.lane.b32.xlu0 %v3248, 111
        %v3601 = vpop.permute.xlu0 %3600
        %3602 = vrot.lane.b32.xlu0 %v3250, 111
        %v3603 = vpop.permute.xlu0 %3602
        %3604 = vrot.lane.b32.xlu0 %v3252, 111
        %v3605 = vpop.permute.xlu0 %3604
        %3606 = vrot.lane.b32.xlu0 %v3247, 111
        %v3607 = vpop.permute.xlu0 %3606
        %3608 = vrot.lane.b32.xlu0 %v3249, 111
        %v3609 = vpop.permute.xlu0 %3608
        %3610 = vrot.lane.b32.xlu0 %v3251, 111
        %v3611 = vpop.permute.xlu0 %3610
        %3612 = vrot.lane.b32.xlu0 %v3253, 111
        %v3613 = vpop.permute.xlu0 %3612
        %v3614 = vsel %vm602, %v3599, %v3607
        %v3615 = vsel %vm602, %v3601, %v3609
        %v3616 = vsel %vm602, %v3603, %v3611
        %v3617 = vsel %vm602, %v3605, %v3613
        %v3618 = vsel %vm602, %v3607, %v3599
        %v3619 = vsel %vm602, %v3609, %v3601
        %v3620 = vsel %vm602, %v3611, %v3603
        %v3621 = vsel %vm602, %v3613, %v3605
        %v3622 = vld [vmem:[%s605] sm:$0x3]
        %v3624 = vperm.slane %v3622, 0
        %v3625 = vperm.slane %v3622, 1
        %v3628 = vmul.f32 %v3614, %v3624
        %v3629 = vmul.f32 %v3618, %v3625
        %v3630 = vmul.f32 %v3615, %v3624
        %v3631 = vmul.f32 %v3619, %v3625
        %v3632 = vmul.f32 %v3616, %v3624
        %v3633 = vmul.f32 %v3620, %v3625
        %v3634 = vmul.f32 %v3617, %v3624
        %v3635 = vmul.f32 %v3621, %v3625
        %3636 = vst [vmem:[#allocation2 + $0x200] sm:$0xff] %v3628
        %3637 = vst [vmem:[#allocation2 + $0x208] sm:$0xff] %v3629
        %3638 = vst [vmem:[#allocation2 + $0x210] sm:$0xff] %v3630
        %3639 = vst [vmem:[#allocation2 + $0x218] sm:$0xff] %v3631
        %3640 = vst [vmem:[#allocation2 + $0x220] sm:$0xff] %v3632
        %3641 = vst [vmem:[#allocation2 + $0x228] sm:$0xff] %v3633
        %3642 = vst [vmem:[#allocation2 + $0x230] sm:$0xff] %v3634
        %3643 = vst [vmem:[#allocation2 + $0x238] sm:$0xff] %v3635
        %v3644 = vld [vmem:[#allocation2] sm:$0xff]
        %v3645 = vld [vmem:[#allocation2 + $0x8] sm:$0xff]
        %v3646 = vld [vmem:[#allocation2 + $0x10] sm:$0xff]
        %v3647 = vld [vmem:[#allocation2 + $0x18] sm:$0xff]
        %v3648 = vld [vmem:[#allocation2 + $0x20] sm:$0xff]
        %v3649 = vld [vmem:[#allocation2 + $0x28] sm:$0xff]
        %v3650 = vld [vmem:[#allocation2 + $0x30] sm:$0xff]
        %v3651 = vld [vmem:[#allocation2 + $0x38] sm:$0xff]
        %v3652 = vld [vmem:[#allocation2 + $0x40] sm:$0xff]
        %v3653 = vld [vmem:[#allocation2 + $0x48] sm:$0xff]
        %v3654 = vld [vmem:[#allocation2 + $0x50] sm:$0xff]
        %v3655 = vld [vmem:[#allocation2 + $0x58] sm:$0xff]
        %v3656 = vld [vmem:[#allocation2 + $0x60] sm:$0xff]
        %v3657 = vld [vmem:[#allocation2 + $0x68] sm:$0xff]
        %v3658 = vld [vmem:[#allocation2 + $0x70] sm:$0xff]
        %v3659 = vld [vmem:[#allocation2 + $0x78] sm:$0xff]
        %v3660 = vld [vmem:[#allocation2 + $0x80] sm:$0xff]
        %v3661 = vld [vmem:[#allocation2 + $0x88] sm:$0xff]
        %v3662 = vld [vmem:[#allocation2 + $0x90] sm:$0xff]
        %v3663 = vld [vmem:[#allocation2 + $0x98] sm:$0xff]
        %v3664 = vld [vmem:[#allocation2 + $0xa0] sm:$0xff]
        %v3665 = vld [vmem:[#allocation2 + $0xa8] sm:$0xff]
        %v3666 = vld [vmem:[#allocation2 + $0xb0] sm:$0xff]
        %v3667 = vld [vmem:[#allocation2 + $0xb8] sm:$0xff]
        %v3668 = vld [vmem:[#allocation2 + $0xc0] sm:$0xff]
        %v3669 = vld [vmem:[#allocation2 + $0xc8] sm:$0xff]
        %v3670 = vld [vmem:[#allocation2 + $0xd0] sm:$0xff]
        %v3671 = vld [vmem:[#allocation2 + $0xd8] sm:$0xff]
        %v3672 = vld [vmem:[#allocation2 + $0xe0] sm:$0xff]
        %v3673 = vld [vmem:[#allocation2 + $0xe8] sm:$0xff]
        %v3674 = vld [vmem:[#allocation2 + $0xf0] sm:$0xff]
        %v3675 = vld [vmem:[#allocation2 + $0xf8] sm:$0xff]
        %v3676 = vld [vmem:[#allocation2 + $0x100] sm:$0xff]
        %v3677 = vld [vmem:[#allocation2 + $0x108] sm:$0xff]
        %v3678 = vld [vmem:[#allocation2 + $0x110] sm:$0xff]
        %v3679 = vld [vmem:[#allocation2 + $0x118] sm:$0xff]
        %v3680 = vld [vmem:[#allocation2 + $0x120] sm:$0xff]
        %v3681 = vld [vmem:[#allocation2 + $0x128] sm:$0xff]
        %v3682 = vld [vmem:[#allocation2 + $0x130] sm:$0xff]
        %v3683 = vld [vmem:[#allocation2 + $0x138] sm:$0xff]
        %v3684 = vld [vmem:[#allocation2 + $0x140] sm:$0xff]
        %v3685 = vld [vmem:[#allocation2 + $0x148] sm:$0xff]
        %v3686 = vld [vmem:[#allocation2 + $0x150] sm:$0xff]
        %v3687 = vld [vmem:[#allocation2 + $0x158] sm:$0xff]
        %v3688 = vld [vmem:[#allocation2 + $0x160] sm:$0xff]
        %v3689 = vld [vmem:[#allocation2 + $0x168] sm:$0xff]
        %v3690 = vld [vmem:[#allocation2 + $0x170] sm:$0xff]
        %v3691 = vld [vmem:[#allocation2 + $0x178] sm:$0xff]
        %v3692 = vld [vmem:[#allocation2 + $0x180] sm:$0xff]
        %v3693 = vld [vmem:[#allocation2 + $0x188] sm:$0xff]
        %v3694 = vld [vmem:[#allocation2 + $0x190] sm:$0xff]
        %v3695 = vld [vmem:[#allocation2 + $0x198] sm:$0xff]
        %v3696 = vld [vmem:[#allocation2 + $0x1a0] sm:$0xff]
        %v3697 = vld [vmem:[#allocation2 + $0x1a8] sm:$0xff]
        %v3698 = vld [vmem:[#allocation2 + $0x1b0] sm:$0xff]
        %v3699 = vld [vmem:[#allocation2 + $0x1b8] sm:$0xff]
        %v3700 = vld [vmem:[#allocation2 + $0x1c0] sm:$0xff]
        %v3701 = vld [vmem:[#allocation2 + $0x1c8] sm:$0xff]
        %v3702 = vld [vmem:[#allocation2 + $0x1d0] sm:$0xff]
        %v3703 = vld [vmem:[#allocation2 + $0x1d8] sm:$0xff]
        %v3704 = vld [vmem:[#allocation2 + $0x1e0] sm:$0xff]
        %v3705 = vld [vmem:[#allocation2 + $0x1e8] sm:$0xff]
        %v3706 = vld [vmem:[#allocation2 + $0x1f0] sm:$0xff]
        %v3707 = vld [vmem:[#allocation2 + $0x1f8] sm:$0xff]
        %v3708 = vld [vmem:[#allocation2 + $0x200] sm:$0xff]
        %v3709 = vld [vmem:[#allocation2 + $0x208] sm:$0xff]
        %v3710 = vld [vmem:[#allocation2 + $0x210] sm:$0xff]
        %v3711 = vld [vmem:[#allocation2 + $0x218] sm:$0xff]
        %v3712 = vld [vmem:[#allocation2 + $0x220] sm:$0xff]
        %v3713 = vld [vmem:[#allocation2 + $0x228] sm:$0xff]
        %v3714 = vld [vmem:[#allocation2 + $0x230] sm:$0xff]
        %v3715 = vld [vmem:[#allocation2 + $0x238] sm:$0xff]
        %v3716 = vpack.c.bf16 %v3646, %v3644
        %v3717 = vpack.c.bf16 %v3647, %v3645
        %v3718 = vpack.c.bf16 %v3650, %v3648
        %v3719 = vpack.c.bf16 %v3651, %v3649
        %v3720 = vpack.c.bf16 %v3654, %v3652
        %v3721 = vpack.c.bf16 %v3655, %v3653
        %v3722 = vpack.c.bf16 %v3658, %v3656
        %v3723 = vpack.c.bf16 %v3659, %v3657
        %v3724 = vpack.c.bf16 %v3662, %v3660
        %v3725 = vpack.c.bf16 %v3663, %v3661
        %v3726 = vpack.c.bf16 %v3666, %v3664
        %v3727 = vpack.c.bf16 %v3667, %v3665
        %v3728 = vpack.c.bf16 %v3670, %v3668
        %v3729 = vpack.c.bf16 %v3671, %v3669
        %v3730 = vpack.c.bf16 %v3674, %v3672
        %v3731 = vpack.c.bf16 %v3675, %v3673
        %v3732 = vpack.c.bf16 %v3678, %v3676
        %v3733 = vpack.c.bf16 %v3679, %v3677
        %v3734 = vpack.c.bf16 %v3682, %v3680
        %v3735 = vpack.c.bf16 %v3683, %v3681
        %v3736 = vpack.c.bf16 %v3686, %v3684
        %v3737 = vpack.c.bf16 %v3687, %v3685
        %v3738 = vpack.c.bf16 %v3690, %v3688
        %v3739 = vpack.c.bf16 %v3691, %v3689
        %v3740 = vpack.c.bf16 %v3694, %v3692
        %v3741 = vpack.c.bf16 %v3695, %v3693
        %v3742 = vpack.c.bf16 %v3698, %v3696
        %v3743 = vpack.c.bf16 %v3699, %v3697
        %v3744 = vpack.c.bf16 %v3702, %v3700
        %v3745 = vpack.c.bf16 %v3703, %v3701
        %v3746 = vpack.c.bf16 %v3706, %v3704
        %v3747 = vpack.c.bf16 %v3707, %v3705
        %v3748 = vpack.c.bf16 %v3710, %v3708
        %v3749 = vpack.c.bf16 %v3711, %v3709
        %v3750 = vpack.c.bf16 %v3714, %v3712
        %v3751 = vpack.c.bf16 %v3715, %v3713
        %3753 = vset.pattern.permute.xlu0 0
        %3754 = vperm.xlu0 %3753, %v3264
        %v3755 = vpop.permute.xlu0 %3754
        %3758 = vset.pattern.permute.xlu0 0
        %3759 = vperm.xlu0 %3758, %v3265
        %v3760 = vpop.permute.xlu0 %3759
        %3763 = vset.pattern.permute.xlu0 0
        %3764 = vperm.xlu0 %3763, %v3266
        %v3765 = vpop.permute.xlu0 %3764
        %3768 = vset.pattern.permute.xlu0 0
        %3769 = vperm.xlu0 %3768, %v3267
        %v3770 = vpop.permute.xlu0 %3769
        %v3780 = vunpack.c.l.b16 %v3255
        %v3781 = vunpack.c.h.b16 %v3255
        %v3782 = vunpack.c.l.b16 %v3256
        %v3783 = vunpack.c.l.b16 %v3257
        %v3784 = vunpack.c.h.b16 %v3257
        %v3785 = vunpack.c.l.b16 %v3258
        %v3786 = vunpack.c.l.b16 %v3259
        %v3787 = vunpack.c.h.b16 %v3259
        %v3788 = vunpack.c.l.b16 %v3260
        %v3789 = vunpack.c.l.b16 %v3261
        %v3790 = vunpack.c.h.b16 %v3261
        %v3791 = vunpack.c.l.b16 %v3262
        %v3792 = vpack.c.b16 %v3783, %v3780
        %v3793 = vpack.c.b16 %v3784, %v3781
        %v3794 = vpack.c.b16 %v3785, %v3782
        %v3795 = vpack.c.b16 %v3789, %v3786
        %v3796 = vpack.c.b16 %v3790, %v3787
        %v3797 = vpack.c.b16 %v3791, %v3788
        %v3803 = vsel %vm1390, %v3794, 0
        %v3806 = vsel %vm1390, %v3797, 0
        %3808 = vmatpush.bf16.msra.mxu0 %v3730
        %3809 = vmatpush.bf16.msra.mxu0 %v3728
        %3810 = vmatpush.bf16.msra.mxu0 %v3726
        %3811 = vmatpush.bf16.msra.mxu0 %v3724
        %3812 = vmatpush.bf16.msra.mxu0 %v3722
        %3813 = vmatpush.bf16.msra.mxu0 %v3720
        %3814 = vmatpush.bf16.msra.mxu0 %v3718
        %3815 = vmatpush.bf16.msra.mxu0 %v3716
        %3816 = vmatmul.bf16.gmra.mxu0 %v3792
        %v3817 = vpop.f32.mrf.mxu0
        %v3818 = vadd.f32 %v3755, %v3817
        %v3819 = vpop.f32.mrf.mxu0
        %v3820 = vadd.f32 %v3760, %v3819
        %3821 = vmatmul.bf16.gmra.mxu0 %v3795
        %v3822 = vpop.f32.mrf.mxu0
        %v3823 = vadd.f32 %v3765, %v3822
        %v3824 = vpop.f32.mrf.mxu0
        %v3825 = vadd.f32 %v3770, %v3824
        %3826 = vdwg.mxu0
        %3827 = vmatpush.bf16.msra.mxu0 %v3746
        %3828 = vmatpush.bf16.msra.mxu0 %v3744
        %3829 = vmatpush.bf16.msra.mxu0 %v3742
        %3830 = vmatpush.bf16.msra.mxu0 %v3740
        %3831 = vmatpush.bf16.msra.mxu0 %v3738
        %3832 = vmatpush.bf16.msra.mxu0 %v3736
        %3833 = vmatpush.bf16.msra.mxu0 %v3734
        %3834 = vmatpush.bf16.msra.mxu0 %v3732
        %3835 = vmatmul.bf16.gmra.mxu0 %v3793
        %v3836 = vpop.f32.mrf.mxu0
        %v3837 = vadd.f32 %v3818, %v3836
        %v3838 = vpop.f32.mrf.mxu0
        %v3839 = vadd.f32 %v3820, %v3838
        %3840 = vmatmul.bf16.gmra.mxu0 %v3796
        %v3841 = vpop.f32.mrf.mxu0
        %v3842 = vadd.f32 %v3823, %v3841
        %v3843 = vpop.f32.mrf.mxu0
        %v3844 = vadd.f32 %v3825, %v3843
        %3845 = vdwg.mxu0
        %3846 = vmatpush.bf16.msra.mxu0 0
        %3847 = vmatpush.bf16.msra.mxu0 0
        %3848 = vmatpush.bf16.msra.mxu0 0
        %3849 = vmatpush.bf16.msra.mxu0 0
        %3850 = vmatpush.bf16.msra.mxu0 0
        %3851 = vmatpush.bf16.msra.mxu0 0
        %3852 = vmatpush.bf16.msra.mxu0 %v3750
        %3853 = vmatpush.bf16.msra.mxu0 %v3748
        %3854 = vmatmul.bf16.gmra.mxu0 %v3803
        %v3855 = vpop.f32.mrf.mxu0
        %v3856 = vadd.f32 %v3837, %v3855
        %v3857 = vpop.f32.mrf.mxu0
        %v3858 = vadd.f32 %v3839, %v3857
        %3859 = vmatmul.bf16.gmra.mxu0 %v3806
        %v3860 = vpop.f32.mrf.mxu0
        %v3861 = vadd.f32 %v3842, %v3860
        %v3862 = vpop.f32.mrf.mxu0
        %v3863 = vadd.f32 %v3844, %v3862
        %3864 = vdwg.mxu0
        %3865 = vmatpush.bf16.msra.mxu0 %v3731
        %3866 = vmatpush.bf16.msra.mxu0 %v3729
        %3867 = vmatpush.bf16.msra.mxu0 %v3727
        %3868 = vmatpush.bf16.msra.mxu0 %v3725
        %3869 = vmatpush.bf16.msra.mxu0 %v3723
        %3870 = vmatpush.bf16.msra.mxu0 %v3721
        %3871 = vmatpush.bf16.msra.mxu0 %v3719
        %3872 = vmatpush.bf16.msra.mxu0 %v3717
        %3873 = vmatmul.bf16.gmra.mxu0 %v3792
        %v3874 = vpop.f32.mrf.mxu0
        %v3875 = vadd.f32 %v3755, %v3874
        %v3876 = vpop.f32.mrf.mxu0
        %v3877 = vadd.f32 %v3760, %v3876
        %3878 = vmatmul.bf16.gmra.mxu0 %v3795
        %v3879 = vpop.f32.mrf.mxu0
        %v3880 = vadd.f32 %v3765, %v3879
        %v3881 = vpop.f32.mrf.mxu0
        %v3882 = vadd.f32 %v3770, %v3881
        %3883 = vdwg.mxu0
        %3884 = vmatpush.bf16.msra.mxu0 %v3747
        %3885 = vmatpush.bf16.msra.mxu0 %v3745
        %3886 = vmatpush.bf16.msra.mxu0 %v3743
        %3887 = vmatpush.bf16.msra.mxu0 %v3741
        %3888 = vmatpush.bf16.msra.mxu0 %v3739
        %3889 = vmatpush.bf16.msra.mxu0 %v3737
        %3890 = vmatpush.bf16.msra.mxu0 %v3735
        %3891 = vmatpush.bf16.msra.mxu0 %v3733
        %3892 = vmatmul.bf16.gmra.mxu0 %v3793
        %v3893 = vpop.f32.mrf.mxu0
        %v3894 = vadd.f32 %v3875, %v3893
        %v3895 = vpop.f32.mrf.mxu0
        %v3896 = vadd.f32 %v3877, %v3895
        %3897 = vmatmul.bf16.gmra.mxu0 %v3796
        %v3898 = vpop.f32.mrf.mxu0
        %v3899 = vadd.f32 %v3880, %v3898
        %v3900 = vpop.f32.mrf.mxu0
        %v3901 = vadd.f32 %v3882, %v3900
        %3902 = vdwg.mxu0
        %3903 = vmatpush.bf16.msra.mxu0 0
        %3904 = vmatpush.bf16.msra.mxu0 0
        %3905 = vmatpush.bf16.msra.mxu0 0
        %3906 = vmatpush.bf16.msra.mxu0 0
        %3907 = vmatpush.bf16.msra.mxu0 0
        %3908 = vmatpush.bf16.msra.mxu0 0
        %3909 = vmatpush.bf16.msra.mxu0 %v3751
        %3910 = vmatpush.bf16.msra.mxu0 %v3749
        %3911 = vmatmul.bf16.gmra.mxu0 %v3803
        %v3912 = vpop.f32.mrf.mxu0
        %v3913 = vadd.f32 %v3894, %v3912
        %v3914 = vpop.f32.mrf.mxu0
        %v3915 = vadd.f32 %v3896, %v3914
        %3916 = vmatmul.bf16.gmra.mxu0 %v3806
        %v3917 = vpop.f32.mrf.mxu0
        %v3918 = vadd.f32 %v3899, %v3917
        %v3919 = vpop.f32.mrf.mxu0
        %v3920 = vadd.f32 %v3901, %v3919
        %3921 = vdwg.mxu0
        %s3922 = scalar_lea.vmem [#allocation7], 256
        %v3923 = vld [vmem:[%s3922] sm:$0xff]
        %v3924 = vld [vmem:[%s3922 + $0x8] sm:$0xff]
        %v3925 = vld [vmem:[%s3922 + $0x10] sm:$0xff]
        %v3926 = vld [vmem:[%s3922 + $0x18] sm:$0xff]
        %v3927 = vld [vmem:[%s3922 + $0x20] sm:$0xff]
        %v3928 = vld [vmem:[%s3922 + $0x28] sm:$0xff]
        %v3929 = vld [vmem:[%s3922 + $0x30] sm:$0xff]
        %v3930 = vld [vmem:[%s3922 + $0x38] sm:$0xff]
        %s3931 = scalar_lea.vmem [#allocation9], 256
        %v3932 = vld [vmem:[%s3931] sm:$0xff]
        %v3933 = vld [vmem:[%s3931 + $0x8] sm:$0xff]
        %v3934 = vld [vmem:[%s3931 + $0x10] sm:$0xff]
        %v3935 = vld [vmem:[%s3931 + $0x18] sm:$0xff]
        %v3936 = vld [vmem:[%s3931 + $0x20] sm:$0xff]
        %v3937 = vld [vmem:[%s3931 + $0x28] sm:$0xff]
        %v3938 = vld [vmem:[%s3931 + $0x30] sm:$0xff]
        %v3939 = vld [vmem:[%s3931 + $0x38] sm:$0xff]
        %v3940 = vadd.f32 %v3856, %v3913
        %v3941 = vadd.f32 %v3940, %v3858
        %v3942 = vadd.f32 %v3941, %v3915
        %v3943 = vadd.f32 %v3942, %v3861
        %v3944 = vadd.f32 %v3943, %v3918
        %v3945 = vadd.f32 %v3944, %v3863
        %v3946 = vadd.f32 %v3945, %v3920
        %3947 = vadd.xlane.f32.xlu0 %v3946
        %v3948 = vpop.xlane.xlu0 %3947
        %v3949 = vrot.slane %v3948, 4
        %v3950 = vadd.f32 %v3948, %v3949
        %v3951 = vrot.slane %v3950, 2
        %v3952 = vadd.f32 %v3950, %v3951
        %v3953 = vrot.slane %v3952, 1
        %v3954 = vadd.f32 %v3952, %v3953
        %s3955 = vtos %v3954
        %v3956 = vmul.f32 %v3856, %v3856
        %v3957 = vmul.f32 %v3913, %v3913
        %v3958 = vmul.f32 %v3858, %v3858
        %v3959 = vmul.f32 %v3915, %v3915
        %v3960 = vmul.f32 %v3861, %v3861
        %v3961 = vmul.f32 %v3918, %v3918
        %v3962 = vmul.f32 %v3863, %v3863
        %v3963 = vmul.f32 %v3920, %v3920
        %v3964 = vadd.f32 %v3956, %v3957
        %v3965 = vadd.f32 %v3964, %v3958
        %v3966 = vadd.f32 %v3965, %v3959
        %v3967 = vadd.f32 %v3966, %v3960
        %v3968 = vadd.f32 %v3967, %v3961
        %v3969 = vadd.f32 %v3968, %v3962
        %v3970 = vadd.f32 %v3969, %v3963
        %3971 = vadd.xlane.f32.xlu0 %v3970
        %v3972 = vpop.xlane.xlu0 %3971
        %v3973 = vrot.slane %v3972, 4
        %v3974 = vadd.f32 %v3972, %v3973
        %v3975 = vrot.slane %v3974, 2
        %v3976 = vadd.f32 %v3974, %v3975
        %v3977 = vrot.slane %v3976, 1
        %v3978 = vadd.f32 %v3976, %v3977
        %s3979 = vtos %v3978
        %v3980 = vrcp.pop 8192.0
        %v3981 = vmul.f32 8192.0, %v3980
        %v3982 = vsub.f32 1.0, %v3981
        %v3983 = vmul.f32 %v3980, %v3982
        %v3984 = vadd.f32 %v3980, %v3983
        %vm3985 = vweird.f32 %v3980
        %v3986 = vsel %vm3985, %v3980, %v3984
        %s3987 = vtos %v3986
        %s3988 = smul.f32 %s3955, %s3987
        %v3989 = vrcp.pop 8192.0
        %v3990 = vmul.f32 8192.0, %v3989
        %v3991 = vsub.f32 1.0, %v3990
        %v3992 = vmul.f32 %v3989, %v3991
        %v3993 = vadd.f32 %v3989, %v3992
        %vm3994 = vweird.f32 %v3989
        %v3995 = vsel %vm3994, %v3989, %v3993
        %s3996 = vtos %v3995
        %s3997 = smul.f32 %s3979, %s3996
        %s3998 = smul.f32 %s3988, %s3988
        %s3999 = ssub.f32 %s3997, %s3998
        %s4000 = sadd.f32 %s3999, 1e-05
        %v4001 = vstv %s4000
        %v4002 = vrsqrt.pop %v4001
        %v4003 = vmul.f32 %v4002, %v4001
        %v4004 = vmul.f32 %v4003, %v4002
        %v4005 = vmul.f32 0.5, %v4004
        %v4006 = vsub.f32 1.5, %v4005
        %v4007 = vmul.f32 %v4002, %v4006
        %vm4008 = vweird.f32 %v4001
        %vm4009 = vweird.f32 %v4002
        %vm4010 = vmor %vm4008, %vm4009
        %v4011 = vsel %vm4010, %v4002, %v4007
        %s4012 = vtos %v4011
        %v4013 = vstv %s3988
        %v4014 = vsub.f32 %v3856, %v4013
        %v4015 = vsub.f32 %v3913, %v4013
        %v4016 = vsub.f32 %v3858, %v4013
        %v4017 = vsub.f32 %v3915, %v4013
        %v4018 = vsub.f32 %v3861, %v4013
        %v4019 = vsub.f32 %v3918, %v4013
        %v4020 = vsub.f32 %v3863, %v4013
        %v4021 = vsub.f32 %v3920, %v4013
        %v4022 = vstv %s4012
        %v4023 = vmul.f32 %v4014, %v4022
        %v4024 = vmul.f32 %v4015, %v4022
        %v4025 = vmul.f32 %v4016, %v4022
        %v4026 = vmul.f32 %v4017, %v4022
        %v4027 = vmul.f32 %v4018, %v4022
        %v4028 = vmul.f32 %v4019, %v4022
        %v4029 = vmul.f32 %v4020, %v4022
        %v4030 = vmul.f32 %v4021, %v4022
        %v4031 = vmul.f32 %v4023, %v3923
        %v4032 = vmul.f32 %v4024, %v3924
        %v4033 = vmul.f32 %v4025, %v3925
        %v4034 = vmul.f32 %v4026, %v3926
        %v4035 = vmul.f32 %v4027, %v3927
        %v4036 = vmul.f32 %v4028, %v3928
        %v4037 = vmul.f32 %v4029, %v3929
        %v4038 = vmul.f32 %v4030, %v3930
        %v4039 = vadd.f32 %v4031, %v3932
        %v4040 = vadd.f32 %v4032, %v3933
        %v4041 = vadd.f32 %v4033, %v3934
        %v4042 = vadd.f32 %v4034, %v3935
        %v4043 = vadd.f32 %v4035, %v3936
        %v4044 = vadd.f32 %v4036, %v3937
        %v4045 = vadd.f32 %v4037, %v3938
        %v4046 = vadd.f32 %v4038, %v3939
        %v4047 = vadd.f32 %v4039, %v2445
        %v4048 = vadd.f32 %v4040, %v2446
        %v4049 = vadd.f32 %v4041, %v2447
        %v4050 = vadd.f32 %v4042, %v2448
        %v4051 = vadd.f32 %v4043, %v2449
        %v4052 = vadd.f32 %v4044, %v2450
        %v4053 = vadd.f32 %v4045, %v2451
        %v4054 = vadd.f32 %v4046, %v2452
        %v4055 = vmax.f32 %v4047, 0.0
        %v4056 = vmax.f32 %v4048, 0.0
        %v4057 = vmax.f32 %v4049, 0.0
        %v4058 = vmax.f32 %v4050, 0.0
        %v4059 = vmax.f32 %v4051, 0.0
        %v4060 = vmax.f32 %v4052, 0.0
        %v4061 = vmax.f32 %v4053, 0.0
        %v4062 = vmax.f32 %v4054, 0.0
        %v4063 = vld [vmem:[%s8] sm:$0x7]
        %v4064 = vld [vmem:[#allocation3] sm:$0x1]
        %4065 = vrot.lane.b32.xlu0 %v4055, 17
        %v4066 = vpop.permute.xlu0 %4065
        %4067 = vrot.lane.b32.xlu0 %v4057, 17
        %v4068 = vpop.permute.xlu0 %4067
        %4069 = vrot.lane.b32.xlu0 %v4059, 17
        %v4070 = vpop.permute.xlu0 %4069
        %4071 = vrot.lane.b32.xlu0 %v4061, 17
        %v4072 = vpop.permute.xlu0 %4071
        %4073 = vrot.lane.b32.xlu0 %v4056, 17
        %v4074 = vpop.permute.xlu0 %4073
        %4075 = vrot.lane.b32.xlu0 %v4058, 17
        %v4076 = vpop.permute.xlu0 %4075
        %4077 = vrot.lane.b32.xlu0 %v4060, 17
        %v4078 = vpop.permute.xlu0 %4077
        %4079 = vrot.lane.b32.xlu0 %v4062, 17
        %v4080 = vpop.permute.xlu0 %4079
        %v4081 = vsel %vm428, %v4066, %v4074
        %v4082 = vsel %vm428, %v4068, %v4076
        %v4083 = vsel %vm428, %v4070, %v4078
        %v4084 = vsel %vm428, %v4072, %v4080
        %v4085 = vsel %vm428, %v4074, %v4066
        %v4086 = vsel %vm428, %v4076, %v4068
        %v4087 = vsel %vm428, %v4078, %v4070
        %v4088 = vsel %vm428, %v4080, %v4072
        %v4089 = vld [vmem:[%s1] sm:$0x3]
        %v4091 = vperm.slane %v4089, 0
        %v4092 = vperm.slane %v4089, 1
        %v4095 = vmul.f32 %v4085, %v4091
        %v4096 = vmul.f32 %v4081, %v4092
        %v4097 = vmul.f32 %v4086, %v4091
        %v4098 = vmul.f32 %v4082, %v4092
        %v4099 = vmul.f32 %v4087, %v4091
        %v4100 = vmul.f32 %v4083, %v4092
        %v4101 = vmul.f32 %v4088, %v4091
        %v4102 = vmul.f32 %v4084, %v4092
        %4103 = vst [vmem:[#allocation2] sm:$0xff] %v4095
        %4104 = vst [vmem:[#allocation2 + $0x8] sm:$0xff] %v4096
        %4105 = vst [vmem:[#allocation2 + $0x10] sm:$0xff] %v4097
        %4106 = vst [vmem:[#allocation2 + $0x18] sm:$0xff] %v4098
        %4107 = vst [vmem:[#allocation2 + $0x20] sm:$0xff] %v4099
        %4108 = vst [vmem:[#allocation2 + $0x28] sm:$0xff] %v4100
        %4109 = vst [vmem:[#allocation2 + $0x30] sm:$0xff] %v4101
        %4110 = vst [vmem:[#allocation2 + $0x38] sm:$0xff] %v4102
        %4111 = vrot.lane.b32.xlu0 %v4055, 16
        %v4112 = vpop.permute.xlu0 %4111
        %4113 = vrot.lane.b32.xlu0 %v4057, 16
        %v4114 = vpop.permute.xlu0 %4113
        %4115 = vrot.lane.b32.xlu0 %v4059, 16
        %v4116 = vpop.permute.xlu0 %4115
        %4117 = vrot.lane.b32.xlu0 %v4061, 16
        %v4118 = vpop.permute.xlu0 %4117
        %4119 = vrot.lane.b32.xlu0 %v4056, 16
        %v4120 = vpop.permute.xlu0 %4119
        %4121 = vrot.lane.b32.xlu0 %v4058, 16
        %v4122 = vpop.permute.xlu0 %4121
        %4123 = vrot.lane.b32.xlu0 %v4060, 16
        %v4124 = vpop.permute.xlu0 %4123
        %4125 = vrot.lane.b32.xlu0 %v4062, 16
        %v4126 = vpop.permute.xlu0 %4125
        %v4127 = vsel %vm455, %v4112, %v4120
        %v4128 = vsel %vm455, %v4114, %v4122
        %v4129 = vsel %vm455, %v4116, %v4124
        %v4130 = vsel %vm455, %v4118, %v4126
        %v4131 = vsel %vm455, %v4120, %v4112
        %v4132 = vsel %vm455, %v4122, %v4114
        %v4133 = vsel %vm455, %v4124, %v4116
        %v4134 = vsel %vm455, %v4126, %v4118
        %v4135 = vld [vmem:[%s458] sm:$0x3]
        %v4137 = vperm.slane %v4135, 0
        %v4138 = vperm.slane %v4135, 1
        %v4141 = vmul.f32 %v4131, %v4137
        %v4142 = vmul.f32 %v4127, %v4138
        %v4143 = vmul.f32 %v4132, %v4137
        %v4144 = vmul.f32 %v4128, %v4138
        %v4145 = vmul.f32 %v4133, %v4137
        %v4146 = vmul.f32 %v4129, %v4138
        %v4147 = vmul.f32 %v4134, %v4137
        %v4148 = vmul.f32 %v4130, %v4138
        %4149 = vst [vmem:[#allocation2 + $0x40] sm:$0xff] %v4141
        %4150 = vst [vmem:[#allocation2 + $0x48] sm:$0xff] %v4142
        %4151 = vst [vmem:[#allocation2 + $0x50] sm:$0xff] %v4143
        %4152 = vst [vmem:[#allocation2 + $0x58] sm:$0xff] %v4144
        %4153 = vst [vmem:[#allocation2 + $0x60] sm:$0xff] %v4145
        %4154 = vst [vmem:[#allocation2 + $0x68] sm:$0xff] %v4146
        %4155 = vst [vmem:[#allocation2 + $0x70] sm:$0xff] %v4147
        %4156 = vst [vmem:[#allocation2 + $0x78] sm:$0xff] %v4148
        %4157 = vrot.lane.b32.xlu0 %v4055, 15
        %v4158 = vpop.permute.xlu0 %4157
        %4159 = vrot.lane.b32.xlu0 %v4057, 15
        %v4160 = vpop.permute.xlu0 %4159
        %4161 = vrot.lane.b32.xlu0 %v4059, 15
        %v4162 = vpop.permute.xlu0 %4161
        %4163 = vrot.lane.b32.xlu0 %v4061, 15
        %v4164 = vpop.permute.xlu0 %4163
        %4165 = vrot.lane.b32.xlu0 %v4056, 15
        %v4166 = vpop.permute.xlu0 %4165
        %4167 = vrot.lane.b32.xlu0 %v4058, 15
        %v4168 = vpop.permute.xlu0 %4167
        %4169 = vrot.lane.b32.xlu0 %v4060, 15
        %v4170 = vpop.permute.xlu0 %4169
        %4171 = vrot.lane.b32.xlu0 %v4062, 15
        %v4172 = vpop.permute.xlu0 %4171
        %v4173 = vsel %vm479, %v4158, %v4166
        %v4174 = vsel %vm479, %v4160, %v4168
        %v4175 = vsel %vm479, %v4162, %v4170
        %v4176 = vsel %vm479, %v4164, %v4172
        %v4177 = vsel %vm479, %v4166, %v4158
        %v4178 = vsel %vm479, %v4168, %v4160
        %v4179 = vsel %vm479, %v4170, %v4162
        %v4180 = vsel %vm479, %v4172, %v4164
        %v4181 = vld [vmem:[%s482] sm:$0x3]
        %v4183 = vperm.slane %v4181, 0
        %v4184 = vperm.slane %v4181, 1
        %v4187 = vmul.f32 %v4177, %v4183
        %v4188 = vmul.f32 %v4173, %v4184
        %v4189 = vmul.f32 %v4178, %v4183
        %v4190 = vmul.f32 %v4174, %v4184
        %v4191 = vmul.f32 %v4179, %v4183
        %v4192 = vmul.f32 %v4175, %v4184
        %v4193 = vmul.f32 %v4180, %v4183
        %v4194 = vmul.f32 %v4176, %v4184
        %4195 = vst [vmem:[#allocation2 + $0x80] sm:$0xff] %v4187
        %4196 = vst [vmem:[#allocation2 + $0x88] sm:$0xff] %v4188
        %4197 = vst [vmem:[#allocation2 + $0x90] sm:$0xff] %v4189
        %4198 = vst [vmem:[#allocation2 + $0x98] sm:$0xff] %v4190
        %4199 = vst [vmem:[#allocation2 + $0xa0] sm:$0xff] %v4191
        %4200 = vst [vmem:[#allocation2 + $0xa8] sm:$0xff] %v4192
        %4201 = vst [vmem:[#allocation2 + $0xb0] sm:$0xff] %v4193
        %4202 = vst [vmem:[#allocation2 + $0xb8] sm:$0xff] %v4194
        %4203 = vrot.lane.b32.xlu0 %v4055, 1
        %v4204 = vpop.permute.xlu0 %4203
        %4205 = vrot.lane.b32.xlu0 %v4057, 1
        %v4206 = vpop.permute.xlu0 %4205
        %4207 = vrot.lane.b32.xlu0 %v4059, 1
        %v4208 = vpop.permute.xlu0 %4207
        %4209 = vrot.lane.b32.xlu0 %v4061, 1
        %v4210 = vpop.permute.xlu0 %4209
        %4211 = vrot.lane.b32.xlu0 %v4056, 1
        %v4212 = vpop.permute.xlu0 %4211
        %4213 = vrot.lane.b32.xlu0 %v4058, 1
        %v4214 = vpop.permute.xlu0 %4213
        %4215 = vrot.lane.b32.xlu0 %v4060, 1
        %v4216 = vpop.permute.xlu0 %4215
        %4217 = vrot.lane.b32.xlu0 %v4062, 1
        %v4218 = vpop.permute.xlu0 %4217
        %v4219 = vsel %vm503, %v4204, %v4212
        %v4220 = vsel %vm503, %v4206, %v4214
        %v4221 = vsel %vm503, %v4208, %v4216
        %v4222 = vsel %vm503, %v4210, %v4218
        %v4223 = vsel %vm503, %v4212, %v4204
        %v4224 = vsel %vm503, %v4214, %v4206
        %v4225 = vsel %vm503, %v4216, %v4208
        %v4226 = vsel %vm503, %v4218, %v4210
        %v4227 = vld [vmem:[%s506] sm:$0x3]
        %v4229 = vperm.slane %v4227, 0
        %v4230 = vperm.slane %v4227, 1
        %v4233 = vmul.f32 %v4223, %v4229
        %v4234 = vmul.f32 %v4219, %v4230
        %v4235 = vmul.f32 %v4224, %v4229
        %v4236 = vmul.f32 %v4220, %v4230
        %v4237 = vmul.f32 %v4225, %v4229
        %v4238 = vmul.f32 %v4221, %v4230
        %v4239 = vmul.f32 %v4226, %v4229
        %v4240 = vmul.f32 %v4222, %v4230
        %4241 = vst [vmem:[#allocation2 + $0xc0] sm:$0xff] %v4233
        %4242 = vst [vmem:[#allocation2 + $0xc8] sm:$0xff] %v4234
        %4243 = vst [vmem:[#allocation2 + $0xd0] sm:$0xff] %v4235
        %4244 = vst [vmem:[#allocation2 + $0xd8] sm:$0xff] %v4236
        %4245 = vst [vmem:[#allocation2 + $0xe0] sm:$0xff] %v4237
        %4246 = vst [vmem:[#allocation2 + $0xe8] sm:$0xff] %v4238
        %4247 = vst [vmem:[#allocation2 + $0xf0] sm:$0xff] %v4239
        %4248 = vst [vmem:[#allocation2 + $0xf8] sm:$0xff] %v4240
        %4249 = vst [vmem:[#allocation2 + $0x100] sm:$0xff] %v4055
        %4250 = vst [vmem:[#allocation2 + $0x108] sm:$0xff] %v4056
        %4251 = vst [vmem:[#allocation2 + $0x110] sm:$0xff] %v4057
        %4252 = vst [vmem:[#allocation2 + $0x118] sm:$0xff] %v4058
        %4253 = vst [vmem:[#allocation2 + $0x120] sm:$0xff] %v4059
        %4254 = vst [vmem:[#allocation2 + $0x128] sm:$0xff] %v4060
        %4255 = vst [vmem:[#allocation2 + $0x130] sm:$0xff] %v4061
        %4256 = vst [vmem:[#allocation2 + $0x138] sm:$0xff] %v4062
        %4257 = vrot.lane.b32.xlu0 %v4055, 127
        %v4258 = vpop.permute.xlu0 %4257
        %4259 = vrot.lane.b32.xlu0 %v4057, 127
        %v4260 = vpop.permute.xlu0 %4259
        %4261 = vrot.lane.b32.xlu0 %v4059, 127
        %v4262 = vpop.permute.xlu0 %4261
        %4263 = vrot.lane.b32.xlu0 %v4061, 127
        %v4264 = vpop.permute.xlu0 %4263
        %4265 = vrot.lane.b32.xlu0 %v4056, 127
        %v4266 = vpop.permute.xlu0 %4265
        %4267 = vrot.lane.b32.xlu0 %v4058, 127
        %v4268 = vpop.permute.xlu0 %4267
        %4269 = vrot.lane.b32.xlu0 %v4060, 127
        %v4270 = vpop.permute.xlu0 %4269
        %4271 = vrot.lane.b32.xlu0 %v4062, 127
        %v4272 = vpop.permute.xlu0 %4271
        %v4273 = vsel %vm530, %v4258, %v4266
        %v4274 = vsel %vm530, %v4260, %v4268
        %v4275 = vsel %vm530, %v4262, %v4270
        %v4276 = vsel %vm530, %v4264, %v4272
        %v4277 = vsel %vm530, %v4266, %v4258
        %v4278 = vsel %vm530, %v4268, %v4260
        %v4279 = vsel %vm530, %v4270, %v4262
        %v4280 = vsel %vm530, %v4272, %v4264
        %v4281 = vld [vmem:[%s533] sm:$0x3]
        %v4283 = vperm.slane %v4281, 0
        %v4284 = vperm.slane %v4281, 1
        %v4287 = vmul.f32 %v4273, %v4283
        %v4288 = vmul.f32 %v4277, %v4284
        %v4289 = vmul.f32 %v4274, %v4283
        %v4290 = vmul.f32 %v4278, %v4284
        %v4291 = vmul.f32 %v4275, %v4283
        %v4292 = vmul.f32 %v4279, %v4284
        %v4293 = vmul.f32 %v4276, %v4283
        %v4294 = vmul.f32 %v4280, %v4284
        %4295 = vst [vmem:[#allocation2 + $0x140] sm:$0xff] %v4287
        %4296 = vst [vmem:[#allocation2 + $0x148] sm:$0xff] %v4288
        %4297 = vst [vmem:[#allocation2 + $0x150] sm:$0xff] %v4289
        %4298 = vst [vmem:[#allocation2 + $0x158] sm:$0xff] %v4290
        %4299 = vst [vmem:[#allocation2 + $0x160] sm:$0xff] %v4291
        %4300 = vst [vmem:[#allocation2 + $0x168] sm:$0xff] %v4292
        %4301 = vst [vmem:[#allocation2 + $0x170] sm:$0xff] %v4293
        %4302 = vst [vmem:[#allocation2 + $0x178] sm:$0xff] %v4294
        %4303 = vrot.lane.b32.xlu0 %v4055, 113
        %v4304 = vpop.permute.xlu0 %4303
        %4305 = vrot.lane.b32.xlu0 %v4057, 113
        %v4306 = vpop.permute.xlu0 %4305
        %4307 = vrot.lane.b32.xlu0 %v4059, 113
        %v4308 = vpop.permute.xlu0 %4307
        %4309 = vrot.lane.b32.xlu0 %v4061, 113
        %v4310 = vpop.permute.xlu0 %4309
        %4311 = vrot.lane.b32.xlu0 %v4056, 113
        %v4312 = vpop.permute.xlu0 %4311
        %4313 = vrot.lane.b32.xlu0 %v4058, 113
        %v4314 = vpop.permute.xlu0 %4313
        %4315 = vrot.lane.b32.xlu0 %v4060, 113
        %v4316 = vpop.permute.xlu0 %4315
        %4317 = vrot.lane.b32.xlu0 %v4062, 113
        %v4318 = vpop.permute.xlu0 %4317
        %v4319 = vsel %vm554, %v4304, %v4312
        %v4320 = vsel %vm554, %v4306, %v4314
        %v4321 = vsel %vm554, %v4308, %v4316
        %v4322 = vsel %vm554, %v4310, %v4318
        %v4323 = vsel %vm554, %v4312, %v4304
        %v4324 = vsel %vm554, %v4314, %v4306
        %v4325 = vsel %vm554, %v4316, %v4308
        %v4326 = vsel %vm554, %v4318, %v4310
        %v4327 = vld [vmem:[%s557] sm:$0x3]
        %v4329 = vperm.slane %v4327, 0
        %v4330 = vperm.slane %v4327, 1
        %v4333 = vmul.f32 %v4319, %v4329
        %v4334 = vmul.f32 %v4323, %v4330
        %v4335 = vmul.f32 %v4320, %v4329
        %v4336 = vmul.f32 %v4324, %v4330
        %v4337 = vmul.f32 %v4321, %v4329
        %v4338 = vmul.f32 %v4325, %v4330
        %v4339 = vmul.f32 %v4322, %v4329
        %v4340 = vmul.f32 %v4326, %v4330
        %4341 = vst [vmem:[#allocation2 + $0x180] sm:$0xff] %v4333
        %4342 = vst [vmem:[#allocation2 + $0x188] sm:$0xff] %v4334
        %4343 = vst [vmem:[#allocation2 + $0x190] sm:$0xff] %v4335
        %4344 = vst [vmem:[#allocation2 + $0x198] sm:$0xff] %v4336
        %4345 = vst [vmem:[#allocation2 + $0x1a0] sm:$0xff] %v4337
        %4346 = vst [vmem:[#allocation2 + $0x1a8] sm:$0xff] %v4338
        %4347 = vst [vmem:[#allocation2 + $0x1b0] sm:$0xff] %v4339
        %4348 = vst [vmem:[#allocation2 + $0x1b8] sm:$0xff] %v4340
        %4349 = vrot.lane.b32.xlu0 %v4055, 112
        %v4350 = vpop.permute.xlu0 %4349
        %4351 = vrot.lane.b32.xlu0 %v4057, 112
        %v4352 = vpop.permute.xlu0 %4351
        %4353 = vrot.lane.b32.xlu0 %v4059, 112
        %v4354 = vpop.permute.xlu0 %4353
        %4355 = vrot.lane.b32.xlu0 %v4061, 112
        %v4356 = vpop.permute.xlu0 %4355
        %4357 = vrot.lane.b32.xlu0 %v4056, 112
        %v4358 = vpop.permute.xlu0 %4357
        %4359 = vrot.lane.b32.xlu0 %v4058, 112
        %v4360 = vpop.permute.xlu0 %4359
        %4361 = vrot.lane.b32.xlu0 %v4060, 112
        %v4362 = vpop.permute.xlu0 %4361
        %4363 = vrot.lane.b32.xlu0 %v4062, 112
        %v4364 = vpop.permute.xlu0 %4363
        %v4365 = vsel %vm578, %v4350, %v4358
        %v4366 = vsel %vm578, %v4352, %v4360
        %v4367 = vsel %vm578, %v4354, %v4362
        %v4368 = vsel %vm578, %v4356, %v4364
        %v4369 = vsel %vm578, %v4358, %v4350
        %v4370 = vsel %vm578, %v4360, %v4352
        %v4371 = vsel %vm578, %v4362, %v4354
        %v4372 = vsel %vm578, %v4364, %v4356
        %v4373 = vld [vmem:[%s581] sm:$0x3]
        %v4375 = vperm.slane %v4373, 0
        %v4376 = vperm.slane %v4373, 1
        %v4379 = vmul.f32 %v4365, %v4375
        %v4380 = vmul.f32 %v4369, %v4376
        %v4381 = vmul.f32 %v4366, %v4375
        %v4382 = vmul.f32 %v4370, %v4376
        %v4383 = vmul.f32 %v4367, %v4375
        %v4384 = vmul.f32 %v4371, %v4376
        %v4385 = vmul.f32 %v4368, %v4375
        %v4386 = vmul.f32 %v4372, %v4376
        %4387 = vst [vmem:[#allocation2 + $0x1c0] sm:$0xff] %v4379
        %4388 = vst [vmem:[#allocation2 + $0x1c8] sm:$0xff] %v4380
        %4389 = vst [vmem:[#allocation2 + $0x1d0] sm:$0xff] %v4381
        %4390 = vst [vmem:[#allocation2 + $0x1d8] sm:$0xff] %v4382
        %4391 = vst [vmem:[#allocation2 + $0x1e0] sm:$0xff] %v4383
        %4392 = vst [vmem:[#allocation2 + $0x1e8] sm:$0xff] %v4384
        %4393 = vst [vmem:[#allocation2 + $0x1f0] sm:$0xff] %v4385
        %4394 = vst [vmem:[#allocation2 + $0x1f8] sm:$0xff] %v4386
        %4395 = vrot.lane.b32.xlu0 %v4055, 111
        %v4396 = vpop.permute.xlu0 %4395
        %4397 = vrot.lane.b32.xlu0 %v4057, 111
        %v4398 = vpop.permute.xlu0 %4397
        %4399 = vrot.lane.b32.xlu0 %v4059, 111
        %v4400 = vpop.permute.xlu0 %4399
        %4401 = vrot.lane.b32.xlu0 %v4061, 111
        %v4402 = vpop.permute.xlu0 %4401
        %4403 = vrot.lane.b32.xlu0 %v4056, 111
        %v4404 = vpop.permute.xlu0 %4403
        %4405 = vrot.lane.b32.xlu0 %v4058, 111
        %v4406 = vpop.permute.xlu0 %4405
        %4407 = vrot.lane.b32.xlu0 %v4060, 111
        %v4408 = vpop.permute.xlu0 %4407
        %4409 = vrot.lane.b32.xlu0 %v4062, 111
        %v4410 = vpop.permute.xlu0 %4409
        %v4411 = vsel %vm602, %v4396, %v4404
        %v4412 = vsel %vm602, %v4398, %v4406
        %v4413 = vsel %vm602, %v4400, %v4408
        %v4414 = vsel %vm602, %v4402, %v4410
        %v4415 = vsel %vm602, %v4404, %v4396
        %v4416 = vsel %vm602, %v4406, %v4398
        %v4417 = vsel %vm602, %v4408, %v4400
        %v4418 = vsel %vm602, %v4410, %v4402
        %v4419 = vld [vmem:[%s605] sm:$0x3]
        %v4421 = vperm.slane %v4419, 0
        %v4422 = vperm.slane %v4419, 1
        %v4425 = vmul.f32 %v4411, %v4421
        %v4426 = vmul.f32 %v4415, %v4422
        %v4427 = vmul.f32 %v4412, %v4421
        %v4428 = vmul.f32 %v4416, %v4422
        %v4429 = vmul.f32 %v4413, %v4421
        %v4430 = vmul.f32 %v4417, %v4422
        %v4431 = vmul.f32 %v4414, %v4421
        %v4432 = vmul.f32 %v4418, %v4422
        %4433 = vst [vmem:[#allocation2 + $0x200] sm:$0xff] %v4425
        %4434 = vst [vmem:[#allocation2 + $0x208] sm:$0xff] %v4426
        %4435 = vst [vmem:[#allocation2 + $0x210] sm:$0xff] %v4427
        %4436 = vst [vmem:[#allocation2 + $0x218] sm:$0xff] %v4428
        %4437 = vst [vmem:[#allocation2 + $0x220] sm:$0xff] %v4429
        %4438 = vst [vmem:[#allocation2 + $0x228] sm:$0xff] %v4430
        %4439 = vst [vmem:[#allocation2 + $0x230] sm:$0xff] %v4431
        %4440 = vst [vmem:[#allocation2 + $0x238] sm:$0xff] %v4432
        %v4441 = vld [vmem:[#allocation2] sm:$0xff]
        %v4442 = vld [vmem:[#allocation2 + $0x8] sm:$0xff]
        %v4443 = vld [vmem:[#allocation2 + $0x10] sm:$0xff]
        %v4444 = vld [vmem:[#allocation2 + $0x18] sm:$0xff]
        %v4445 = vld [vmem:[#allocation2 + $0x20] sm:$0xff]
        %v4446 = vld [vmem:[#allocation2 + $0x28] sm:$0xff]
        %v4447 = vld [vmem:[#allocation2 + $0x30] sm:$0xff]
        %v4448 = vld [vmem:[#allocation2 + $0x38] sm:$0xff]
        %v4449 = vld [vmem:[#allocation2 + $0x40] sm:$0xff]
        %v4450 = vld [vmem:[#allocation2 + $0x48] sm:$0xff]
        %v4451 = vld [vmem:[#allocation2 + $0x50] sm:$0xff]
        %v4452 = vld [vmem:[#allocation2 + $0x58] sm:$0xff]
        %v4453 = vld [vmem:[#allocation2 + $0x60] sm:$0xff]
        %v4454 = vld [vmem:[#allocation2 + $0x68] sm:$0xff]
        %v4455 = vld [vmem:[#allocation2 + $0x70] sm:$0xff]
        %v4456 = vld [vmem:[#allocation2 + $0x78] sm:$0xff]
        %v4457 = vld [vmem:[#allocation2 + $0x80] sm:$0xff]
        %v4458 = vld [vmem:[#allocation2 + $0x88] sm:$0xff]
        %v4459 = vld [vmem:[#allocation2 + $0x90] sm:$0xff]
        %v4460 = vld [vmem:[#allocation2 + $0x98] sm:$0xff]
        %v4461 = vld [vmem:[#allocation2 + $0xa0] sm:$0xff]
        %v4462 = vld [vmem:[#allocation2 + $0xa8] sm:$0xff]
        %v4463 = vld [vmem:[#allocation2 + $0xb0] sm:$0xff]
        %v4464 = vld [vmem:[#allocation2 + $0xb8] sm:$0xff]
        %v4465 = vld [vmem:[#allocation2 + $0xc0] sm:$0xff]
        %v4466 = vld [vmem:[#allocation2 + $0xc8] sm:$0xff]
        %v4467 = vld [vmem:[#allocation2 + $0xd0] sm:$0xff]
        %v4468 = vld [vmem:[#allocation2 + $0xd8] sm:$0xff]
        %v4469 = vld [vmem:[#allocation2 + $0xe0] sm:$0xff]
        %v4470 = vld [vmem:[#allocation2 + $0xe8] sm:$0xff]
        %v4471 = vld [vmem:[#allocation2 + $0xf0] sm:$0xff]
        %v4472 = vld [vmem:[#allocation2 + $0xf8] sm:$0xff]
        %v4473 = vld [vmem:[#allocation2 + $0x100] sm:$0xff]
        %v4474 = vld [vmem:[#allocation2 + $0x108] sm:$0xff]
        %v4475 = vld [vmem:[#allocation2 + $0x110] sm:$0xff]
        %v4476 = vld [vmem:[#allocation2 + $0x118] sm:$0xff]
        %v4477 = vld [vmem:[#allocation2 + $0x120] sm:$0xff]
        %v4478 = vld [vmem:[#allocation2 + $0x128] sm:$0xff]
        %v4479 = vld [vmem:[#allocation2 + $0x130] sm:$0xff]
        %v4480 = vld [vmem:[#allocation2 + $0x138] sm:$0xff]
        %v4481 = vld [vmem:[#allocation2 + $0x140] sm:$0xff]
        %v4482 = vld [vmem:[#allocation2 + $0x148] sm:$0xff]
        %v4483 = vld [vmem:[#allocation2 + $0x150] sm:$0xff]
        %v4484 = vld [vmem:[#allocation2 + $0x158] sm:$0xff]
        %v4485 = vld [vmem:[#allocation2 + $0x160] sm:$0xff]
        %v4486 = vld [vmem:[#allocation2 + $0x168] sm:$0xff]
        %v4487 = vld [vmem:[#allocation2 + $0x170] sm:$0xff]
        %v4488 = vld [vmem:[#allocation2 + $0x178] sm:$0xff]
        %v4489 = vld [vmem:[#allocation2 + $0x180] sm:$0xff]
        %v4490 = vld [vmem:[#allocation2 + $0x188] sm:$0xff]
        %v4491 = vld [vmem:[#allocation2 + $0x190] sm:$0xff]
        %v4492 = vld [vmem:[#allocation2 + $0x198] sm:$0xff]
        %v4493 = vld [vmem:[#allocation2 + $0x1a0] sm:$0xff]
        %v4494 = vld [vmem:[#allocation2 + $0x1a8] sm:$0xff]
        %v4495 = vld [vmem:[#allocation2 + $0x1b0] sm:$0xff]
        %v4496 = vld [vmem:[#allocation2 + $0x1b8] sm:$0xff]
        %v4497 = vld [vmem:[#allocation2 + $0x1c0] sm:$0xff]
        %v4498 = vld [vmem:[#allocation2 + $0x1c8] sm:$0xff]
        %v4499 = vld [vmem:[#allocation2 + $0x1d0] sm:$0xff]
        %v4500 = vld [vmem:[#allocation2 + $0x1d8] sm:$0xff]
        %v4501 = vld [vmem:[#allocation2 + $0x1e0] sm:$0xff]
        %v4502 = vld [vmem:[#allocation2 + $0x1e8] sm:$0xff]
        %v4503 = vld [vmem:[#allocation2 + $0x1f0] sm:$0xff]
        %v4504 = vld [vmem:[#allocation2 + $0x1f8] sm:$0xff]
        %v4505 = vld [vmem:[#allocation2 + $0x200] sm:$0xff]
        %v4506 = vld [vmem:[#allocation2 + $0x208] sm:$0xff]
        %v4507 = vld [vmem:[#allocation2 + $0x210] sm:$0xff]
        %v4508 = vld [vmem:[#allocation2 + $0x218] sm:$0xff]
        %v4509 = vld [vmem:[#allocation2 + $0x220] sm:$0xff]
        %v4510 = vld [vmem:[#allocation2 + $0x228] sm:$0xff]
        %v4511 = vld [vmem:[#allocation2 + $0x230] sm:$0xff]
        %v4512 = vld [vmem:[#allocation2 + $0x238] sm:$0xff]
        %v4513 = vpack.c.bf16 %v4443, %v4441
        %v4514 = vpack.c.bf16 %v4444, %v4442
        %v4515 = vpack.c.bf16 %v4447, %v4445
        %v4516 = vpack.c.bf16 %v4448, %v4446
        %v4517 = vpack.c.bf16 %v4451, %v4449
        %v4518 = vpack.c.bf16 %v4452, %v4450
        %v4519 = vpack.c.bf16 %v4455, %v4453
        %v4520 = vpack.c.bf16 %v4456, %v4454
        %v4521 = vpack.c.bf16 %v4459, %v4457
        %v4522 = vpack.c.bf16 %v4460, %v4458
        %v4523 = vpack.c.bf16 %v4463, %v4461
        %v4524 = vpack.c.bf16 %v4464, %v4462
        %v4525 = vpack.c.bf16 %v4467, %v4465
        %v4526 = vpack.c.bf16 %v4468, %v4466
        %v4527 = vpack.c.bf16 %v4471, %v4469
        %v4528 = vpack.c.bf16 %v4472, %v4470
        %v4529 = vpack.c.bf16 %v4475, %v4473
        %v4530 = vpack.c.bf16 %v4476, %v4474
        %v4531 = vpack.c.bf16 %v4479, %v4477
        %v4532 = vpack.c.bf16 %v4480, %v4478
        %v4533 = vpack.c.bf16 %v4483, %v4481
        %v4534 = vpack.c.bf16 %v4484, %v4482
        %v4535 = vpack.c.bf16 %v4487, %v4485
        %v4536 = vpack.c.bf16 %v4488, %v4486
        %v4537 = vpack.c.bf16 %v4491, %v4489
        %v4538 = vpack.c.bf16 %v4492, %v4490
        %v4539 = vpack.c.bf16 %v4495, %v4493
        %v4540 = vpack.c.bf16 %v4496, %v4494
        %v4541 = vpack.c.bf16 %v4499, %v4497
        %v4542 = vpack.c.bf16 %v4500, %v4498
        %v4543 = vpack.c.bf16 %v4503, %v4501
        %v4544 = vpack.c.bf16 %v4504, %v4502
        %v4545 = vpack.c.bf16 %v4507, %v4505
        %v4546 = vpack.c.bf16 %v4508, %v4506
        %v4547 = vpack.c.bf16 %v4511, %v4509
        %v4548 = vpack.c.bf16 %v4512, %v4510
        %4550 = vset.pattern.permute.xlu0 0
        %4551 = vperm.xlu0 %4550, %v4064
        %v4552 = vpop.permute.xlu0 %4551
        %v4554 = vperm.slane %v4552, 0
        %4556 = vst [vmem:[#allocation1] ss:$9 sm:$0xff] %v4063
        %v4557 = vld [vmem:[#allocation1] sm:$0xff]
        %v4558 = vld [vmem:[#allocation1 + $0x9] sm:$0xff]
        %v4559 = vld [vmem:[#allocation1 + $0x12] sm:$0xff]
        %v4562 = vsel %vm1390, %v4559, 0
        %4564 = vmatpush.bf16.msra.mxu0 %v4527
        %4565 = vmatpush.bf16.msra.mxu0 %v4525
        %4566 = vmatpush.bf16.msra.mxu0 %v4523
        %4567 = vmatpush.bf16.msra.mxu0 %v4521
        %4568 = vmatpush.bf16.msra.mxu0 %v4519
        %4569 = vmatpush.bf16.msra.mxu0 %v4517
        %4570 = vmatpush.bf16.msra.mxu0 %v4515
        %4571 = vmatpush.bf16.msra.mxu0 %v4513
        %4572 = vmatmul.bf16.gmra.mxu0 %v4557
        %v4573 = vpop.f32.mrf.mxu0
        %v4574 = vadd.f32 %v4554, %v4573
        %v4575 = vpop.f32.mrf.mxu0
        %4576 = vdwg.mxu0
        %4577 = vmatpush.bf16.msra.mxu0 %v4543
        %4578 = vmatpush.bf16.msra.mxu0 %v4541
        %4579 = vmatpush.bf16.msra.mxu0 %v4539
        %4580 = vmatpush.bf16.msra.mxu0 %v4537
        %4581 = vmatpush.bf16.msra.mxu0 %v4535
        %4582 = vmatpush.bf16.msra.mxu0 %v4533
        %4583 = vmatpush.bf16.msra.mxu0 %v4531
        %4584 = vmatpush.bf16.msra.mxu0 %v4529
        %4585 = vmatmul.bf16.gmra.mxu0 %v4558
        %v4586 = vpop.f32.mrf.mxu0
        %v4587 = vadd.f32 %v4574, %v4586
        %v4588 = vpop.f32.mrf.mxu0
        %4589 = vdwg.mxu0
        %4590 = vmatpush.bf16.msra.mxu0 0
        %4591 = vmatpush.bf16.msra.mxu0 0
        %4592 = vmatpush.bf16.msra.mxu0 0
        %4593 = vmatpush.bf16.msra.mxu0 0
        %4594 = vmatpush.bf16.msra.mxu0 0
        %4595 = vmatpush.bf16.msra.mxu0 0
        %4596 = vmatpush.bf16.msra.mxu0 %v4547
        %4597 = vmatpush.bf16.msra.mxu0 %v4545
        %4598 = vmatmul.bf16.gmra.mxu0 %v4562
        %v4599 = vpop.f32.mrf.mxu0
        %v4600 = vadd.f32 %v4587, %v4599
        %v4601 = vpop.f32.mrf.mxu0
        %4602 = vdwg.mxu0
        %4603 = vmatpush.bf16.msra.mxu0 %v4528
        %4604 = vmatpush.bf16.msra.mxu0 %v4526
        %4605 = vmatpush.bf16.msra.mxu0 %v4524
        %4606 = vmatpush.bf16.msra.mxu0 %v4522
        %4607 = vmatpush.bf16.msra.mxu0 %v4520
        %4608 = vmatpush.bf16.msra.mxu0 %v4518
        %4609 = vmatpush.bf16.msra.mxu0 %v4516
        %4610 = vmatpush.bf16.msra.mxu0 %v4514
        %4611 = vmatmul.bf16.gmra.mxu0 %v4557
        %v4612 = vpop.f32.mrf.mxu0
        %v4613 = vadd.f32 %v4554, %v4612
        %v4614 = vpop.f32.mrf.mxu0
        %4615 = vdwg.mxu0
        %4616 = vmatpush.bf16.msra.mxu0 %v4544
        %4617 = vmatpush.bf16.msra.mxu0 %v4542
        %4618 = vmatpush.bf16.msra.mxu0 %v4540
        %4619 = vmatpush.bf16.msra.mxu0 %v4538
        %4620 = vmatpush.bf16.msra.mxu0 %v4536
        %4621 = vmatpush.bf16.msra.mxu0 %v4534
        %4622 = vmatpush.bf16.msra.mxu0 %v4532
        %4623 = vmatpush.bf16.msra.mxu0 %v4530
        %4624 = vmatmul.bf16.gmra.mxu0 %v4558
        %v4625 = vpop.f32.mrf.mxu0
        %v4626 = vadd.f32 %v4613, %v4625
        %v4627 = vpop.f32.mrf.mxu0
        %4628 = vdwg.mxu0
        %4629 = vmatpush.bf16.msra.mxu0 0
        %4630 = vmatpush.bf16.msra.mxu0 0
        %4631 = vmatpush.bf16.msra.mxu0 0
        %4632 = vmatpush.bf16.msra.mxu0 0
        %4633 = vmatpush.bf16.msra.mxu0 0
        %4634 = vmatpush.bf16.msra.mxu0 0
        %4635 = vmatpush.bf16.msra.mxu0 %v4548
        %4636 = vmatpush.bf16.msra.mxu0 %v4546
        %4637 = vmatmul.bf16.gmra.mxu0 %v4562
        %v4638 = vpop.f32.mrf.mxu0
        %v4639 = vadd.f32 %v4626, %v4638
        %v4640 = vpop.f32.mrf.mxu0
        %4641 = vdwg.mxu0
        %v4644 = vrot.slane %v4639, 7
        %v4645 = vsel %vm442, %v4600, %v4644
        %4647 = vst.msk [vmem:[%s402] sm:$0x3] %vm448, %v4645
        %s4648 = sand.u32 %s251, 1
        %s4649 = scalar_lea.sflag [#allocation6], %s4648
        %s4650 = sand.u32 %s251, 1
        %s4651 = smul.addr %s4650, 2
        %s4652 = scalar_lea.vmem [#allocation10], %s4651
        // Predicated region
        $region73: #{tpu_custom_call.1} parent=59 // pred_check
          %p4653 = pneg %p261
        $region74: #{tpu_custom_call.1} parent=59 // pred_check_branch
          %4655 = sbr.rel (%p4653) target = $region76
        $region75: #{tpu_custom_call.1} parent=59 // pred_region
          %4657 = vsyncadd %s4649, 0
          %s4658 = smul.addr %s28, 2
          %s4659 = scalar_lea.hbm %s10, %s4658
          %s4661 = sshll.u32 %s4652, 4
          %s4662 = int_to_ptr.vmem [resolvable:$true] %s4661
          %s4663 = sshll.u32 %s4659, 4
          %s4664 = int_to_ptr.hbm [resolvable:$true] %s4663
          %4666 = dma.vmem_to_hbm [thread:$0]  %s4662, 32, %s4664, %s4649
        $region76: #{tpu_custom_call.1} parent=59 // pred_fallthru
          _
      $region60: #{tpu_custom_call.1} parent=5 // pred_fallthru
        _
      %p4667 = scmp.le.s32.totalorder 2, %s23
      // Predicated region
      $region77: #{tpu_custom_call.1} parent=5 // pred_check
        %p4668 = pneg %p4667
      $region78: #{tpu_custom_call.1} parent=5 // pred_check_branch
        %4670 = sbr.rel (%p4668) target = $region80
      $region79: #{tpu_custom_call.1} parent=5 // pred_region
        %s4671 = ssub.s32 %s23, 2
        // Predicated region
        $region81: #{tpu_custom_call.1} parent=79 // pred_check
          %p4672 = pneg %p267
        $region82: #{tpu_custom_call.1} parent=79 // pred_check_branch
          %4674 = sbr.rel (%p4672) target = $region84
        $region83: #{tpu_custom_call.1} parent=79 // pred_region
          %s4675 = sand.u32 %s252, 1
          %s4676 = scalar_lea.sflag [#allocation6], %s4675
          %s4677 = sand.u32 %s252, 1
          %s4678 = smul.addr %s4677, 2
          %s4679 = scalar_lea.vmem [#allocation10], %s4678
          %4681 = dma.done %s4676, 32
        $region84: #{tpu_custom_call.1} parent=79 // pred_fallthru
          _
      $region80: #{tpu_custom_call.1} parent=5 // pred_fallthru
        _
    $region6: #{tpu_custom_call.1} parent=1 // loop_footer
      %s27 = sadd.s32 1, %s23
    $region7: #{tpu_custom_call.1} parent=1 // loop_footer_branch
      %22 = sbr.rel target = $region3
    $region8: #{tpu_custom_call.1} parent=1 // loop_exit
      _
    %4682 = vsyncpa [#allocation5], 1
    %s4683 = scalar_lea.sflag [#allocation5], 1
    %4684 = vsyncpa %s4683, 1
    %4685 = vsyncpa [#allocation8], 1
    %4686 = vsyncpa [#allocation6], 1
    %s4687 = scalar_lea.sflag [#allocation6], 1
    %4688 = vsyncpa %s4687, 1

</llo_original>
